<compile_context>
chip_gen: v7x
topology: tpu7x:2x2x1
jax: 0.10.0
libtpu: 0.0.40
codegen_flags: <defaults>
</compile_context>

<pallas_src>
import functools

import jax
import jax.numpy as jnp
from jax.experimental import pallas as pl
from jax.experimental.pallas import tpu as pltpu

# ---------------- sizes (small, consistent with the forward) ----------------
BS = 2          # batch
NPTS = 128      # p_num
NCAT = 6        # object categories (one-hot of obj_id)
DCLIP = 32      # global clip feature dim
CR = 32         # per-pixel clip_r feature dim
CT = 32         # per-pixel clip_t feature dim
H1 = 64         # face_recon hidden
FDIM = 64       # per-point feature dim
FACE_DIM = 30   # 6*3 normals + 6 dis + 6 f
RH1, RH2 = 128, 64   # rot / ts head hidden dims
M_TOT = BS * NPTS    # 256 rows processed in one slab

PTS_K = 16           # centered points padded 3 -> 16 lanes (16-row-aligned weights)

# packed per-point output slab (lane-dense, 128 wide)
PT_W = 128
CRP_OFF = 0                      # [0:32)   clip_r pixel projection (pre-relu)
CTP_OFF = CR                     # [32:64)  clip_t pixel projection (pre-relu)
RECON_OFF = CR + CT              # [64:67)  recon
FACE_OFF = RECON_OFF + 3         # [67:97)  face

# per-batch vector output (128 wide): [feat_max(64)|green(4)|red(4)|ts(6)|pad]
VEC_W = 128

# slab A (trunk weights, width 128, bf16) row offsets (16-aligned for bf16)
A_WP, A_W2, A_WCAT = 0, 16, 80
A_ROWS = 144
# slab B (head layer-1 + ts-points weights, width 384, bf16)
B_W1, B_WTSP = 0, 128
B_ROWS = 144
# slab C (head layers 2-4, block-diagonal, width 192, bf16)
C_W2, C_W3, C_W4 = 0, 384, 576
C_ROWS = 768

TRAIN = True   # FLAGS.train; use_clip_nonLinear = use_clip_atte = 0.0 (default heads)


# ------------------------------ fused Pallas kernel --------------------------
def _fused_kernel(pts_ref, pb_ref, wa_ref, wb_ref, wc_ref, bias_ref,
                  pt_out_ref, vec_out_ref):
    f32, bf16 = jnp.float32, jnp.bfloat16

    pts = pts_ref[...].astype(bf16)                    # (M, 16), zero past col 3
    pb = pb_ref[...]                                   # (B, 128) per-batch biases

    # broadcast per-batch bias row over the points of each batch element
    pbb = jnp.concatenate(
        [jnp.broadcast_to(pb[b:b + 1], (NPTS, VEC_W)) for b in range(BS)],
        axis=0)                                        # (M, 128) = [b1_eff|crg|ctg]

    # point-only matmuls (no dependence on the trunk -> issued early)
    h1_pre = jnp.dot(pts, wa_ref[A_WP:A_WP + PTS_K, 0:H1],
                     preferred_element_type=f32)       # (M, 64)
    ts_pts = jnp.dot(pts, wb_ref[B_WTSP:B_WTSP + PTS_K, :],
                     preferred_element_type=f32)       # (M, 384), ts cols only

    # ---- FaceRecon trunk (per-point MLP approximation) ----
    h1 = jnp.maximum(h1_pre + pbb[:, 0:H1], 0.0).astype(bf16)
    feat = jnp.maximum(
        jnp.dot(h1, wa_ref[A_W2:A_W2 + H1, 0:FDIM], preferred_element_type=f32)
        + bias_ref[0:1, 0:FDIM], 0.0)                  # (M, 64) f32
    feat_bf = feat.astype(bf16)

    # one lane-full matmul: [crp_pre | ctp_pre | recon | face | pad]
    combo = (jnp.dot(feat_bf, wa_ref[A_WCAT:A_WCAT + FDIM, 0:PT_W],
                     preferred_element_type=f32)
             + bias_ref[1:2, 0:PT_W])                  # (M, 128)
    pt_out_ref[...] = combo                            # unmasked 128-wide store

    crp = jnp.maximum(combo[:, CRP_OFF:CRP_OFF + CR] + pbb[:, H1:H1 + CR], 0.0)
    ctp = jnp.maximum(combo[:, CTP_OFF:CTP_OFF + CT] + pbb[:, H1 + CR:H1 + CR + CT], 0.0)
    x = jnp.concatenate([feat, crp, ctp], axis=-1).astype(bf16)   # (M, 128)

    # ---- fused heads [green | red | ts], block-structured weights ----
    hh1 = jnp.maximum(
        jnp.dot(x, wb_ref[B_W1:B_W1 + 128, :], preferred_element_type=f32)
        + ts_pts + bias_ref[2:3, 0:3 * RH1], 0.0).astype(bf16)    # (M, 384)
    hh2 = jnp.maximum(
        jnp.dot(hh1, wc_ref[C_W2:C_W2 + 3 * RH1, 0:3 * RH2],
                preferred_element_type=f32)
        + bias_ref[3:4, 0:3 * RH2], 0.0)                          # (M, 192) f32

    def per_batch_max(a):   # (M, W) -> (B, W), max over the points of each batch
        return jnp.concatenate(
            [jnp.max(a[b * NPTS:(b + 1) * NPTS], axis=0, keepdims=True)
             for b in range(BS)], axis=0)

    hm = per_batch_max(hh2).astype(bf16)               # (B, 192)
    fmax = per_batch_max(feat)                         # (B, 64)  torch.max(feat, 1)

    hh3 = jnp.maximum(
        jnp.dot(hm, wc_ref[C_W3:C_W3 + 3 * RH2, 0:3 * RH2],
                preferred_element_type=f32)
        + bias_ref[4:5, 0:3 * RH2], 0.0).astype(bf16)  # (B, 192)
    tail = (jnp.dot(hh3, wc_ref[C_W4:C_W4 + 3 * RH2, 0:FDIM],
                    preferred_element_type=f32)
            + bias_ref[5:6, 0:FDIM])                   # (B, 64) = [g(4)|r(4)|ts(6)|pad]

    vec_out_ref[...] = jnp.concatenate([fmax, tail], axis=-1)     # (B, 128)


# ------------------------------ wrapper --------------------------------------
def posenet9d_forward(packed, points, obj_id, clip_r_feat, clip_t_feat,
                      use_clip=True, use_clip_global=False,
                      use_clip_nonLinear=False, use_clip_atte=False):
    # Only the default flag path (use_clip=True, other flags False) is
    # implemented, matching the FLAGS defaults of the reference.
    bs, p_num = points.shape[0], points.shape[1]
    assert bs == BS and p_num == NPTS

    mean = jnp.mean(points, axis=1, keepdims=True)                  # (B, 1, 3)
    centered = points - mean
    pts = jnp.pad(centered.reshape(bs * p_num, 3), ((0, 0), (0, PTS_K - 3)))

    # per-batch projections hoisted out of the kernel (tiny XLA matmuls fused
    # into the one_hot / mean preprocessing): [b1_eff(64) | crg(32) | ctg(32)]
    onehot = jax.nn.one_hot(obj_id, NCAT, dtype=jnp.float32)        # (B, NCAT)
    b1_eff = onehot @ packed['w1o'] + packed['b1']                  # (B, 64)
    crg = clip_r_feat @ packed['wcrc'] + packed['bcr']              # (B, 32)
    ctg = clip_t_feat @ packed['wctc'] + packed['bct']              # (B, 32)
    pb = jnp.concatenate([b1_eff, crg, ctg], axis=-1)               # (B, 128)

    pt_out, vec_out = pl.pallas_call(
        _fused_kernel,
        out_shape=(jax.ShapeDtypeStruct((bs * p_num, PT_W), jnp.float32),
                   jax.ShapeDtypeStruct((bs, VEC_W), jnp.float32)),
        grid=(1,),
        in_specs=[
            pl.BlockSpec((bs * p_num, PTS_K), lambda i: (0, 0)),
            pl.BlockSpec((bs, VEC_W), lambda i: (0, 0)),
            pl.BlockSpec((A_ROWS, 128), lambda i: (0, 0)),
            pl.BlockSpec((B_ROWS, 3 * RH1), lambda i: (0, 0)),
            pl.BlockSpec((C_ROWS, 3 * RH2), lambda i: (0, 0)),
            pl.BlockSpec((8, 3 * RH1), lambda i: (0, 0)),
        ],
        out_specs=(pl.BlockSpec((bs * p_num, PT_W), lambda i: (0, 0)),
                   pl.BlockSpec((bs, VEC_W), lambda i: (0, 0))),
        compiler_params=pltpu.CompilerParams(
            dimension_semantics=("arbitrary",)),
    )(pts, pb, packed['wa'], packed['wb'], packed['wc'], packed['bias'])

    # ---- unpack the per-point slab ----
    pt3 = pt_out.reshape(bs, p_num, PT_W)
    if TRAIN:
        recon = pt3[:, :, RECON_OFF:RECON_OFF + 3] + mean
        face = pt3[:, :, FACE_OFF:FACE_OFF + FACE_DIM]
        face_normal = face[:, :, :18].reshape(bs, p_num, 6, 3)
        # eps like F.normalize to avoid NaN on a zero predicted normal
        face_normal = face_normal / (
            jnp.linalg.norm(face_normal, axis=-1, keepdims=True) + 1e-12)
        face_dis = face[:, :, 18:24]
        face_f = jax.nn.sigmoid(face[:, :, 24:])
    else:
        face_normal = face_dis = face_f = recon = None

    # ---- unpack the per-batch vector [fmax(64)|green(4)|red(4)|ts(6)|pad] ----
    feat_values = vec_out[:, 0:FDIM]
    green_R_vec = vec_out[:, FDIM:FDIM + 4]
    red_R_vec = vec_out[:, FDIM + 4:FDIM + 8]
    ts_vec = vec_out[:, FDIM + 8:FDIM + 14]

    p_green_R = green_R_vec[:, 1:] / (
        jnp.linalg.norm(green_R_vec[:, 1:], axis=1, keepdims=True) + 1e-6)
    p_red_R = red_R_vec[:, 1:] / (
        jnp.linalg.norm(red_R_vec[:, 1:], axis=1, keepdims=True) + 1e-6)
    f_green_R = jax.nn.sigmoid(green_R_vec[:, 0])
    f_red_R = jax.nn.sigmoid(red_R_vec[:, 0])

    T, s = ts_vec[:, :3], ts_vec[:, 3:]
    Pred_T = T + mean[:, 0, :]
    Pred_s = s

    return (recon, face_normal, face_dis, face_f, p_green_R, p_red_R,
            f_green_R, f_red_R, Pred_T, Pred_s, feat_values)


# ------------------------------ parameters ----------------------------------
def _init_linear(key, din, dout, scale=0.05):
    kw, kb = jax.random.split(key)
    w = jax.random.normal(kw, (din, dout), jnp.float32) * scale
    b = jax.random.normal(kb, (1, dout), jnp.float32) * scale
    return w, b


def init_params(key):
    keys = jax.random.split(key, 20)
    fr = {}
    fr['w1'], fr['b1'] = _init_linear(keys[0], 3 + NCAT, H1)
    fr['w2'], fr['b2'] = _init_linear(keys[1], H1, FDIM)
    fr['wr'], fr['br'] = _init_linear(keys[2], FDIM, 3)
    fr['wf'], fr['bf'] = _init_linear(keys[3], FDIM, FACE_DIM)
    fr['wcrf'], _ = _init_linear(keys[4], FDIM, CR)
    fr['wcrc'], fr['bcr'] = _init_linear(keys[5], DCLIP, CR)
    fr['wctf'], _ = _init_linear(keys[6], FDIM, CT)
    fr['wctc'], fr['bct'] = _init_linear(keys[7], DCLIP, CT)

    def head(k0, k1, k2, k3, cin, dout):
        h = {}
        h['w1'], h['b1'] = _init_linear(k0, cin, RH1)
        h['w2'], h['b2'] = _init_linear(k1, RH1, RH2)
        h['w3'], h['b3'] = _init_linear(k2, RH2, RH2)
        h['w4'], h['b4'] = _init_linear(k3, RH2, dout)
        return h

    return {
        'face_recon': fr,
        'rot_green': head(keys[8], keys[9], keys[10], keys[11], FDIM + CR, 4),
        'rot_red': head(keys[12], keys[13], keys[14], keys[15], FDIM + CR, 4),
        'ts': head(keys[16], keys[17], keys[18], keys[19], FDIM + CT + 3, 6),
    }


def pack_params(p):
    """Pack logical per-module params into 3 bf16 weight slabs + 1 f32 bias slab."""
    bf16 = jnp.bfloat16
    fr, g, r, t = p['face_recon'], p['rot_green'], p['rot_red'], p['ts']
    packed = {}

    # ---- slab A: trunk weights (width 128) ----
    wa = jnp.zeros((A_ROWS, 128), jnp.float32)
    wa = wa.at[A_WP:A_WP + 3, 0:H1].set(fr['w1'][:3])                       # w1 (points part)
    wa = wa.at[A_W2:A_W2 + H1, 0:FDIM].set(fr['w2'])
    wcat = jnp.concatenate([fr['wcrf'], fr['wctf'], fr['wr'], fr['wf']], axis=1)  # (64, 97)
    wa = wa.at[A_WCAT:A_WCAT + FDIM, 0:wcat.shape[1]].set(wcat)
    packed['wa'] = wa.astype(bf16)

    # ---- slab B: fused head layer-1 + ts centered-points weights (width 384) ----
    wb = jnp.zeros((B_ROWS, 3 * RH1), jnp.float32)
    wb = wb.at[0:FDIM, 0:RH1].set(g['w1'][:FDIM])                           # feat rows
    wb = wb.at[0:FDIM, RH1:2 * RH1].set(r['w1'][:FDIM])
    wb = wb.at[0:FDIM, 2 * RH1:3 * RH1].set(t['w1'][:FDIM])
    wb = wb.at[FDIM:FDIM + CR, 0:RH1].set(g['w1'][FDIM:FDIM + CR])          # crp rows
    wb = wb.at[FDIM:FDIM + CR, RH1:2 * RH1].set(r['w1'][FDIM:FDIM + CR])
    wb = wb.at[FDIM + CR:FDIM + CR + CT, 2 * RH1:3 * RH1].set(t['w1'][FDIM:FDIM + CT])  # ctp rows
    wb = wb.at[B_WTSP:B_WTSP + 3, 2 * RH1:3 * RH1].set(t['w1'][FDIM + CT:FDIM + CT + 3])  # pts rows (ts)
    packed['wb'] = wb.astype(bf16)

    # ---- slab C: head layers 2-4, block-diagonal (width 192) ----
    wc = jnp.zeros((C_ROWS, 3 * RH2), jnp.float32)
    for k, h in enumerate((g, r, t)):
        wc = wc.at[C_W2 + k * RH1:C_W2 + (k + 1) * RH1,
                   k * RH2:(k + 1) * RH2].set(h['w2'])
        wc = wc.at[C_W3 + k * RH2:C_W3 + (k + 1) * RH2,
                   k * RH2:(k + 1) * RH2].set(h['w3'])
    wc = wc.at[C_W4:C_W4 + RH2, 0:4].set(g['w4'])
    wc = wc.at[C_W4 + RH2:C_W4 + 2 * RH2, 4:8].set(r['w4'])
    wc = wc.at[C_W4 + 2 * RH2:C_W4 + 3 * RH2, 8:14].set(t['w4'])
    packed['wc'] = wc.astype(bf16)

    # ---- batch-independent bias slab (8, 384) f32 ----
    bias = jnp.zeros((8, 3 * RH1), jnp.float32)
    bias = bias.at[0, 0:FDIM].set(fr['b2'][0])
    bcat = jnp.concatenate([jnp.zeros((1, CR + CT), jnp.float32),
                            fr['br'], fr['bf']], axis=1)                    # (1, 97)
    bias = bias.at[1, 0:bcat.shape[1]].set(bcat[0])
    bias = bias.at[2, 0:3 * RH1].set(
        jnp.concatenate([g['b1'], r['b1'], t['b1']], axis=1)[0])
    bias = bias.at[3, 0:3 * RH2].set(
        jnp.concatenate([g['b2'], r['b2'], t['b2']], axis=1)[0])
    bias = bias.at[4, 0:3 * RH2].set(
        jnp.concatenate([g['b3'], r['b3'], t['b3']], axis=1)[0])
    bias = bias.at[5, 0:14].set(
        jnp.concatenate([g['b4'], r['b4'], t['b4']], axis=1)[0])
    packed['bias'] = bias

    # ---- per-batch projection weights used by the wrapper (f32) ----
    packed['w1o'] = fr['w1'][3:]
    packed['b1'] = fr['b1']
    packed['wcrc'] = fr['wcrc']
    packed['bcr'] = fr['bcr']
    packed['wctc'] = fr['wctc']
    packed['bct'] = fr['bct']
    return packed


# ------------------------------ main -----------------------------------------
if __name__ == "__main__":
    key = jax.random.PRNGKey(0)
    kp, kr, kt, kw = jax.random.split(key, 4)
    points = jax.random.normal(kp, (BS, NPTS, 3), jnp.float32)
    obj_id = jnp.array([0, 1], dtype=jnp.int32)
    clip_r_feat = jax.random.normal(kr, (BS, DCLIP), jnp.float32)
    clip_t_feat = jax.random.normal(kt, (BS, DCLIP), jnp.float32)
    params = init_params(kw)
    packed = pack_params(params)

    fwd = jax.jit(functools.partial(posenet9d_forward, packed))
    outs = fwd(points, obj_id, clip_r_feat, clip_t_feat)
    jax.block_until_ready(outs)

    (recon, face_normal, face_dis, face_f, p_green_R, p_red_R,
     f_green_R, f_red_R, Pred_T, Pred_s, feat_vals) = outs
    assert recon.shape == (BS, NPTS, 3)
    assert face_normal.shape == (BS, NPTS, 6, 3)
    assert face_dis.shape == (BS, NPTS, 6)
    assert face_f.shape == (BS, NPTS, 6)
    assert p_green_R.shape == (BS, 3) and p_red_R.shape == (BS, 3)
    assert f_green_R.shape == (BS,) and f_red_R.shape == (BS,)
    assert Pred_T.shape == (BS, 3) and Pred_s.shape == (BS, 3)
    assert feat_vals.shape == (BS, FDIM)
    assert bool(jnp.all(jnp.isfinite(recon)))
    assert bool(jnp.all(jnp.isfinite(Pred_T)))
    assert bool(jnp.all(jnp.isfinite(feat_vals)))
    print("KERNEL_OK")
</pallas_src>

<mosaic_0001>
module attributes {stable_mosaic.version = 11 : i64} {
  func.func @_fused_kernel(%arg0: i32, %arg1: memref<256x16xf32, #tpu.memory_space<vmem>>, %arg2: memref<2x128xf32, #tpu.memory_space<vmem>>, %arg3: memref<144x128xbf16, #tpu.memory_space<vmem>>, %arg4: memref<144x384xbf16, #tpu.memory_space<vmem>>, %arg5: memref<768x192xbf16, #tpu.memory_space<vmem>>, %arg6: memref<8x384xf32, #tpu.memory_space<vmem>>, %arg7: memref<256x128xf32, #tpu.memory_space<vmem>>, %arg8: memref<2x128xf32, #tpu.memory_space<vmem>>) attributes {dimension_semantics = [#tpu.dimension_semantics<arbitrary>], iteration_bounds = array<i64: 1>, scalar_prefetch = 0 : i64, scratch_operands = 0 : i64, tpu.core_type = #tpu.core_type<tc>, window_params = [{pipeline_mode = #tpu.pipeline_mode<synchronous>, transform_indices = @transform_0, window_bounds = array<i64: 256, 16>}, {pipeline_mode = #tpu.pipeline_mode<synchronous>, transform_indices = @transform_1, window_bounds = array<i64: 2, 128>}, {pipeline_mode = #tpu.pipeline_mode<synchronous>, transform_indices = @transform_2, window_bounds = array<i64: 144, 128>}, {pipeline_mode = #tpu.pipeline_mode<synchronous>, transform_indices = @transform_3, window_bounds = array<i64: 144, 384>}, {pipeline_mode = #tpu.pipeline_mode<synchronous>, transform_indices = @transform_4, window_bounds = array<i64: 768, 192>}, {pipeline_mode = #tpu.pipeline_mode<synchronous>, transform_indices = @transform_5, window_bounds = array<i64: 8, 384>}, {pipeline_mode = #tpu.pipeline_mode<synchronous>, transform_indices = @transform_6, window_bounds = array<i64: 256, 128>}, {pipeline_mode = #tpu.pipeline_mode<synchronous>, transform_indices = @transform_7, window_bounds = array<i64: 2, 128>}]} {
    %c0 = arith.constant 0 : index
    %c0_0 = arith.constant 0 : index
    %0 = vector.load %arg1[%c0, %c0_0] : memref<256x16xf32, #tpu.memory_space<vmem>>, vector<256x16xf32>
    %1 = arith.truncf %0 : vector<256x16xf32> to vector<256x16xbf16>
    %c0_1 = arith.constant 0 : index
    %c0_2 = arith.constant 0 : index
    %2 = vector.load %arg2[%c0_1, %c0_2] : memref<2x128xf32, #tpu.memory_space<vmem>>, vector<2x128xf32>
    %3 = vector.extract_strided_slice %2 {offsets = [0, 0], sizes = [1, 128], strides = [1, 1]} : vector<2x128xf32> to vector<1x128xf32>
    %4 = vector.shape_cast %3 : vector<1x128xf32> to vector<1x128xf32>
    %5 = vector.broadcast %4 : vector<1x128xf32> to vector<128x128xf32>
    %6 = vector.extract_strided_slice %2 {offsets = [1, 0], sizes = [1, 128], strides = [1, 1]} : vector<2x128xf32> to vector<1x128xf32>
    %7 = vector.shape_cast %6 : vector<1x128xf32> to vector<1x128xf32>
    %8 = vector.broadcast %7 : vector<1x128xf32> to vector<128x128xf32>
    %9 = tpu.concatenate %5, %8 in 0 : vector<128x128xf32>, vector<128x128xf32> -> vector<256x128xf32>
    %c0_3 = arith.constant 0 : index
    %c0_4 = arith.constant 0 : index
    %10 = vector.load %arg3[%c0_3, %c0_4] : memref<144x128xbf16, #tpu.memory_space<vmem>>, vector<16x64xbf16>
    %cst = arith.constant dense<0.000000e+00> : vector<256x64xf32>
    %11 = tpu.matmul %1, %10, %cst {dimension_numbers = #tpu.dot_dimension_numbers<[1], [0], [0], [1], [0, 0, 1, 1], [], []>} : vector<256x16xbf16>, vector<16x64xbf16>, vector<256x64xf32> -> vector<256x64xf32>
    %c128 = arith.constant 128 : index
    %c0_5 = arith.constant 0 : index
    %12 = vector.load %arg4[%c128, %c0_5] : memref<144x384xbf16, #tpu.memory_space<vmem>>, vector<16x384xbf16>
    %cst_6 = arith.constant dense<0.000000e+00> : vector<256x384xf32>
    %13 = tpu.matmul %1, %12, %cst_6 {dimension_numbers = #tpu.dot_dimension_numbers<[1], [0], [0], [1], [0, 0, 1, 1], [], []>} : vector<256x16xbf16>, vector<16x384xbf16>, vector<256x384xf32> -> vector<256x384xf32>
    %14 = vector.extract_strided_slice %9 {offsets = [0, 0], sizes = [256, 64], strides = [1, 1]} : vector<256x128xf32> to vector<256x64xf32>
    %15 = arith.addf %11, %14 : vector<256x64xf32>
    %cst_7 = arith.constant 0.000000e+00 : f32
    %16 = vector.broadcast %cst_7 : f32 to vector<256x64xf32>
    %17 = arith.maximumf %15, %16 : vector<256x64xf32>
    %18 = arith.truncf %17 : vector<256x64xf32> to vector<256x64xbf16>
    %c16 = arith.constant 16 : index
    %c0_8 = arith.constant 0 : index
    %19 = vector.load %arg3[%c16, %c0_8] : memref<144x128xbf16, #tpu.memory_space<vmem>>, vector<64x64xbf16>
    %cst_9 = arith.constant dense<0.000000e+00> : vector<256x64xf32>
    %20 = tpu.matmul %18, %19, %cst_9 {dimension_numbers = #tpu.dot_dimension_numbers<[1], [0], [0], [1], [0, 0, 1, 1], [], []>} : vector<256x64xbf16>, vector<64x64xbf16>, vector<256x64xf32> -> vector<256x64xf32>
    %c0_10 = arith.constant 0 : index
    %c0_11 = arith.constant 0 : index
    %21 = vector.load %arg6[%c0_10, %c0_11] : memref<8x384xf32, #tpu.memory_space<vmem>>, vector<1x64xf32>
    %22 = vector.broadcast %21 : vector<1x64xf32> to vector<256x64xf32>
    %23 = arith.addf %20, %22 : vector<256x64xf32>
    %cst_12 = arith.constant 0.000000e+00 : f32
    %24 = vector.broadcast %cst_12 : f32 to vector<256x64xf32>
    %25 = arith.maximumf %23, %24 : vector<256x64xf32>
    %26 = arith.truncf %25 : vector<256x64xf32> to vector<256x64xbf16>
    %c80 = arith.constant 80 : index
    %c0_13 = arith.constant 0 : index
    %27 = vector.load %arg3[%c80, %c0_13] : memref<144x128xbf16, #tpu.memory_space<vmem>>, vector<64x128xbf16>
    %cst_14 = arith.constant dense<0.000000e+00> : vector<256x128xf32>
    %28 = tpu.matmul %26, %27, %cst_14 {dimension_numbers = #tpu.dot_dimension_numbers<[1], [0], [0], [1], [0, 0, 1, 1], [], []>} : vector<256x64xbf16>, vector<64x128xbf16>, vector<256x128xf32> -> vector<256x128xf32>
    %c1 = arith.constant 1 : index
    %c0_15 = arith.constant 0 : index
    %29 = vector.load %arg6[%c1, %c0_15] : memref<8x384xf32, #tpu.memory_space<vmem>>, vector<1x128xf32>
    %30 = vector.broadcast %29 : vector<1x128xf32> to vector<256x128xf32>
    %31 = arith.addf %28, %30 : vector<256x128xf32>
    %c0_16 = arith.constant 0 : index
    %c0_17 = arith.constant 0 : index
    %32 = vector.load %arg7[%c0_16, %c0_17] : memref<256x128xf32, #tpu.memory_space<vmem>>, vector<256x128xf32>
    tpu.vector_store %arg7[%c0_16, %c0_17], %31 {strides = array<i32>} : memref<256x128xf32, #tpu.memory_space<vmem>>, vector<256x128xf32>,
    %33 = vector.extract_strided_slice %31 {offsets = [0, 0], sizes = [256, 32], strides = [1, 1]} : vector<256x128xf32> to vector<256x32xf32>
    %34 = vector.extract_strided_slice %9 {offsets = [0, 64], sizes = [256, 32], strides = [1, 1]} : vector<256x128xf32> to vector<256x32xf32>
    %35 = arith.addf %33, %34 : vector<256x32xf32>
    %cst_18 = arith.constant 0.000000e+00 : f32
    %36 = vector.broadcast %cst_18 : f32 to vector<256x32xf32>
    %37 = arith.maximumf %35, %36 : vector<256x32xf32>
    %38 = vector.extract_strided_slice %31 {offsets = [0, 32], sizes = [256, 32], strides = [1, 1]} : vector<256x128xf32> to vector<256x32xf32>
    %39 = vector.extract_strided_slice %9 {offsets = [0, 96], sizes = [256, 32], strides = [1, 1]} : vector<256x128xf32> to vector<256x32xf32>
    %40 = arith.addf %38, %39 : vector<256x32xf32>
    %cst_19 = arith.constant 0.000000e+00 : f32
    %41 = vector.broadcast %cst_19 : f32 to vector<256x32xf32>
    %42 = arith.maximumf %40, %41 : vector<256x32xf32>
    %43 = tpu.concatenate %25, %37, %42 in 1 : vector<256x64xf32>, vector<256x32xf32>, vector<256x32xf32> -> vector<256x128xf32>
    %44 = arith.truncf %43 : vector<256x128xf32> to vector<256x128xbf16>
    %c0_20 = arith.constant 0 : index
    %c0_21 = arith.constant 0 : index
    %45 = vector.load %arg4[%c0_20, %c0_21] : memref<144x384xbf16, #tpu.memory_space<vmem>>, vector<128x384xbf16>
    %cst_22 = arith.constant dense<0.000000e+00> : vector<256x384xf32>
    %46 = tpu.matmul %44, %45, %cst_22 {dimension_numbers = #tpu.dot_dimension_numbers<[1], [0], [0], [1], [0, 0, 1, 1], [], []>} : vector<256x128xbf16>, vector<128x384xbf16>, vector<256x384xf32> -> vector<256x384xf32>
    %47 = arith.addf %46, %13 : vector<256x384xf32>
    %c2 = arith.constant 2 : index
    %c0_23 = arith.constant 0 : index
    %48 = vector.load %arg6[%c2, %c0_23] : memref<8x384xf32, #tpu.memory_space<vmem>>, vector<1x384xf32>
    %49 = vector.broadcast %48 : vector<1x384xf32> to vector<256x384xf32>
    %50 = arith.addf %47, %49 : vector<256x384xf32>
    %cst_24 = arith.constant 0.000000e+00 : f32
    %51 = vector.broadcast %cst_24 : f32 to vector<256x384xf32>
    %52 = arith.maximumf %50, %51 : vector<256x384xf32>
    %53 = arith.truncf %52 : vector<256x384xf32> to vector<256x384xbf16>
    %c0_25 = arith.constant 0 : index
    %c0_26 = arith.constant 0 : index
    %54 = vector.load %arg5[%c0_25, %c0_26] : memref<768x192xbf16, #tpu.memory_space<vmem>>, vector<384x192xbf16>
    %cst_27 = arith.constant dense<0.000000e+00> : vector<256x192xf32>
    %55 = tpu.matmul %53, %54, %cst_27 {dimension_numbers = #tpu.dot_dimension_numbers<[1], [0], [0], [1], [0, 0, 1, 1], [], []>} : vector<256x384xbf16>, vector<384x192xbf16>, vector<256x192xf32> -> vector<256x192xf32>
    %c3 = arith.constant 3 : index
    %c0_28 = arith.constant 0 : index
    %56 = vector.load %arg6[%c3, %c0_28] : memref<8x384xf32, #tpu.memory_space<vmem>>, vector<1x192xf32>
    %57 = vector.broadcast %56 : vector<1x192xf32> to vector<256x192xf32>
    %58 = arith.addf %55, %57 : vector<256x192xf32>
    %cst_29 = arith.constant 0.000000e+00 : f32
    %59 = vector.broadcast %cst_29 : f32 to vector<256x192xf32>
    %60 = arith.maximumf %58, %59 : vector<256x192xf32>
    %61 = vector.extract_strided_slice %60 {offsets = [0, 0], sizes = [128, 192], strides = [1, 1]} : vector<256x192xf32> to vector<128x192xf32>
    %cst_30 = arith.constant dense<0xFF800000> : vector<192xf32>
    %62 = vector.multi_reduction <maximumf>, %61, %cst_30 [0] : vector<128x192xf32> to vector<192xf32>
    %63 = vector.shape_cast %62 : vector<192xf32> to vector<1x192xf32>
    %64 = vector.extract_strided_slice %60 {offsets = [128, 0], sizes = [128, 192], strides = [1, 1]} : vector<256x192xf32> to vector<128x192xf32>
    %cst_31 = arith.constant dense<0xFF800000> : vector<192xf32>
    %65 = vector.multi_reduction <maximumf>, %64, %cst_31 [0] : vector<128x192xf32> to vector<192xf32>
    %66 = vector.shape_cast %65 : vector<192xf32> to vector<1x192xf32>
    %67 = tpu.concatenate %63, %66 in 0 : vector<1x192xf32>, vector<1x192xf32> -> vector<2x192xf32>
    %68 = arith.truncf %67 : vector<2x192xf32> to vector<2x192xbf16>
    %69 = vector.extract_strided_slice %25 {offsets = [0, 0], sizes = [128, 64], strides = [1, 1]} : vector<256x64xf32> to vector<128x64xf32>
    %cst_32 = arith.constant dense<0xFF800000> : vector<64xf32>
    %70 = vector.multi_reduction <maximumf>, %69, %cst_32 [0] : vector<128x64xf32> to vector<64xf32>
    %71 = vector.shape_cast %70 : vector<64xf32> to vector<1x64xf32>
    %72 = vector.extract_strided_slice %25 {offsets = [128, 0], sizes = [128, 64], strides = [1, 1]} : vector<256x64xf32> to vector<128x64xf32>
    %cst_33 = arith.constant dense<0xFF800000> : vector<64xf32>
    %73 = vector.multi_reduction <maximumf>, %72, %cst_33 [0] : vector<128x64xf32> to vector<64xf32>
    %74 = vector.shape_cast %73 : vector<64xf32> to vector<1x64xf32>
    %75 = tpu.concatenate %71, %74 in 0 : vector<1x64xf32>, vector<1x64xf32> -> vector<2x64xf32>
    %c384 = arith.constant 384 : index
    %c0_34 = arith.constant 0 : index
    %76 = vector.load %arg5[%c384, %c0_34] : memref<768x192xbf16, #tpu.memory_space<vmem>>, vector<192x192xbf16>
    %cst_35 = arith.constant dense<0.000000e+00> : vector<2x192xf32>
    %77 = tpu.matmul %68, %76, %cst_35 {dimension_numbers = #tpu.dot_dimension_numbers<[1], [0], [0], [1], [0, 0, 1, 1], [], []>} : vector<2x192xbf16>, vector<192x192xbf16>, vector<2x192xf32> -> vector<2x192xf32>
    %c4 = arith.constant 4 : index
    %c0_36 = arith.constant 0 : index
    %78 = vector.load %arg6[%c4, %c0_36] : memref<8x384xf32, #tpu.memory_space<vmem>>, vector<1x192xf32>
    %79 = vector.broadcast %78 : vector<1x192xf32> to vector<2x192xf32>
    %80 = arith.addf %77, %79 : vector<2x192xf32>
    %cst_37 = arith.constant 0.000000e+00 : f32
    %81 = vector.broadcast %cst_37 : f32 to vector<2x192xf32>
    %82 = arith.maximumf %80, %81 : vector<2x192xf32>
    %83 = arith.truncf %82 : vector<2x192xf32> to vector<2x192xbf16>
    %c576 = arith.constant 576 : index
    %c0_38 = arith.constant 0 : index
    %84 = vector.load %arg5[%c576, %c0_38] : memref<768x192xbf16, #tpu.memory_space<vmem>>, vector<192x64xbf16>
    %cst_39 = arith.constant dense<0.000000e+00> : vector<2x64xf32>
    %85 = tpu.matmul %83, %84, %cst_39 {dimension_numbers = #tpu.dot_dimension_numbers<[1], [0], [0], [1], [0, 0, 1, 1], [], []>} : vector<2x192xbf16>, vector<192x64xbf16>, vector<2x64xf32> -> vector<2x64xf32>
    %c5 = arith.constant 5 : index
    %c0_40 = arith.constant 0 : index
    %86 = vector.load %arg6[%c5, %c0_40] : memref<8x384xf32, #tpu.memory_space<vmem>>, vector<1x64xf32>
    %87 = vector.broadcast %86 : vector<1x64xf32> to vector<2x64xf32>
    %88 = arith.addf %85, %87 : vector<2x64xf32>
    %89 = tpu.concatenate %75, %88 in 1 : vector<2x64xf32>, vector<2x64xf32> -> vector<2x128xf32>
    %c0_41 = arith.constant 0 : index
    %c0_42 = arith.constant 0 : index
    %90 = vector.load %arg8[%c0_41, %c0_42] : memref<2x128xf32, #tpu.memory_space<vmem>>, vector<2x128xf32>
    tpu.vector_store %arg8[%c0_41, %c0_42], %89 {strides = array<i32>} : memref<2x128xf32, #tpu.memory_space<vmem>>, vector<2x128xf32>,
    return
  }
  func.func @transform_0(%arg0: i32) -> (i32, i32) {
    %c0_i32 = arith.constant 0 : i32
    %c0_i32_0 = arith.constant 0 : i32
    %c0_i32_1 = arith.constant 0 : i32
    return %c0_i32, %c0_i32_0 : i32, i32
  }
  func.func @transform_1(%arg0: i32) -> (i32, i32) {
    %c0_i32 = arith.constant 0 : i32
    %c0_i32_0 = arith.constant 0 : i32
    %c0_i32_1 = arith.constant 0 : i32
    return %c0_i32, %c0_i32_0 : i32, i32
  }
  func.func @transform_2(%arg0: i32) -> (i32, i32) {
    %c0_i32 = arith.constant 0 : i32
    %c0_i32_0 = arith.constant 0 : i32
    %c0_i32_1 = arith.constant 0 : i32
    return %c0_i32, %c0_i32_0 : i32, i32
  }
  func.func @transform_3(%arg0: i32) -> (i32, i32) {
    %c0_i32 = arith.constant 0 : i32
    %c0_i32_0 = arith.constant 0 : i32
    %c0_i32_1 = arith.constant 0 : i32
    return %c0_i32, %c0_i32_0 : i32, i32
  }
  func.func @transform_4(%arg0: i32) -> (i32, i32) {
    %c0_i32 = arith.constant 0 : i32
    %c0_i32_0 = arith.constant 0 : i32
    %c0_i32_1 = arith.constant 0 : i32
    return %c0_i32, %c0_i32_0 : i32, i32
  }
  func.func @transform_5(%arg0: i32) -> (i32, i32) {
    %c0_i32 = arith.constant 0 : i32
    %c0_i32_0 = arith.constant 0 : i32
    %c0_i32_1 = arith.constant 0 : i32
    return %c0_i32, %c0_i32_0 : i32, i32
  }
  func.func @transform_6(%arg0: i32) -> (i32, i32) {
    %c0_i32 = arith.constant 0 : i32
    %c0_i32_0 = arith.constant 0 : i32
    %c0_i32_1 = arith.constant 0 : i32
    return %c0_i32, %c0_i32_0 : i32, i32
  }
  func.func @transform_7(%arg0: i32) -> (i32, i32) {
    %c0_i32 = arith.constant 0 : i32
    %c0_i32_0 = arith.constant 0 : i32
    %c0_i32_1 = arith.constant 0 : i32
    return %c0_i32, %c0_i32_0 : i32, i32
  }
}

</mosaic_0001>

<llo_original>
// kernel: posenet9d_forward.1
$region0: #{posenet9d_forward.1}
  #allocation0 [shape = 'u32[]', space=smem, size = 0x4, offset = 0x4, fixed_abs, tag = 'smem constant byte address 0x4 - core index']
  #allocation1 [shape = 'u32[144,128]{1,0:T(1,128)}', space=vmem, size = 0x12000, scoped, tag = 'internal scratch']
  %s0 = inlined_call_operand.vmem [shape: f32[256,16], index: 0, kind: input, shape index: {}]
  %s1 = inlined_call_operand.vmem [shape: f32[2,128], index: 1, kind: input, shape index: {}]
  %s2 = inlined_call_operand.vmem [shape: bf16[144,128], index: 2, kind: input, shape index: {}]
  %s3 = inlined_call_operand.vmem [shape: bf16[144,384], index: 3, kind: input, shape index: {}]
  %s4 = inlined_call_operand.vmem [shape: bf16[768,192], index: 4, kind: input, shape index: {}]
  %s5 = inlined_call_operand.vmem [shape: f32[8,384], index: 5, kind: input, shape index: {}]
  %s6 = inlined_call_operand.vmem [shape: f32[256,128], index: 6, kind: output, shape index: {0}]
  %s7 = inlined_call_operand.vmem [shape: f32[2,128], index: 7, kind: output, shape index: {1}]
  %8 = xla_tuple %s6, %s7
  %s9 = sld [smem:[#allocation0]]
  $region42: #{posenet9d_forward.1} parent=0
    _
  %s11 = ssub.s32 1, %s9
  %s12 = scalar_select 0, %s11, %s9
  // Predicated region
  $region2: #{posenet9d_forward.1} parent=0 // pred_check
    _
  $region3: #{posenet9d_forward.1} parent=0 // pred_check_branch
    %14 = sbr.rel (0) target = $region5
  $region4: #{posenet9d_forward.1} parent=0 // pred_region
    _
  $region5: #{posenet9d_forward.1} parent=0 // pred_fallthru
    _
  // Predicated region
  $region6: #{posenet9d_forward.1} parent=0 // pred_check
    _
  $region7: #{posenet9d_forward.1} parent=0 // pred_check_branch
    %16 = sbr.rel (0) target = $region9
  $region8: #{posenet9d_forward.1} parent=0 // pred_region
    _
  $region9: #{posenet9d_forward.1} parent=0 // pred_fallthru
    _
  // Predicated region
  $region10: #{posenet9d_forward.1} parent=0 // pred_check
    _
  $region11: #{posenet9d_forward.1} parent=0 // pred_check_branch
    %18 = sbr.rel (0) target = $region13
  $region12: #{posenet9d_forward.1} parent=0 // pred_region
    _
  $region13: #{posenet9d_forward.1} parent=0 // pred_fallthru
    _
  // Predicated region
  $region14: #{posenet9d_forward.1} parent=0 // pred_check
    _
  $region15: #{posenet9d_forward.1} parent=0 // pred_check_branch
    %20 = sbr.rel (0) target = $region17
  $region16: #{posenet9d_forward.1} parent=0 // pred_region
    _
  $region17: #{posenet9d_forward.1} parent=0 // pred_fallthru
    _
  // Predicated region
  $region18: #{posenet9d_forward.1} parent=0 // pred_check
    _
  $region19: #{posenet9d_forward.1} parent=0 // pred_check_branch
    %22 = sbr.rel (0) target = $region21
  $region20: #{posenet9d_forward.1} parent=0 // pred_region
    _
  $region21: #{posenet9d_forward.1} parent=0 // pred_fallthru
    _
  // Predicated region
  $region22: #{posenet9d_forward.1} parent=0 // pred_check
    _
  $region23: #{posenet9d_forward.1} parent=0 // pred_check_branch
    %24 = sbr.rel (0) target = $region25
  $region24: #{posenet9d_forward.1} parent=0 // pred_region
    _
  $region25: #{posenet9d_forward.1} parent=0 // pred_fallthru
    _
  %v26 = vld [vmem:[%s0] sm:$0xff]
  %v27 = vld [vmem:[%s0 + $0x8] sm:$0xff]
  %v28 = vld [vmem:[%s0 + $0x10] sm:$0xff]
  %v29 = vld [vmem:[%s0 + $0x18] sm:$0xff]
  %v30 = vld [vmem:[%s0 + $0x20] sm:$0xff]
  %v31 = vld [vmem:[%s0 + $0x28] sm:$0xff]
  %v32 = vld [vmem:[%s0 + $0x30] sm:$0xff]
  %v33 = vld [vmem:[%s0 + $0x38] sm:$0xff]
  %v34 = vld [vmem:[%s0 + $0x40] sm:$0xff]
  %v35 = vld [vmem:[%s0 + $0x48] sm:$0xff]
  %v36 = vld [vmem:[%s0 + $0x50] sm:$0xff]
  %v37 = vld [vmem:[%s0 + $0x58] sm:$0xff]
  %v38 = vld [vmem:[%s0 + $0x60] sm:$0xff]
  %v39 = vld [vmem:[%s0 + $0x68] sm:$0xff]
  %v40 = vld [vmem:[%s0 + $0x70] sm:$0xff]
  %v41 = vld [vmem:[%s0 + $0x78] sm:$0xff]
  %v42 = vld [vmem:[%s0 + $0x80] sm:$0xff]
  %v43 = vld [vmem:[%s0 + $0x88] sm:$0xff]
  %v44 = vld [vmem:[%s0 + $0x90] sm:$0xff]
  %v45 = vld [vmem:[%s0 + $0x98] sm:$0xff]
  %v46 = vld [vmem:[%s0 + $0xa0] sm:$0xff]
  %v47 = vld [vmem:[%s0 + $0xa8] sm:$0xff]
  %v48 = vld [vmem:[%s0 + $0xb0] sm:$0xff]
  %v49 = vld [vmem:[%s0 + $0xb8] sm:$0xff]
  %v50 = vld [vmem:[%s0 + $0xc0] sm:$0xff]
  %v51 = vld [vmem:[%s0 + $0xc8] sm:$0xff]
  %v52 = vld [vmem:[%s0 + $0xd0] sm:$0xff]
  %v53 = vld [vmem:[%s0 + $0xd8] sm:$0xff]
  %v54 = vld [vmem:[%s0 + $0xe0] sm:$0xff]
  %v55 = vld [vmem:[%s0 + $0xe8] sm:$0xff]
  %v56 = vld [vmem:[%s0 + $0xf0] sm:$0xff]
  %v57 = vld [vmem:[%s0 + $0xf8] sm:$0xff]
  %v58 = vpack.c.bf16 %v27, %v26
  %v59 = vpack.c.bf16 %v29, %v28
  %v60 = vpack.c.bf16 %v31, %v30
  %v61 = vpack.c.bf16 %v33, %v32
  %v62 = vpack.c.bf16 %v35, %v34
  %v63 = vpack.c.bf16 %v37, %v36
  %v64 = vpack.c.bf16 %v39, %v38
  %v65 = vpack.c.bf16 %v41, %v40
  %v66 = vpack.c.bf16 %v43, %v42
  %v67 = vpack.c.bf16 %v45, %v44
  %v68 = vpack.c.bf16 %v47, %v46
  %v69 = vpack.c.bf16 %v49, %v48
  %v70 = vpack.c.bf16 %v51, %v50
  %v71 = vpack.c.bf16 %v53, %v52
  %v72 = vpack.c.bf16 %v55, %v54
  %v73 = vpack.c.bf16 %v57, %v56
  %v74 = vld [vmem:[%s1] sm:$0x3]
  %v75 = vlaneseq
  %v76 = vshrl.u32 %v75, 7
  %v77 = vsub.s32 0, %v76
  %v78 = vrot.slane %v74, %v77
  %v79 = vlaneseq
  %v80 = vshrl.u32 %v79, 7
  %v81 = vsub.s32 1, %v80
  %v82 = vrot.slane %v74, %v81
  %v85 = vld [vmem:[%s2] sm:$0xf]
  %v86 = vld [vmem:[%s2 + $0x4] sm:$0xf]
  %v87 = vld [vmem:[%s3 + $0xc0] sm:$0xff]
  %v88 = vld [vmem:[%s3 + $0xc8] sm:$0xf]
  %v89 = vld [vmem:[%s3 + $0xcc] sm:$0xff]
  %v90 = vld [vmem:[%s3 + $0xd4] sm:$0xf]
  %v95 = vunpack.c.l.b16 %v87
  %v96 = vunpack.c.h.b16 %v87
  %v97 = vunpack.c.l.b16 %v88
  %v98 = vunpack.c.l.b16 %v89
  %v99 = vunpack.c.h.b16 %v89
  %v100 = vunpack.c.l.b16 %v90
  %v101 = vpack.c.b16 %v98, %v95
  %v102 = vpack.c.b16 %v99, %v96
  %v103 = vpack.c.b16 %v100, %v97
  %vm107 = vcmask 130048
  %v109 = vsel %vm107, %v58, 0
  %v112 = vsel %vm107, %v59, 0
  %v115 = vsel %vm107, %v60, 0
  %v118 = vsel %vm107, %v61, 0
  %v121 = vsel %vm107, %v62, 0
  %v124 = vsel %vm107, %v63, 0
  %v127 = vsel %vm107, %v64, 0
  %v130 = vsel %vm107, %v65, 0
  %v133 = vsel %vm107, %v66, 0
  %v136 = vsel %vm107, %v67, 0
  %v139 = vsel %vm107, %v68, 0
  %v142 = vsel %vm107, %v69, 0
  %v145 = vsel %vm107, %v70, 0
  %v148 = vsel %vm107, %v71, 0
  %v151 = vsel %vm107, %v72, 0
  %v154 = vsel %vm107, %v73, 0
  %156 = vmatprep.subr.bf16.mxu0 %v102
  %157 = vmatpush1.bf16.msra.mxu0 %v101
  %158 = vmatprep.subr.bf16.mxu0 0
  %159 = vmatpush1.bf16.msra.mxu0 0
  %160 = vmatprep.subr.bf16.mxu0 0
  %161 = vmatpush1.bf16.msra.mxu0 0
  %162 = vmatprep.subr.bf16.mxu0 0
  %163 = vmatpush1.bf16.msra.mxu0 0
  %164 = vmatprep.subr.bf16.mxu0 0
  %165 = vmatpush1.bf16.msra.mxu0 0
  %166 = vmatprep.subr.bf16.mxu0 0
  %167 = vmatpush1.bf16.msra.mxu0 0
  %168 = vmatprep.subr.bf16.mxu0 0
  %169 = vmatpush1.bf16.msra.mxu0 0
  %170 = vmatprep.subr.bf16.mxu0 0
  %171 = vmatpush1.bf16.msra.mxu0 0
  %172 = vmatprep.subr.bf16.mxu0 0
  %173 = vmatpush1.bf16.msra.mxu0 0
  %174 = vmatprep.subr.bf16.mxu0 0
  %175 = vmatpush1.bf16.msra.mxu0 0
  %176 = vmatprep.subr.bf16.mxu0 0
  %177 = vmatpush1.bf16.msra.mxu0 0
  %178 = vmatprep.subr.bf16.mxu0 0
  %179 = vmatpush1.bf16.msra.mxu0 0
  %180 = vmatprep.subr.bf16.mxu0 0
  %181 = vmatpush1.bf16.msra.mxu0 0
  %182 = vmatprep.subr.bf16.mxu0 0
  %183 = vmatpush1.bf16.msra.mxu0 0
  %184 = vmatprep.subr.bf16.mxu0 0
  %185 = vmatpush1.bf16.msra.mxu0 0
  %186 = vmatprep.subr.bf16.mxu0 0
  %187 = vmatpush1.bf16.msra.mxu0 0
  %188 = vmatprep.mubr.bf16.mxu0 0
  %189 = vmatmul.mubr.bf16.gmra.mrb[0].mxu0 %v109
  %v190 = vpop.f32.mrb[0].mxu0
  %v191 = vadd.f32 0.0, %v190
  %v192 = vpop.f32.mrb[0].mxu0
  %v193 = vadd.f32 0.0, %v192
  %v194 = vpop.f32.mrb[0].mxu0
  %v195 = vadd.f32 0.0, %v194
  %v196 = vpop.f32.mrb[0].mxu0
  %v197 = vadd.f32 0.0, %v196
  %198 = vmatprep.mubr.bf16.mxu0 0
  %199 = vmatmul.mubr.bf16.gmra.mrb[0].mxu0 %v112
  %v200 = vpop.f32.mrb[0].mxu0
  %v201 = vadd.f32 0.0, %v200
  %v202 = vpop.f32.mrb[0].mxu0
  %v203 = vadd.f32 0.0, %v202
  %v204 = vpop.f32.mrb[0].mxu0
  %v205 = vadd.f32 0.0, %v204
  %v206 = vpop.f32.mrb[0].mxu0
  %v207 = vadd.f32 0.0, %v206
  %208 = vmatprep.mubr.bf16.mxu0 0
  %209 = vmatmul.mubr.bf16.gmra.mrb[0].mxu0 %v115
  %v210 = vpop.f32.mrb[0].mxu0
  %v211 = vadd.f32 0.0, %v210
  %v212 = vpop.f32.mrb[0].mxu0
  %v213 = vadd.f32 0.0, %v212
  %v214 = vpop.f32.mrb[0].mxu0
  %v215 = vadd.f32 0.0, %v214
  %v216 = vpop.f32.mrb[0].mxu0
  %v217 = vadd.f32 0.0, %v216
  %218 = vmatprep.mubr.bf16.mxu0 0
  %219 = vmatmul.mubr.bf16.gmra.mrb[0].mxu0 %v118
  %v220 = vpop.f32.mrb[0].mxu0
  %v221 = vadd.f32 0.0, %v220
  %v222 = vpop.f32.mrb[0].mxu0
  %v223 = vadd.f32 0.0, %v222
  %v224 = vpop.f32.mrb[0].mxu0
  %v225 = vadd.f32 0.0, %v224
  %v226 = vpop.f32.mrb[0].mxu0
  %v227 = vadd.f32 0.0, %v226
  %228 = vmatprep.mubr.bf16.mxu0 0
  %229 = vmatmul.mubr.bf16.gmra.mrb[0].mxu0 %v121
  %v230 = vpop.f32.mrb[0].mxu0
  %v231 = vadd.f32 0.0, %v230
  %v232 = vpop.f32.mrb[0].mxu0
  %v233 = vadd.f32 0.0, %v232
  %v234 = vpop.f32.mrb[0].mxu0
  %v235 = vadd.f32 0.0, %v234
  %v236 = vpop.f32.mrb[0].mxu0
  %v237 = vadd.f32 0.0, %v236
  %238 = vmatprep.mubr.bf16.mxu0 0
  %239 = vmatmul.mubr.bf16.gmra.mrb[0].mxu0 %v124
  %v240 = vpop.f32.mrb[0].mxu0
  %v241 = vadd.f32 0.0, %v240
  %v242 = vpop.f32.mrb[0].mxu0
  %v243 = vadd.f32 0.0, %v242
  %v244 = vpop.f32.mrb[0].mxu0
  %v245 = vadd.f32 0.0, %v244
  %v246 = vpop.f32.mrb[0].mxu0
  %v247 = vadd.f32 0.0, %v246
  %248 = vmatprep.mubr.bf16.mxu0 0
  %249 = vmatmul.mubr.bf16.gmra.mrb[0].mxu0 %v127
  %v250 = vpop.f32.mrb[0].mxu0
  %v251 = vadd.f32 0.0, %v250
  %v252 = vpop.f32.mrb[0].mxu0
  %v253 = vadd.f32 0.0, %v252
  %v254 = vpop.f32.mrb[0].mxu0
  %v255 = vadd.f32 0.0, %v254
  %v256 = vpop.f32.mrb[0].mxu0
  %v257 = vadd.f32 0.0, %v256
  %258 = vmatprep.mubr.bf16.mxu0 0
  %259 = vmatmul.mubr.bf16.gmra.mrb[0].mxu0 %v130
  %v260 = vpop.f32.mrb[0].mxu0
  %v261 = vadd.f32 0.0, %v260
  %v262 = vpop.f32.mrb[0].mxu0
  %v263 = vadd.f32 0.0, %v262
  %v264 = vpop.f32.mrb[0].mxu0
  %v265 = vadd.f32 0.0, %v264
  %v266 = vpop.f32.mrb[0].mxu0
  %v267 = vadd.f32 0.0, %v266
  %268 = vmatprep.mubr.bf16.mxu0 0
  %269 = vmatmul.mubr.bf16.gmra.mrb[0].mxu0 %v133
  %v270 = vpop.f32.mrb[0].mxu0
  %v271 = vadd.f32 0.0, %v270
  %v272 = vpop.f32.mrb[0].mxu0
  %v273 = vadd.f32 0.0, %v272
  %v274 = vpop.f32.mrb[0].mxu0
  %v275 = vadd.f32 0.0, %v274
  %v276 = vpop.f32.mrb[0].mxu0
  %v277 = vadd.f32 0.0, %v276
  %278 = vmatprep.mubr.bf16.mxu0 0
  %279 = vmatmul.mubr.bf16.gmra.mrb[0].mxu0 %v136
  %v280 = vpop.f32.mrb[0].mxu0
  %v281 = vadd.f32 0.0, %v280
  %v282 = vpop.f32.mrb[0].mxu0
  %v283 = vadd.f32 0.0, %v282
  %v284 = vpop.f32.mrb[0].mxu0
  %v285 = vadd.f32 0.0, %v284
  %v286 = vpop.f32.mrb[0].mxu0
  %v287 = vadd.f32 0.0, %v286
  %288 = vmatprep.mubr.bf16.mxu0 0
  %289 = vmatmul.mubr.bf16.gmra.mrb[0].mxu0 %v139
  %v290 = vpop.f32.mrb[0].mxu0
  %v291 = vadd.f32 0.0, %v290
  %v292 = vpop.f32.mrb[0].mxu0
  %v293 = vadd.f32 0.0, %v292
  %v294 = vpop.f32.mrb[0].mxu0
  %v295 = vadd.f32 0.0, %v294
  %v296 = vpop.f32.mrb[0].mxu0
  %v297 = vadd.f32 0.0, %v296
  %298 = vmatprep.mubr.bf16.mxu0 0
  %299 = vmatmul.mubr.bf16.gmra.mrb[0].mxu0 %v142
  %v300 = vpop.f32.mrb[0].mxu0
  %v301 = vadd.f32 0.0, %v300
  %v302 = vpop.f32.mrb[0].mxu0
  %v303 = vadd.f32 0.0, %v302
  %v304 = vpop.f32.mrb[0].mxu0
  %v305 = vadd.f32 0.0, %v304
  %v306 = vpop.f32.mrb[0].mxu0
  %v307 = vadd.f32 0.0, %v306
  %308 = vmatprep.mubr.bf16.mxu0 0
  %309 = vmatmul.mubr.bf16.gmra.mrb[0].mxu0 %v145
  %v310 = vpop.f32.mrb[0].mxu0
  %v311 = vadd.f32 0.0, %v310
  %v312 = vpop.f32.mrb[0].mxu0
  %v313 = vadd.f32 0.0, %v312
  %v314 = vpop.f32.mrb[0].mxu0
  %v315 = vadd.f32 0.0, %v314
  %v316 = vpop.f32.mrb[0].mxu0
  %v317 = vadd.f32 0.0, %v316
  %318 = vmatprep.mubr.bf16.mxu0 0
  %319 = vmatmul.mubr.bf16.gmra.mrb[0].mxu0 %v148
  %v320 = vpop.f32.mrb[0].mxu0
  %v321 = vadd.f32 0.0, %v320
  %v322 = vpop.f32.mrb[0].mxu0
  %v323 = vadd.f32 0.0, %v322
  %v324 = vpop.f32.mrb[0].mxu0
  %v325 = vadd.f32 0.0, %v324
  %v326 = vpop.f32.mrb[0].mxu0
  %v327 = vadd.f32 0.0, %v326
  %328 = vmatprep.mubr.bf16.mxu0 0
  %329 = vmatmul.mubr.bf16.gmra.mrb[0].mxu0 %v151
  %v330 = vpop.f32.mrb[0].mxu0
  %v331 = vadd.f32 0.0, %v330
  %v332 = vpop.f32.mrb[0].mxu0
  %v333 = vadd.f32 0.0, %v332
  %v334 = vpop.f32.mrb[0].mxu0
  %v335 = vadd.f32 0.0, %v334
  %v336 = vpop.f32.mrb[0].mxu0
  %v337 = vadd.f32 0.0, %v336
  %338 = vmatprep.mubr.bf16.mxu0 0
  %339 = vmatmul.mubr.bf16.gmra.mrb[0].mxu0 %v154
  %v340 = vpop.f32.mrb[0].mxu0
  %v341 = vadd.f32 0.0, %v340
  %v342 = vpop.f32.mrb[0].mxu0
  %v343 = vadd.f32 0.0, %v342
  %v344 = vpop.f32.mrb[0].mxu0
  %v345 = vadd.f32 0.0, %v344
  %v346 = vpop.f32.mrb[0].mxu0
  %v347 = vadd.f32 0.0, %v346
  %348 = vdwg.mxu0
  %349 = vmatprep.subr.bf16.mxu0 0
  %350 = vmatpush1.bf16.msra.mxu0 %v103
  %351 = vmatprep.subr.bf16.mxu0 0
  %352 = vmatpush1.bf16.msra.mxu0 0
  %353 = vmatprep.subr.bf16.mxu0 0
  %354 = vmatpush1.bf16.msra.mxu0 0
  %355 = vmatprep.subr.bf16.mxu0 0
  %356 = vmatpush1.bf16.msra.mxu0 0
  %357 = vmatprep.subr.bf16.mxu0 0
  %358 = vmatpush1.bf16.msra.mxu0 0
  %359 = vmatprep.subr.bf16.mxu0 0
  %360 = vmatpush1.bf16.msra.mxu0 0
  %361 = vmatprep.subr.bf16.mxu0 0
  %362 = vmatpush1.bf16.msra.mxu0 0
  %363 = vmatprep.subr.bf16.mxu0 0
  %364 = vmatpush1.bf16.msra.mxu0 0
  %365 = vmatprep.subr.bf16.mxu0 0
  %366 = vmatpush1.bf16.msra.mxu0 0
  %367 = vmatprep.subr.bf16.mxu0 0
  %368 = vmatpush1.bf16.msra.mxu0 0
  %369 = vmatprep.subr.bf16.mxu0 0
  %370 = vmatpush1.bf16.msra.mxu0 0
  %371 = vmatprep.subr.bf16.mxu0 0
  %372 = vmatpush1.bf16.msra.mxu0 0
  %373 = vmatprep.subr.bf16.mxu0 0
  %374 = vmatpush1.bf16.msra.mxu0 0
  %375 = vmatprep.subr.bf16.mxu0 0
  %376 = vmatpush1.bf16.msra.mxu0 0
  %377 = vmatprep.subr.bf16.mxu0 0
  %378 = vmatpush1.bf16.msra.mxu0 0
  %379 = vmatprep.subr.bf16.mxu0 0
  %380 = vmatpush1.bf16.msra.mxu0 0
  %381 = vmatprep.mubr.bf16.mxu0 0
  %382 = vmatmul.mubr.bf16.gmra.mrb[0].mxu0 %v109
  %v383 = vpop.f32.mrb[0].mxu0
  %v384 = vadd.f32 0.0, %v383
  %v385 = vpop.f32.mrb[0].mxu0
  %v386 = vpop.f32.mrb[0].mxu0
  %v387 = vadd.f32 0.0, %v386
  %v388 = vpop.f32.mrb[0].mxu0
  %389 = vmatprep.mubr.bf16.mxu0 0
  %390 = vmatmul.mubr.bf16.gmra.mrb[0].mxu0 %v112
  %v391 = vpop.f32.mrb[0].mxu0
  %v392 = vadd.f32 0.0, %v391
  %v393 = vpop.f32.mrb[0].mxu0
  %v394 = vpop.f32.mrb[0].mxu0
  %v395 = vadd.f32 0.0, %v394
  %v396 = vpop.f32.mrb[0].mxu0
  %397 = vmatprep.mubr.bf16.mxu0 0
  %398 = vmatmul.mubr.bf16.gmra.mrb[0].mxu0 %v115
  %v399 = vpop.f32.mrb[0].mxu0
  %v400 = vadd.f32 0.0, %v399
  %v401 = vpop.f32.mrb[0].mxu0
  %v402 = vpop.f32.mrb[0].mxu0
  %v403 = vadd.f32 0.0, %v402
  %v404 = vpop.f32.mrb[0].mxu0
  %405 = vmatprep.mubr.bf16.mxu0 0
  %406 = vmatmul.mubr.bf16.gmra.mrb[0].mxu0 %v118
  %v407 = vpop.f32.mrb[0].mxu0
  %v408 = vadd.f32 0.0, %v407
  %v409 = vpop.f32.mrb[0].mxu0
  %v410 = vpop.f32.mrb[0].mxu0
  %v411 = vadd.f32 0.0, %v410
  %v412 = vpop.f32.mrb[0].mxu0
  %413 = vmatprep.mubr.bf16.mxu0 0
  %414 = vmatmul.mubr.bf16.gmra.mrb[0].mxu0 %v121
  %v415 = vpop.f32.mrb[0].mxu0
  %v416 = vadd.f32 0.0, %v415
  %v417 = vpop.f32.mrb[0].mxu0
  %v418 = vpop.f32.mrb[0].mxu0
  %v419 = vadd.f32 0.0, %v418
  %v420 = vpop.f32.mrb[0].mxu0
  %421 = vmatprep.mubr.bf16.mxu0 0
  %422 = vmatmul.mubr.bf16.gmra.mrb[0].mxu0 %v124
  %v423 = vpop.f32.mrb[0].mxu0
  %v424 = vadd.f32 0.0, %v423
  %v425 = vpop.f32.mrb[0].mxu0
  %v426 = vpop.f32.mrb[0].mxu0
  %v427 = vadd.f32 0.0, %v426
  %v428 = vpop.f32.mrb[0].mxu0
  %429 = vmatprep.mubr.bf16.mxu0 0
  %430 = vmatmul.mubr.bf16.gmra.mrb[0].mxu0 %v127
  %v431 = vpop.f32.mrb[0].mxu0
  %v432 = vadd.f32 0.0, %v431
  %v433 = vpop.f32.mrb[0].mxu0
  %v434 = vpop.f32.mrb[0].mxu0
  %v435 = vadd.f32 0.0, %v434
  %v436 = vpop.f32.mrb[0].mxu0
  %437 = vmatprep.mubr.bf16.mxu0 0
  %438 = vmatmul.mubr.bf16.gmra.mrb[0].mxu0 %v130
  %v439 = vpop.f32.mrb[0].mxu0
  %v440 = vadd.f32 0.0, %v439
  %v441 = vpop.f32.mrb[0].mxu0
  %v442 = vpop.f32.mrb[0].mxu0
  %v443 = vadd.f32 0.0, %v442
  %v444 = vpop.f32.mrb[0].mxu0
  %445 = vmatprep.mubr.bf16.mxu0 0
  %446 = vmatmul.mubr.bf16.gmra.mrb[0].mxu0 %v133
  %v447 = vpop.f32.mrb[0].mxu0
  %v448 = vadd.f32 0.0, %v447
  %v449 = vpop.f32.mrb[0].mxu0
  %v450 = vpop.f32.mrb[0].mxu0
  %v451 = vadd.f32 0.0, %v450
  %v452 = vpop.f32.mrb[0].mxu0
  %453 = vmatprep.mubr.bf16.mxu0 0
  %454 = vmatmul.mubr.bf16.gmra.mrb[0].mxu0 %v136
  %v455 = vpop.f32.mrb[0].mxu0
  %v456 = vadd.f32 0.0, %v455
  %v457 = vpop.f32.mrb[0].mxu0
  %v458 = vpop.f32.mrb[0].mxu0
  %v459 = vadd.f32 0.0, %v458
  %v460 = vpop.f32.mrb[0].mxu0
  %461 = vmatprep.mubr.bf16.mxu0 0
  %462 = vmatmul.mubr.bf16.gmra.mrb[0].mxu0 %v139
  %v463 = vpop.f32.mrb[0].mxu0
  %v464 = vadd.f32 0.0, %v463
  %v465 = vpop.f32.mrb[0].mxu0
  %v466 = vpop.f32.mrb[0].mxu0
  %v467 = vadd.f32 0.0, %v466
  %v468 = vpop.f32.mrb[0].mxu0
  %469 = vmatprep.mubr.bf16.mxu0 0
  %470 = vmatmul.mubr.bf16.gmra.mrb[0].mxu0 %v142
  %v471 = vpop.f32.mrb[0].mxu0
  %v472 = vadd.f32 0.0, %v471
  %v473 = vpop.f32.mrb[0].mxu0
  %v474 = vpop.f32.mrb[0].mxu0
  %v475 = vadd.f32 0.0, %v474
  %v476 = vpop.f32.mrb[0].mxu0
  %477 = vmatprep.mubr.bf16.mxu0 0
  %478 = vmatmul.mubr.bf16.gmra.mrb[0].mxu0 %v145
  %v479 = vpop.f32.mrb[0].mxu0
  %v480 = vadd.f32 0.0, %v479
  %v481 = vpop.f32.mrb[0].mxu0
  %v482 = vpop.f32.mrb[0].mxu0
  %v483 = vadd.f32 0.0, %v482
  %v484 = vpop.f32.mrb[0].mxu0
  %485 = vmatprep.mubr.bf16.mxu0 0
  %486 = vmatmul.mubr.bf16.gmra.mrb[0].mxu0 %v148
  %v487 = vpop.f32.mrb[0].mxu0
  %v488 = vadd.f32 0.0, %v487
  %v489 = vpop.f32.mrb[0].mxu0
  %v490 = vpop.f32.mrb[0].mxu0
  %v491 = vadd.f32 0.0, %v490
  %v492 = vpop.f32.mrb[0].mxu0
  %493 = vmatprep.mubr.bf16.mxu0 0
  %494 = vmatmul.mubr.bf16.gmra.mrb[0].mxu0 %v151
  %v495 = vpop.f32.mrb[0].mxu0
  %v496 = vadd.f32 0.0, %v495
  %v497 = vpop.f32.mrb[0].mxu0
  %v498 = vpop.f32.mrb[0].mxu0
  %v499 = vadd.f32 0.0, %v498
  %v500 = vpop.f32.mrb[0].mxu0
  %501 = vmatprep.mubr.bf16.mxu0 0
  %502 = vmatmul.mubr.bf16.gmra.mrb[0].mxu0 %v154
  %v503 = vpop.f32.mrb[0].mxu0
  %v504 = vadd.f32 0.0, %v503
  %v505 = vpop.f32.mrb[0].mxu0
  %v506 = vpop.f32.mrb[0].mxu0
  %v507 = vadd.f32 0.0, %v506
  %v508 = vpop.f32.mrb[0].mxu0
  %509 = vdwg.mxu0
  %v512 = vunpack.c.l.b16 %v85
  %v513 = vunpack.c.l.b16 %v86
  %v514 = vpack.c.b16 %v513, %v512
  %516 = vmatprep.subr.bf16.mxu0 0
  %517 = vmatpush1.bf16.msra.mxu0 %v514
  %518 = vmatprep.subr.bf16.mxu0 0
  %519 = vmatpush1.bf16.msra.mxu0 0
  %520 = vmatprep.subr.bf16.mxu0 0
  %521 = vmatpush1.bf16.msra.mxu0 0
  %522 = vmatprep.subr.bf16.mxu0 0
  %523 = vmatpush1.bf16.msra.mxu0 0
  %524 = vmatprep.subr.bf16.mxu0 0
  %525 = vmatpush1.bf16.msra.mxu0 0
  %526 = vmatprep.subr.bf16.mxu0 0
  %527 = vmatpush1.bf16.msra.mxu0 0
  %528 = vmatprep.subr.bf16.mxu0 0
  %529 = vmatpush1.bf16.msra.mxu0 0
  %530 = vmatprep.subr.bf16.mxu0 0
  %531 = vmatpush1.bf16.msra.mxu0 0
  %532 = vmatprep.subr.bf16.mxu0 0
  %533 = vmatpush1.bf16.msra.mxu0 0
  %534 = vmatprep.subr.bf16.mxu0 0
  %535 = vmatpush1.bf16.msra.mxu0 0
  %536 = vmatprep.subr.bf16.mxu0 0
  %537 = vmatpush1.bf16.msra.mxu0 0
  %538 = vmatprep.subr.bf16.mxu0 0
  %539 = vmatpush1.bf16.msra.mxu0 0
  %540 = vmatprep.subr.bf16.mxu0 0
  %541 = vmatpush1.bf16.msra.mxu0 0
  %542 = vmatprep.subr.bf16.mxu0 0
  %543 = vmatpush1.bf16.msra.mxu0 0
  %544 = vmatprep.subr.bf16.mxu0 0
  %545 = vmatpush1.bf16.msra.mxu0 0
  %546 = vmatprep.subr.bf16.mxu0 0
  %547 = vmatpush1.bf16.msra.mxu0 0
  %548 = vmatprep.mubr.bf16.mxu0 0
  %549 = vmatmul.mubr.bf16.gmra.mrb[0].mxu0 %v109
  %v550 = vpop.f32.mrb[0].mxu0
  %v551 = vadd.f32 %v78, %v550
  %v552 = vpop.f32.mrb[0].mxu0
  %v553 = vpop.f32.mrb[0].mxu0
  %v554 = vadd.f32 %v78, %v553
  %v555 = vpop.f32.mrb[0].mxu0
  %556 = vmatprep.mubr.bf16.mxu0 0
  %557 = vmatmul.mubr.bf16.gmra.mrb[0].mxu0 %v112
  %v558 = vpop.f32.mrb[0].mxu0
  %v559 = vadd.f32 %v78, %v558
  %v560 = vpop.f32.mrb[0].mxu0
  %v561 = vpop.f32.mrb[0].mxu0
  %v562 = vadd.f32 %v78, %v561
  %v563 = vpop.f32.mrb[0].mxu0
  %564 = vmatprep.mubr.bf16.mxu0 0
  %565 = vmatmul.mubr.bf16.gmra.mrb[0].mxu0 %v115
  %v566 = vpop.f32.mrb[0].mxu0
  %v567 = vadd.f32 %v78, %v566
  %v568 = vpop.f32.mrb[0].mxu0
  %v569 = vpop.f32.mrb[0].mxu0
  %v570 = vadd.f32 %v78, %v569
  %v571 = vpop.f32.mrb[0].mxu0
  %572 = vmatprep.mubr.bf16.mxu0 0
  %573 = vmatmul.mubr.bf16.gmra.mrb[0].mxu0 %v118
  %v574 = vpop.f32.mrb[0].mxu0
  %v575 = vadd.f32 %v78, %v574
  %v576 = vpop.f32.mrb[0].mxu0
  %v577 = vpop.f32.mrb[0].mxu0
  %v578 = vadd.f32 %v78, %v577
  %v579 = vpop.f32.mrb[0].mxu0
  %580 = vmatprep.mubr.bf16.mxu0 0
  %581 = vmatmul.mubr.bf16.gmra.mrb[0].mxu0 %v121
  %v582 = vpop.f32.mrb[0].mxu0
  %v583 = vadd.f32 %v78, %v582
  %v584 = vpop.f32.mrb[0].mxu0
  %v585 = vpop.f32.mrb[0].mxu0
  %v586 = vadd.f32 %v78, %v585
  %v587 = vpop.f32.mrb[0].mxu0
  %588 = vmatprep.mubr.bf16.mxu0 0
  %589 = vmatmul.mubr.bf16.gmra.mrb[0].mxu0 %v124
  %v590 = vpop.f32.mrb[0].mxu0
  %v591 = vadd.f32 %v78, %v590
  %v592 = vpop.f32.mrb[0].mxu0
  %v593 = vpop.f32.mrb[0].mxu0
  %v594 = vadd.f32 %v78, %v593
  %v595 = vpop.f32.mrb[0].mxu0
  %596 = vmatprep.mubr.bf16.mxu0 0
  %597 = vmatmul.mubr.bf16.gmra.mrb[0].mxu0 %v127
  %v598 = vpop.f32.mrb[0].mxu0
  %v599 = vadd.f32 %v78, %v598
  %v600 = vpop.f32.mrb[0].mxu0
  %v601 = vpop.f32.mrb[0].mxu0
  %v602 = vadd.f32 %v78, %v601
  %v603 = vpop.f32.mrb[0].mxu0
  %604 = vmatprep.mubr.bf16.mxu0 0
  %605 = vmatmul.mubr.bf16.gmra.mrb[0].mxu0 %v130
  %v606 = vpop.f32.mrb[0].mxu0
  %v607 = vadd.f32 %v78, %v606
  %v608 = vpop.f32.mrb[0].mxu0
  %v609 = vpop.f32.mrb[0].mxu0
  %v610 = vadd.f32 %v78, %v609
  %v611 = vpop.f32.mrb[0].mxu0
  %612 = vmatprep.mubr.bf16.mxu0 0
  %613 = vmatmul.mubr.bf16.gmra.mrb[0].mxu0 %v133
  %v614 = vpop.f32.mrb[0].mxu0
  %v615 = vadd.f32 %v82, %v614
  %v616 = vpop.f32.mrb[0].mxu0
  %v617 = vpop.f32.mrb[0].mxu0
  %v618 = vadd.f32 %v82, %v617
  %v619 = vpop.f32.mrb[0].mxu0
  %620 = vmatprep.mubr.bf16.mxu0 0
  %621 = vmatmul.mubr.bf16.gmra.mrb[0].mxu0 %v136
  %v622 = vpop.f32.mrb[0].mxu0
  %v623 = vadd.f32 %v82, %v622
  %v624 = vpop.f32.mrb[0].mxu0
  %v625 = vpop.f32.mrb[0].mxu0
  %v626 = vadd.f32 %v82, %v625
  %v627 = vpop.f32.mrb[0].mxu0
  %628 = vmatprep.mubr.bf16.mxu0 0
  %629 = vmatmul.mubr.bf16.gmra.mrb[0].mxu0 %v139
  %v630 = vpop.f32.mrb[0].mxu0
  %v631 = vadd.f32 %v82, %v630
  %v632 = vpop.f32.mrb[0].mxu0
  %v633 = vpop.f32.mrb[0].mxu0
  %v634 = vadd.f32 %v82, %v633
  %v635 = vpop.f32.mrb[0].mxu0
  %636 = vmatprep.mubr.bf16.mxu0 0
  %637 = vmatmul.mubr.bf16.gmra.mrb[0].mxu0 %v142
  %v638 = vpop.f32.mrb[0].mxu0
  %v639 = vadd.f32 %v82, %v638
  %v640 = vpop.f32.mrb[0].mxu0
  %v641 = vpop.f32.mrb[0].mxu0
  %v642 = vadd.f32 %v82, %v641
  %v643 = vpop.f32.mrb[0].mxu0
  %644 = vmatprep.mubr.bf16.mxu0 0
  %645 = vmatmul.mubr.bf16.gmra.mrb[0].mxu0 %v145
  %v646 = vpop.f32.mrb[0].mxu0
  %v647 = vadd.f32 %v82, %v646
  %v648 = vpop.f32.mrb[0].mxu0
  %v649 = vpop.f32.mrb[0].mxu0
  %v650 = vadd.f32 %v82, %v649
  %v651 = vpop.f32.mrb[0].mxu0
  %652 = vmatprep.mubr.bf16.mxu0 0
  %653 = vmatmul.mubr.bf16.gmra.mrb[0].mxu0 %v148
  %v654 = vpop.f32.mrb[0].mxu0
  %v655 = vadd.f32 %v82, %v654
  %v656 = vpop.f32.mrb[0].mxu0
  %v657 = vpop.f32.mrb[0].mxu0
  %v658 = vadd.f32 %v82, %v657
  %v659 = vpop.f32.mrb[0].mxu0
  %660 = vmatprep.mubr.bf16.mxu0 0
  %661 = vmatmul.mubr.bf16.gmra.mrb[0].mxu0 %v151
  %v662 = vpop.f32.mrb[0].mxu0
  %v663 = vadd.f32 %v82, %v662
  %v664 = vpop.f32.mrb[0].mxu0
  %v665 = vpop.f32.mrb[0].mxu0
  %v666 = vadd.f32 %v82, %v665
  %v667 = vpop.f32.mrb[0].mxu0
  %668 = vmatprep.mubr.bf16.mxu0 0
  %669 = vmatmul.mubr.bf16.gmra.mrb[0].mxu0 %v154
  %v670 = vpop.f32.mrb[0].mxu0
  %v671 = vadd.f32 %v82, %v670
  %v672 = vpop.f32.mrb[0].mxu0
  %v673 = vpop.f32.mrb[0].mxu0
  %v674 = vadd.f32 %v82, %v673
  %v675 = vpop.f32.mrb[0].mxu0
  %676 = vdwg.mxu0
  %v677 = vmax.f32 %v551, 0.0
  %v678 = vmax.f32 %v554, 0.0
  %v679 = vmax.f32 %v559, 0.0
  %v680 = vmax.f32 %v562, 0.0
  %v681 = vmax.f32 %v567, 0.0
  %v682 = vmax.f32 %v570, 0.0
  %v683 = vmax.f32 %v575, 0.0
  %v684 = vmax.f32 %v578, 0.0
  %v685 = vmax.f32 %v583, 0.0
  %v686 = vmax.f32 %v586, 0.0
  %v687 = vmax.f32 %v591, 0.0
  %v688 = vmax.f32 %v594, 0.0
  %v689 = vmax.f32 %v599, 0.0
  %v690 = vmax.f32 %v602, 0.0
  %v691 = vmax.f32 %v607, 0.0
  %v692 = vmax.f32 %v610, 0.0
  %v693 = vmax.f32 %v615, 0.0
  %v694 = vmax.f32 %v618, 0.0
  %v695 = vmax.f32 %v623, 0.0
  %v696 = vmax.f32 %v626, 0.0
  %v697 = vmax.f32 %v631, 0.0
  %v698 = vmax.f32 %v634, 0.0
  %v699 = vmax.f32 %v639, 0.0
  %v700 = vmax.f32 %v642, 0.0
  %v701 = vmax.f32 %v647, 0.0
  %v702 = vmax.f32 %v650, 0.0
  %v703 = vmax.f32 %v655, 0.0
  %v704 = vmax.f32 %v658, 0.0
  %v705 = vmax.f32 %v663, 0.0
  %v706 = vmax.f32 %v666, 0.0
  %v707 = vmax.f32 %v671, 0.0
  %v708 = vmax.f32 %v674, 0.0
  %v709 = vpack.c.bf16 %v678, %v677
  %v710 = vpack.c.bf16 %v680, %v679
  %v711 = vpack.c.bf16 %v682, %v681
  %v712 = vpack.c.bf16 %v684, %v683
  %v713 = vpack.c.bf16 %v686, %v685
  %v714 = vpack.c.bf16 %v688, %v687
  %v715 = vpack.c.bf16 %v690, %v689
  %v716 = vpack.c.bf16 %v692, %v691
  %v717 = vpack.c.bf16 %v694, %v693
  %v718 = vpack.c.bf16 %v696, %v695
  %v719 = vpack.c.bf16 %v698, %v697
  %v720 = vpack.c.bf16 %v700, %v699
  %v721 = vpack.c.bf16 %v702, %v701
  %v722 = vpack.c.bf16 %v704, %v703
  %v723 = vpack.c.bf16 %v706, %v705
  %v724 = vpack.c.bf16 %v708, %v707
  %v725 = vld [vmem:[%s2 + $0x8] sm:$0xf]
  %v726 = vld [vmem:[%s2 + $0xc] sm:$0xf]
  %v727 = vld [vmem:[%s2 + $0x10] sm:$0xf]
  %v728 = vld [vmem:[%s2 + $0x14] sm:$0xf]
  %v729 = vld [vmem:[%s2 + $0x18] sm:$0xf]
  %v730 = vld [vmem:[%s2 + $0x1c] sm:$0xf]
  %v731 = vld [vmem:[%s2 + $0x20] sm:$0xf]
  %v732 = vld [vmem:[%s2 + $0x24] sm:$0xf]
  %v733 = vld [vmem:[%s5] ss:$0 sm:$0xff]
  %v742 = vunpack.c.l.b16 %v725
  %v743 = vunpack.c.l.b16 %v726
  %v744 = vunpack.c.l.b16 %v727
  %v745 = vunpack.c.l.b16 %v728
  %v746 = vunpack.c.l.b16 %v729
  %v747 = vunpack.c.l.b16 %v730
  %v748 = vunpack.c.l.b16 %v731
  %v749 = vunpack.c.l.b16 %v732
  %v750 = vpack.c.b16 %v743, %v742
  %v751 = vpack.c.b16 %v745, %v744
  %v752 = vpack.c.b16 %v747, %v746
  %v753 = vpack.c.b16 %v749, %v748
  %vm758 = vcmask 523264
  %v760 = vsel %vm758, %v709, 0
  %v763 = vsel %vm758, %v710, 0
  %v766 = vsel %vm758, %v711, 0
  %v769 = vsel %vm758, %v712, 0
  %v772 = vsel %vm758, %v713, 0
  %v775 = vsel %vm758, %v714, 0
  %v778 = vsel %vm758, %v715, 0
  %v781 = vsel %vm758, %v716, 0
  %v784 = vsel %vm758, %v717, 0
  %v787 = vsel %vm758, %v718, 0
  %v790 = vsel %vm758, %v719, 0
  %v793 = vsel %vm758, %v720, 0
  %v796 = vsel %vm758, %v721, 0
  %v799 = vsel %vm758, %v722, 0
  %v802 = vsel %vm758, %v723, 0
  %v805 = vsel %vm758, %v724, 0
  %807 = vmatprep.subr.bf16.mxu0 0
  %808 = vmatpush1.bf16.msra.mxu0 %v750
  %809 = vmatprep.subr.bf16.mxu0 0
  %810 = vmatpush1.bf16.msra.mxu0 %v751
  %811 = vmatprep.subr.bf16.mxu0 0
  %812 = vmatpush1.bf16.msra.mxu0 %v752
  %813 = vmatprep.subr.bf16.mxu0 0
  %814 = vmatpush1.bf16.msra.mxu0 %v753
  %815 = vmatprep.subr.bf16.mxu0 0
  %816 = vmatpush1.bf16.msra.mxu0 0
  %817 = vmatprep.subr.bf16.mxu0 0
  %818 = vmatpush1.bf16.msra.mxu0 0
  %819 = vmatprep.subr.bf16.mxu0 0
  %820 = vmatpush1.bf16.msra.mxu0 0
  %821 = vmatprep.subr.bf16.mxu0 0
  %822 = vmatpush1.bf16.msra.mxu0 0
  %823 = vmatprep.subr.bf16.mxu0 0
  %824 = vmatpush1.bf16.msra.mxu0 0
  %825 = vmatprep.subr.bf16.mxu0 0
  %826 = vmatpush1.bf16.msra.mxu0 0
  %827 = vmatprep.subr.bf16.mxu0 0
  %828 = vmatpush1.bf16.msra.mxu0 0
  %829 = vmatprep.subr.bf16.mxu0 0
  %830 = vmatpush1.bf16.msra.mxu0 0
  %831 = vmatprep.subr.bf16.mxu0 0
  %832 = vmatpush1.bf16.msra.mxu0 0
  %833 = vmatprep.subr.bf16.mxu0 0
  %834 = vmatpush1.bf16.msra.mxu0 0
  %835 = vmatprep.subr.bf16.mxu0 0
  %836 = vmatpush1.bf16.msra.mxu0 0
  %837 = vmatprep.subr.bf16.mxu0 0
  %838 = vmatpush1.bf16.msra.mxu0 0
  %839 = vmatprep.mubr.bf16.mxu0 0
  %840 = vmatmul.mubr.bf16.gmra.mrb[0].mxu0 %v760
  %v841 = vpop.f32.mrb[0].mxu0
  %v842 = vadd.f32 %v733, %v841
  %v843 = vpop.f32.mrb[0].mxu0
  %v844 = vpop.f32.mrb[0].mxu0
  %v845 = vadd.f32 %v733, %v844
  %v846 = vpop.f32.mrb[0].mxu0
  %847 = vmatprep.mubr.bf16.mxu0 0
  %848 = vmatmul.mubr.bf16.gmra.mrb[0].mxu0 %v763
  %v849 = vpop.f32.mrb[0].mxu0
  %v850 = vadd.f32 %v733, %v849
  %v851 = vpop.f32.mrb[0].mxu0
  %v852 = vpop.f32.mrb[0].mxu0
  %v853 = vadd.f32 %v733, %v852
  %v854 = vpop.f32.mrb[0].mxu0
  %855 = vmatprep.mubr.bf16.mxu0 0
  %856 = vmatmul.mubr.bf16.gmra.mrb[0].mxu0 %v766
  %v857 = vpop.f32.mrb[0].mxu0
  %v858 = vadd.f32 %v733, %v857
  %v859 = vpop.f32.mrb[0].mxu0
  %v860 = vpop.f32.mrb[0].mxu0
  %v861 = vadd.f32 %v733, %v860
  %v862 = vpop.f32.mrb[0].mxu0
  %863 = vmatprep.mubr.bf16.mxu0 0
  %864 = vmatmul.mubr.bf16.gmra.mrb[0].mxu0 %v769
  %v865 = vpop.f32.mrb[0].mxu0
  %v866 = vadd.f32 %v733, %v865
  %v867 = vpop.f32.mrb[0].mxu0
  %v868 = vpop.f32.mrb[0].mxu0
  %v869 = vadd.f32 %v733, %v868
  %v870 = vpop.f32.mrb[0].mxu0
  %871 = vmatprep.mubr.bf16.mxu0 0
  %872 = vmatmul.mubr.bf16.gmra.mrb[0].mxu0 %v772
  %v873 = vpop.f32.mrb[0].mxu0
  %v874 = vadd.f32 %v733, %v873
  %v875 = vpop.f32.mrb[0].mxu0
  %v876 = vpop.f32.mrb[0].mxu0
  %v877 = vadd.f32 %v733, %v876
  %v878 = vpop.f32.mrb[0].mxu0
  %879 = vmatprep.mubr.bf16.mxu0 0
  %880 = vmatmul.mubr.bf16.gmra.mrb[0].mxu0 %v775
  %v881 = vpop.f32.mrb[0].mxu0
  %v882 = vadd.f32 %v733, %v881
  %v883 = vpop.f32.mrb[0].mxu0
  %v884 = vpop.f32.mrb[0].mxu0
  %v885 = vadd.f32 %v733, %v884
  %v886 = vpop.f32.mrb[0].mxu0
  %887 = vmatprep.mubr.bf16.mxu0 0
  %888 = vmatmul.mubr.bf16.gmra.mrb[0].mxu0 %v778
  %v889 = vpop.f32.mrb[0].mxu0
  %v890 = vadd.f32 %v733, %v889
  %v891 = vpop.f32.mrb[0].mxu0
  %v892 = vpop.f32.mrb[0].mxu0
  %v893 = vadd.f32 %v733, %v892
  %v894 = vpop.f32.mrb[0].mxu0
  %895 = vmatprep.mubr.bf16.mxu0 0
  %896 = vmatmul.mubr.bf16.gmra.mrb[0].mxu0 %v781
  %v897 = vpop.f32.mrb[0].mxu0
  %v898 = vadd.f32 %v733, %v897
  %v899 = vpop.f32.mrb[0].mxu0
  %v900 = vpop.f32.mrb[0].mxu0
  %v901 = vadd.f32 %v733, %v900
  %v902 = vpop.f32.mrb[0].mxu0
  %903 = vmatprep.mubr.bf16.mxu0 0
  %904 = vmatmul.mubr.bf16.gmra.mrb[0].mxu0 %v784
  %v905 = vpop.f32.mrb[0].mxu0
  %v906 = vadd.f32 %v733, %v905
  %v907 = vpop.f32.mrb[0].mxu0
  %v908 = vpop.f32.mrb[0].mxu0
  %v909 = vadd.f32 %v733, %v908
  %v910 = vpop.f32.mrb[0].mxu0
  %911 = vmatprep.mubr.bf16.mxu0 0
  %912 = vmatmul.mubr.bf16.gmra.mrb[0].mxu0 %v787
  %v913 = vpop.f32.mrb[0].mxu0
  %v914 = vadd.f32 %v733, %v913
  %v915 = vpop.f32.mrb[0].mxu0
  %v916 = vpop.f32.mrb[0].mxu0
  %v917 = vadd.f32 %v733, %v916
  %v918 = vpop.f32.mrb[0].mxu0
  %919 = vmatprep.mubr.bf16.mxu0 0
  %920 = vmatmul.mubr.bf16.gmra.mrb[0].mxu0 %v790
  %v921 = vpop.f32.mrb[0].mxu0
  %v922 = vadd.f32 %v733, %v921
  %v923 = vpop.f32.mrb[0].mxu0
  %v924 = vpop.f32.mrb[0].mxu0
  %v925 = vadd.f32 %v733, %v924
  %v926 = vpop.f32.mrb[0].mxu0
  %927 = vmatprep.mubr.bf16.mxu0 0
  %928 = vmatmul.mubr.bf16.gmra.mrb[0].mxu0 %v793
  %v929 = vpop.f32.mrb[0].mxu0
  %v930 = vadd.f32 %v733, %v929
  %v931 = vpop.f32.mrb[0].mxu0
  %v932 = vpop.f32.mrb[0].mxu0
  %v933 = vadd.f32 %v733, %v932
  %v934 = vpop.f32.mrb[0].mxu0
  %935 = vmatprep.mubr.bf16.mxu0 0
  %936 = vmatmul.mubr.bf16.gmra.mrb[0].mxu0 %v796
  %v937 = vpop.f32.mrb[0].mxu0
  %v938 = vadd.f32 %v733, %v937
  %v939 = vpop.f32.mrb[0].mxu0
  %v940 = vpop.f32.mrb[0].mxu0
  %v941 = vadd.f32 %v733, %v940
  %v942 = vpop.f32.mrb[0].mxu0
  %943 = vmatprep.mubr.bf16.mxu0 0
  %944 = vmatmul.mubr.bf16.gmra.mrb[0].mxu0 %v799
  %v945 = vpop.f32.mrb[0].mxu0
  %v946 = vadd.f32 %v733, %v945
  %v947 = vpop.f32.mrb[0].mxu0
  %v948 = vpop.f32.mrb[0].mxu0
  %v949 = vadd.f32 %v733, %v948
  %v950 = vpop.f32.mrb[0].mxu0
  %951 = vmatprep.mubr.bf16.mxu0 0
  %952 = vmatmul.mubr.bf16.gmra.mrb[0].mxu0 %v802
  %v953 = vpop.f32.mrb[0].mxu0
  %v954 = vadd.f32 %v733, %v953
  %v955 = vpop.f32.mrb[0].mxu0
  %v956 = vpop.f32.mrb[0].mxu0
  %v957 = vadd.f32 %v733, %v956
  %v958 = vpop.f32.mrb[0].mxu0
  %959 = vmatprep.mubr.bf16.mxu0 0
  %960 = vmatmul.mubr.bf16.gmra.mrb[0].mxu0 %v805
  %v961 = vpop.f32.mrb[0].mxu0
  %v962 = vadd.f32 %v733, %v961
  %v963 = vpop.f32.mrb[0].mxu0
  %v964 = vpop.f32.mrb[0].mxu0
  %v965 = vadd.f32 %v733, %v964
  %v966 = vpop.f32.mrb[0].mxu0
  %967 = vdwg.mxu0
  %v968 = vmax.f32 %v842, 0.0
  %v969 = vmax.f32 %v845, 0.0
  %v970 = vmax.f32 %v850, 0.0
  %v971 = vmax.f32 %v853, 0.0
  %v972 = vmax.f32 %v858, 0.0
  %v973 = vmax.f32 %v861, 0.0
  %v974 = vmax.f32 %v866, 0.0
  %v975 = vmax.f32 %v869, 0.0
  %v976 = vmax.f32 %v874, 0.0
  %v977 = vmax.f32 %v877, 0.0
  %v978 = vmax.f32 %v882, 0.0
  %v979 = vmax.f32 %v885, 0.0
  %v980 = vmax.f32 %v890, 0.0
  %v981 = vmax.f32 %v893, 0.0
  %v982 = vmax.f32 %v898, 0.0
  %v983 = vmax.f32 %v901, 0.0
  %v984 = vmax.f32 %v906, 0.0
  %v985 = vmax.f32 %v909, 0.0
  %v986 = vmax.f32 %v914, 0.0
  %v987 = vmax.f32 %v917, 0.0
  %v988 = vmax.f32 %v922, 0.0
  %v989 = vmax.f32 %v925, 0.0
  %v990 = vmax.f32 %v930, 0.0
  %v991 = vmax.f32 %v933, 0.0
  %v992 = vmax.f32 %v938, 0.0
  %v993 = vmax.f32 %v941, 0.0
  %v994 = vmax.f32 %v946, 0.0
  %v995 = vmax.f32 %v949, 0.0
  %v996 = vmax.f32 %v954, 0.0
  %v997 = vmax.f32 %v957, 0.0
  %v998 = vmax.f32 %v962, 0.0
  %v999 = vmax.f32 %v965, 0.0
  %v1000 = vpack.c.bf16 %v969, %v968
  %v1001 = vpack.c.bf16 %v971, %v970
  %v1002 = vpack.c.bf16 %v973, %v972
  %v1003 = vpack.c.bf16 %v975, %v974
  %v1004 = vpack.c.bf16 %v977, %v976
  %v1005 = vpack.c.bf16 %v979, %v978
  %v1006 = vpack.c.bf16 %v981, %v980
  %v1007 = vpack.c.bf16 %v983, %v982
  %v1008 = vpack.c.bf16 %v985, %v984
  %v1009 = vpack.c.bf16 %v987, %v986
  %v1010 = vpack.c.bf16 %v989, %v988
  %v1011 = vpack.c.bf16 %v991, %v990
  %v1012 = vpack.c.bf16 %v993, %v992
  %v1013 = vpack.c.bf16 %v995, %v994
  %v1014 = vpack.c.bf16 %v997, %v996
  %v1015 = vpack.c.bf16 %v999, %v998
  %v1016 = vld [vmem:[%s2 + $0x28] sm:$0xf]
  %v1017 = vld [vmem:[%s2 + $0x2c] sm:$0xf]
  %v1018 = vld [vmem:[%s2 + $0x30] sm:$0xf]
  %v1019 = vld [vmem:[%s2 + $0x34] sm:$0xf]
  %v1020 = vld [vmem:[%s2 + $0x38] sm:$0xf]
  %v1021 = vld [vmem:[%s2 + $0x3c] sm:$0xf]
  %v1022 = vld [vmem:[%s2 + $0x40] sm:$0xf]
  %v1023 = vld [vmem:[%s2 + $0x44] sm:$0xf]
  %v1024 = vld [vmem:[%s5 + $0x1] ss:$0 sm:$0xff]
  %v1033 = vunpack.c.l.b16 %v1016
  %v1034 = vunpack.c.l.b16 %v1017
  %v1035 = vunpack.c.l.b16 %v1018
  %v1036 = vunpack.c.l.b16 %v1019
  %v1037 = vunpack.c.l.b16 %v1020
  %v1038 = vunpack.c.l.b16 %v1021
  %v1039 = vunpack.c.l.b16 %v1022
  %v1040 = vunpack.c.l.b16 %v1023
  %v1041 = vpack.c.b16 %v1034, %v1033
  %v1042 = vpack.c.b16 %v1036, %v1035
  %v1043 = vpack.c.b16 %v1038, %v1037
  %v1044 = vpack.c.b16 %v1040, %v1039
  %v1050 = vsel %vm758, %v1000, 0
  %v1053 = vsel %vm758, %v1001, 0
  %v1056 = vsel %vm758, %v1002, 0
  %v1059 = vsel %vm758, %v1003, 0
  %v1062 = vsel %vm758, %v1004, 0
  %v1065 = vsel %vm758, %v1005, 0
  %v1068 = vsel %vm758, %v1006, 0
  %v1071 = vsel %vm758, %v1007, 0
  %v1074 = vsel %vm758, %v1008, 0
  %v1077 = vsel %vm758, %v1009, 0
  %v1080 = vsel %vm758, %v1010, 0
  %v1083 = vsel %vm758, %v1011, 0
  %v1086 = vsel %vm758, %v1012, 0
  %v1089 = vsel %vm758, %v1013, 0
  %v1092 = vsel %vm758, %v1014, 0
  %v1095 = vsel %vm758, %v1015, 0
  %1097 = vmatprep.subr.bf16.mxu0 0
  %1098 = vmatpush1.bf16.msra.mxu0 %v1041
  %1099 = vmatprep.subr.bf16.mxu0 0
  %1100 = vmatpush1.bf16.msra.mxu0 %v1042
  %1101 = vmatprep.subr.bf16.mxu0 0
  %1102 = vmatpush1.bf16.msra.mxu0 %v1043
  %1103 = vmatprep.subr.bf16.mxu0 0
  %1104 = vmatpush1.bf16.msra.mxu0 %v1044
  %1105 = vmatprep.subr.bf16.mxu0 0
  %1106 = vmatpush1.bf16.msra.mxu0 0
  %1107 = vmatprep.subr.bf16.mxu0 0
  %1108 = vmatpush1.bf16.msra.mxu0 0
  %1109 = vmatprep.subr.bf16.mxu0 0
  %1110 = vmatpush1.bf16.msra.mxu0 0
  %1111 = vmatprep.subr.bf16.mxu0 0
  %1112 = vmatpush1.bf16.msra.mxu0 0
  %1113 = vmatprep.subr.bf16.mxu0 0
  %1114 = vmatpush1.bf16.msra.mxu0 0
  %1115 = vmatprep.subr.bf16.mxu0 0
  %1116 = vmatpush1.bf16.msra.mxu0 0
  %1117 = vmatprep.subr.bf16.mxu0 0
  %1118 = vmatpush1.bf16.msra.mxu0 0
  %1119 = vmatprep.subr.bf16.mxu0 0
  %1120 = vmatpush1.bf16.msra.mxu0 0
  %1121 = vmatprep.subr.bf16.mxu0 0
  %1122 = vmatpush1.bf16.msra.mxu0 0
  %1123 = vmatprep.subr.bf16.mxu0 0
  %1124 = vmatpush1.bf16.msra.mxu0 0
  %1125 = vmatprep.subr.bf16.mxu0 0
  %1126 = vmatpush1.bf16.msra.mxu0 0
  %1127 = vmatprep.subr.bf16.mxu0 0
  %1128 = vmatpush1.bf16.msra.mxu0 0
  %1129 = vmatprep.mubr.bf16.mxu0 0
  %1130 = vmatmul.mubr.bf16.gmra.mrb[0].mxu0 %v1050
  %v1131 = vpop.f32.mrb[0].mxu0
  %v1132 = vadd.f32 %v1024, %v1131
  %v1133 = vpop.f32.mrb[0].mxu0
  %v1134 = vpop.f32.mrb[0].mxu0
  %v1135 = vadd.f32 %v1024, %v1134
  %v1136 = vpop.f32.mrb[0].mxu0
  %1137 = vmatprep.mubr.bf16.mxu0 0
  %1138 = vmatmul.mubr.bf16.gmra.mrb[0].mxu0 %v1053
  %v1139 = vpop.f32.mrb[0].mxu0
  %v1140 = vadd.f32 %v1024, %v1139
  %v1141 = vpop.f32.mrb[0].mxu0
  %v1142 = vpop.f32.mrb[0].mxu0
  %v1143 = vadd.f32 %v1024, %v1142
  %v1144 = vpop.f32.mrb[0].mxu0
  %1145 = vmatprep.mubr.bf16.mxu0 0
  %1146 = vmatmul.mubr.bf16.gmra.mrb[0].mxu0 %v1056
  %v1147 = vpop.f32.mrb[0].mxu0
  %v1148 = vadd.f32 %v1024, %v1147
  %v1149 = vpop.f32.mrb[0].mxu0
  %v1150 = vpop.f32.mrb[0].mxu0
  %v1151 = vadd.f32 %v1024, %v1150
  %v1152 = vpop.f32.mrb[0].mxu0
  %1153 = vmatprep.mubr.bf16.mxu0 0
  %1154 = vmatmul.mubr.bf16.gmra.mrb[0].mxu0 %v1059
  %v1155 = vpop.f32.mrb[0].mxu0
  %v1156 = vadd.f32 %v1024, %v1155
  %v1157 = vpop.f32.mrb[0].mxu0
  %v1158 = vpop.f32.mrb[0].mxu0
  %v1159 = vadd.f32 %v1024, %v1158
  %v1160 = vpop.f32.mrb[0].mxu0
  %1161 = vmatprep.mubr.bf16.mxu0 0
  %1162 = vmatmul.mubr.bf16.gmra.mrb[0].mxu0 %v1062
  %v1163 = vpop.f32.mrb[0].mxu0
  %v1164 = vadd.f32 %v1024, %v1163
  %v1165 = vpop.f32.mrb[0].mxu0
  %v1166 = vpop.f32.mrb[0].mxu0
  %v1167 = vadd.f32 %v1024, %v1166
  %v1168 = vpop.f32.mrb[0].mxu0
  %1169 = vmatprep.mubr.bf16.mxu0 0
  %1170 = vmatmul.mubr.bf16.gmra.mrb[0].mxu0 %v1065
  %v1171 = vpop.f32.mrb[0].mxu0
  %v1172 = vadd.f32 %v1024, %v1171
  %v1173 = vpop.f32.mrb[0].mxu0
  %v1174 = vpop.f32.mrb[0].mxu0
  %v1175 = vadd.f32 %v1024, %v1174
  %v1176 = vpop.f32.mrb[0].mxu0
  %1177 = vmatprep.mubr.bf16.mxu0 0
  %1178 = vmatmul.mubr.bf16.gmra.mrb[0].mxu0 %v1068
  %v1179 = vpop.f32.mrb[0].mxu0
  %v1180 = vadd.f32 %v1024, %v1179
  %v1181 = vpop.f32.mrb[0].mxu0
  %v1182 = vpop.f32.mrb[0].mxu0
  %v1183 = vadd.f32 %v1024, %v1182
  %v1184 = vpop.f32.mrb[0].mxu0
  %1185 = vmatprep.mubr.bf16.mxu0 0
  %1186 = vmatmul.mubr.bf16.gmra.mrb[0].mxu0 %v1071
  %v1187 = vpop.f32.mrb[0].mxu0
  %v1188 = vadd.f32 %v1024, %v1187
  %v1189 = vpop.f32.mrb[0].mxu0
  %v1190 = vpop.f32.mrb[0].mxu0
  %v1191 = vadd.f32 %v1024, %v1190
  %v1192 = vpop.f32.mrb[0].mxu0
  %1193 = vmatprep.mubr.bf16.mxu0 0
  %1194 = vmatmul.mubr.bf16.gmra.mrb[0].mxu0 %v1074
  %v1195 = vpop.f32.mrb[0].mxu0
  %v1196 = vadd.f32 %v1024, %v1195
  %v1197 = vpop.f32.mrb[0].mxu0
  %v1198 = vpop.f32.mrb[0].mxu0
  %v1199 = vadd.f32 %v1024, %v1198
  %v1200 = vpop.f32.mrb[0].mxu0
  %1201 = vmatprep.mubr.bf16.mxu0 0
  %1202 = vmatmul.mubr.bf16.gmra.mrb[0].mxu0 %v1077
  %v1203 = vpop.f32.mrb[0].mxu0
  %v1204 = vadd.f32 %v1024, %v1203
  %v1205 = vpop.f32.mrb[0].mxu0
  %v1206 = vpop.f32.mrb[0].mxu0
  %v1207 = vadd.f32 %v1024, %v1206
  %v1208 = vpop.f32.mrb[0].mxu0
  %1209 = vmatprep.mubr.bf16.mxu0 0
  %1210 = vmatmul.mubr.bf16.gmra.mrb[0].mxu0 %v1080
  %v1211 = vpop.f32.mrb[0].mxu0
  %v1212 = vadd.f32 %v1024, %v1211
  %v1213 = vpop.f32.mrb[0].mxu0
  %v1214 = vpop.f32.mrb[0].mxu0
  %v1215 = vadd.f32 %v1024, %v1214
  %v1216 = vpop.f32.mrb[0].mxu0
  %1217 = vmatprep.mubr.bf16.mxu0 0
  %1218 = vmatmul.mubr.bf16.gmra.mrb[0].mxu0 %v1083
  %v1219 = vpop.f32.mrb[0].mxu0
  %v1220 = vadd.f32 %v1024, %v1219
  %v1221 = vpop.f32.mrb[0].mxu0
  %v1222 = vpop.f32.mrb[0].mxu0
  %v1223 = vadd.f32 %v1024, %v1222
  %v1224 = vpop.f32.mrb[0].mxu0
  %1225 = vmatprep.mubr.bf16.mxu0 0
  %1226 = vmatmul.mubr.bf16.gmra.mrb[0].mxu0 %v1086
  %v1227 = vpop.f32.mrb[0].mxu0
  %v1228 = vadd.f32 %v1024, %v1227
  %v1229 = vpop.f32.mrb[0].mxu0
  %v1230 = vpop.f32.mrb[0].mxu0
  %v1231 = vadd.f32 %v1024, %v1230
  %v1232 = vpop.f32.mrb[0].mxu0
  %1233 = vmatprep.mubr.bf16.mxu0 0
  %1234 = vmatmul.mubr.bf16.gmra.mrb[0].mxu0 %v1089
  %v1235 = vpop.f32.mrb[0].mxu0
  %v1236 = vadd.f32 %v1024, %v1235
  %v1237 = vpop.f32.mrb[0].mxu0
  %v1238 = vpop.f32.mrb[0].mxu0
  %v1239 = vadd.f32 %v1024, %v1238
  %v1240 = vpop.f32.mrb[0].mxu0
  %1241 = vmatprep.mubr.bf16.mxu0 0
  %1242 = vmatmul.mubr.bf16.gmra.mrb[0].mxu0 %v1092
  %v1243 = vpop.f32.mrb[0].mxu0
  %v1244 = vadd.f32 %v1024, %v1243
  %v1245 = vpop.f32.mrb[0].mxu0
  %v1246 = vpop.f32.mrb[0].mxu0
  %v1247 = vadd.f32 %v1024, %v1246
  %v1248 = vpop.f32.mrb[0].mxu0
  %1249 = vmatprep.mubr.bf16.mxu0 0
  %1250 = vmatmul.mubr.bf16.gmra.mrb[0].mxu0 %v1095
  %v1251 = vpop.f32.mrb[0].mxu0
  %v1252 = vadd.f32 %v1024, %v1251
  %v1253 = vpop.f32.mrb[0].mxu0
  %v1254 = vpop.f32.mrb[0].mxu0
  %v1255 = vadd.f32 %v1024, %v1254
  %v1256 = vpop.f32.mrb[0].mxu0
  %1257 = vdwg.mxu0
  %1258 = vst [vmem:[%s6] sm:$0xff] %v1132
  %1259 = vst [vmem:[%s6 + $0x8] sm:$0xff] %v1135
  %1260 = vst [vmem:[%s6 + $0x10] sm:$0xff] %v1140
  %1261 = vst [vmem:[%s6 + $0x18] sm:$0xff] %v1143
  %1262 = vst [vmem:[%s6 + $0x20] sm:$0xff] %v1148
  %1263 = vst [vmem:[%s6 + $0x28] sm:$0xff] %v1151
  %1264 = vst [vmem:[%s6 + $0x30] sm:$0xff] %v1156
  %1265 = vst [vmem:[%s6 + $0x38] sm:$0xff] %v1159
  %1266 = vst [vmem:[%s6 + $0x40] sm:$0xff] %v1164
  %1267 = vst [vmem:[%s6 + $0x48] sm:$0xff] %v1167
  %1268 = vst [vmem:[%s6 + $0x50] sm:$0xff] %v1172
  %1269 = vst [vmem:[%s6 + $0x58] sm:$0xff] %v1175
  %1270 = vst [vmem:[%s6 + $0x60] sm:$0xff] %v1180
  %1271 = vst [vmem:[%s6 + $0x68] sm:$0xff] %v1183
  %1272 = vst [vmem:[%s6 + $0x70] sm:$0xff] %v1188
  %1273 = vst [vmem:[%s6 + $0x78] sm:$0xff] %v1191
  %1274 = vst [vmem:[%s6 + $0x80] sm:$0xff] %v1196
  %1275 = vst [vmem:[%s6 + $0x88] sm:$0xff] %v1199
  %1276 = vst [vmem:[%s6 + $0x90] sm:$0xff] %v1204
  %1277 = vst [vmem:[%s6 + $0x98] sm:$0xff] %v1207
  %1278 = vst [vmem:[%s6 + $0xa0] sm:$0xff] %v1212
  %1279 = vst [vmem:[%s6 + $0xa8] sm:$0xff] %v1215
  %1280 = vst [vmem:[%s6 + $0xb0] sm:$0xff] %v1220
  %1281 = vst [vmem:[%s6 + $0xb8] sm:$0xff] %v1223
  %1282 = vst [vmem:[%s6 + $0xc0] sm:$0xff] %v1228
  %1283 = vst [vmem:[%s6 + $0xc8] sm:$0xff] %v1231
  %1284 = vst [vmem:[%s6 + $0xd0] sm:$0xff] %v1236
  %1285 = vst [vmem:[%s6 + $0xd8] sm:$0xff] %v1239
  %1286 = vst [vmem:[%s6 + $0xe0] sm:$0xff] %v1244
  %1287 = vst [vmem:[%s6 + $0xe8] sm:$0xff] %v1247
  %1288 = vst [vmem:[%s6 + $0xf0] sm:$0xff] %v1252
  %1289 = vst [vmem:[%s6 + $0xf8] sm:$0xff] %v1255
  %1290 = vrot.lane.b32.xlu0 %v78, 64
  %v1291 = vpop.permute.xlu0 %1290
  %1292 = vrot.lane.b32.xlu0 %v82, 64
  %v1293 = vpop.permute.xlu0 %1292
  %v1296 = vadd.f32 %v1132, %v1291
  %v1297 = vadd.f32 %v1135, %v1291
  %v1298 = vadd.f32 %v1140, %v1291
  %v1299 = vadd.f32 %v1143, %v1291
  %v1300 = vadd.f32 %v1148, %v1291
  %v1301 = vadd.f32 %v1151, %v1291
  %v1302 = vadd.f32 %v1156, %v1291
  %v1303 = vadd.f32 %v1159, %v1291
  %v1304 = vadd.f32 %v1164, %v1291
  %v1305 = vadd.f32 %v1167, %v1291
  %v1306 = vadd.f32 %v1172, %v1291
  %v1307 = vadd.f32 %v1175, %v1291
  %v1308 = vadd.f32 %v1180, %v1291
  %v1309 = vadd.f32 %v1183, %v1291
  %v1310 = vadd.f32 %v1188, %v1291
  %v1311 = vadd.f32 %v1191, %v1291
  %v1312 = vadd.f32 %v1196, %v1293
  %v1313 = vadd.f32 %v1199, %v1293
  %v1314 = vadd.f32 %v1204, %v1293
  %v1315 = vadd.f32 %v1207, %v1293
  %v1316 = vadd.f32 %v1212, %v1293
  %v1317 = vadd.f32 %v1215, %v1293
  %v1318 = vadd.f32 %v1220, %v1293
  %v1319 = vadd.f32 %v1223, %v1293
  %v1320 = vadd.f32 %v1228, %v1293
  %v1321 = vadd.f32 %v1231, %v1293
  %v1322 = vadd.f32 %v1236, %v1293
  %v1323 = vadd.f32 %v1239, %v1293
  %v1324 = vadd.f32 %v1244, %v1293
  %v1325 = vadd.f32 %v1247, %v1293
  %v1326 = vadd.f32 %v1252, %v1293
  %v1327 = vadd.f32 %v1255, %v1293
  %v1328 = vmax.f32 %v1296, 0.0
  %v1329 = vmax.f32 %v1297, 0.0
  %v1330 = vmax.f32 %v1298, 0.0
  %v1331 = vmax.f32 %v1299, 0.0
  %v1332 = vmax.f32 %v1300, 0.0
  %v1333 = vmax.f32 %v1301, 0.0
  %v1334 = vmax.f32 %v1302, 0.0
  %v1335 = vmax.f32 %v1303, 0.0
  %v1336 = vmax.f32 %v1304, 0.0
  %v1337 = vmax.f32 %v1305, 0.0
  %v1338 = vmax.f32 %v1306, 0.0
  %v1339 = vmax.f32 %v1307, 0.0
  %v1340 = vmax.f32 %v1308, 0.0
  %v1341 = vmax.f32 %v1309, 0.0
  %v1342 = vmax.f32 %v1310, 0.0
  %v1343 = vmax.f32 %v1311, 0.0
  %v1344 = vmax.f32 %v1312, 0.0
  %v1345 = vmax.f32 %v1313, 0.0
  %v1346 = vmax.f32 %v1314, 0.0
  %v1347 = vmax.f32 %v1315, 0.0
  %v1348 = vmax.f32 %v1316, 0.0
  %v1349 = vmax.f32 %v1317, 0.0
  %v1350 = vmax.f32 %v1318, 0.0
  %v1351 = vmax.f32 %v1319, 0.0
  %v1352 = vmax.f32 %v1320, 0.0
  %v1353 = vmax.f32 %v1321, 0.0
  %v1354 = vmax.f32 %v1322, 0.0
  %v1355 = vmax.f32 %v1323, 0.0
  %v1356 = vmax.f32 %v1324, 0.0
  %v1357 = vmax.f32 %v1325, 0.0
  %v1358 = vmax.f32 %v1326, 0.0
  %v1359 = vmax.f32 %v1327, 0.0
  %1392 = vrot.lane.b32.xlu0 %v1328, 64
  %v1393 = vpop.permute.xlu0 %1392
  %1394 = vrot.lane.b32.xlu0 %v1329, 64
  %v1395 = vpop.permute.xlu0 %1394
  %1396 = vrot.lane.b32.xlu0 %v1330, 64
  %v1397 = vpop.permute.xlu0 %1396
  %1398 = vrot.lane.b32.xlu0 %v1331, 64
  %v1399 = vpop.permute.xlu0 %1398
  %1400 = vrot.lane.b32.xlu0 %v1332, 64
  %v1401 = vpop.permute.xlu0 %1400
  %1402 = vrot.lane.b32.xlu0 %v1333, 64
  %v1403 = vpop.permute.xlu0 %1402
  %1404 = vrot.lane.b32.xlu0 %v1334, 64
  %v1405 = vpop.permute.xlu0 %1404
  %1406 = vrot.lane.b32.xlu0 %v1335, 64
  %v1407 = vpop.permute.xlu0 %1406
  %1408 = vrot.lane.b32.xlu0 %v1336, 64
  %v1409 = vpop.permute.xlu0 %1408
  %1410 = vrot.lane.b32.xlu0 %v1337, 64
  %v1411 = vpop.permute.xlu0 %1410
  %1412 = vrot.lane.b32.xlu0 %v1338, 64
  %v1413 = vpop.permute.xlu0 %1412
  %1414 = vrot.lane.b32.xlu0 %v1339, 64
  %v1415 = vpop.permute.xlu0 %1414
  %1416 = vrot.lane.b32.xlu0 %v1340, 64
  %v1417 = vpop.permute.xlu0 %1416
  %1418 = vrot.lane.b32.xlu0 %v1341, 64
  %v1419 = vpop.permute.xlu0 %1418
  %1420 = vrot.lane.b32.xlu0 %v1342, 64
  %v1421 = vpop.permute.xlu0 %1420
  %1422 = vrot.lane.b32.xlu0 %v1343, 64
  %v1423 = vpop.permute.xlu0 %1422
  %1424 = vrot.lane.b32.xlu0 %v1344, 64
  %v1425 = vpop.permute.xlu0 %1424
  %1426 = vrot.lane.b32.xlu0 %v1345, 64
  %v1427 = vpop.permute.xlu0 %1426
  %1428 = vrot.lane.b32.xlu0 %v1346, 64
  %v1429 = vpop.permute.xlu0 %1428
  %1430 = vrot.lane.b32.xlu0 %v1347, 64
  %v1431 = vpop.permute.xlu0 %1430
  %1432 = vrot.lane.b32.xlu0 %v1348, 64
  %v1433 = vpop.permute.xlu0 %1432
  %1434 = vrot.lane.b32.xlu0 %v1349, 64
  %v1435 = vpop.permute.xlu0 %1434
  %1436 = vrot.lane.b32.xlu0 %v1350, 64
  %v1437 = vpop.permute.xlu0 %1436
  %1438 = vrot.lane.b32.xlu0 %v1351, 64
  %v1439 = vpop.permute.xlu0 %1438
  %1440 = vrot.lane.b32.xlu0 %v1352, 64
  %v1441 = vpop.permute.xlu0 %1440
  %1442 = vrot.lane.b32.xlu0 %v1353, 64
  %v1443 = vpop.permute.xlu0 %1442
  %1444 = vrot.lane.b32.xlu0 %v1354, 64
  %v1445 = vpop.permute.xlu0 %1444
  %1446 = vrot.lane.b32.xlu0 %v1355, 64
  %v1447 = vpop.permute.xlu0 %1446
  %1448 = vrot.lane.b32.xlu0 %v1356, 64
  %v1449 = vpop.permute.xlu0 %1448
  %1450 = vrot.lane.b32.xlu0 %v1357, 64
  %v1451 = vpop.permute.xlu0 %1450
  %1452 = vrot.lane.b32.xlu0 %v1358, 64
  %v1453 = vpop.permute.xlu0 %1452
  %1454 = vrot.lane.b32.xlu0 %v1359, 64
  %v1455 = vpop.permute.xlu0 %1454
  %v1488 = vsel %vm758, %v968, %v1393
  %v1489 = vsel %vm758, %v969, %v1395
  %v1490 = vsel %vm758, %v970, %v1397
  %v1491 = vsel %vm758, %v971, %v1399
  %v1492 = vsel %vm758, %v972, %v1401
  %v1493 = vsel %vm758, %v973, %v1403
  %v1494 = vsel %vm758, %v974, %v1405
  %v1495 = vsel %vm758, %v975, %v1407
  %v1496 = vsel %vm758, %v976, %v1409
  %v1497 = vsel %vm758, %v977, %v1411
  %v1498 = vsel %vm758, %v978, %v1413
  %v1499 = vsel %vm758, %v979, %v1415
  %v1500 = vsel %vm758, %v980, %v1417
  %v1501 = vsel %vm758, %v981, %v1419
  %v1502 = vsel %vm758, %v982, %v1421
  %v1503 = vsel %vm758, %v983, %v1423
  %v1504 = vsel %vm758, %v984, %v1425
  %v1505 = vsel %vm758, %v985, %v1427
  %v1506 = vsel %vm758, %v986, %v1429
  %v1507 = vsel %vm758, %v987, %v1431
  %v1508 = vsel %vm758, %v988, %v1433
  %v1509 = vsel %vm758, %v989, %v1435
  %v1510 = vsel %vm758, %v990, %v1437
  %v1511 = vsel %vm758, %v991, %v1439
  %v1512 = vsel %vm758, %v992, %v1441
  %v1513 = vsel %vm758, %v993, %v1443
  %v1514 = vsel %vm758, %v994, %v1445
  %v1515 = vsel %vm758, %v995, %v1447
  %v1516 = vsel %vm758, %v996, %v1449
  %v1517 = vsel %vm758, %v997, %v1451
  %v1518 = vsel %vm758, %v998, %v1453
  %v1519 = vsel %vm758, %v999, %v1455
  %vm1520 = vcmask 785408
  %v1521 = vsel %vm1520, %v1488, %v1393
  %v1522 = vsel %vm1520, %v1489, %v1395
  %v1523 = vsel %vm1520, %v1490, %v1397
  %v1524 = vsel %vm1520, %v1491, %v1399
  %v1525 = vsel %vm1520, %v1492, %v1401
  %v1526 = vsel %vm1520, %v1493, %v1403
  %v1527 = vsel %vm1520, %v1494, %v1405
  %v1528 = vsel %vm1520, %v1495, %v1407
  %v1529 = vsel %vm1520, %v1496, %v1409
  %v1530 = vsel %vm1520, %v1497, %v1411
  %v1531 = vsel %vm1520, %v1498, %v1413
  %v1532 = vsel %vm1520, %v1499, %v1415
  %v1533 = vsel %vm1520, %v1500, %v1417
  %v1534 = vsel %vm1520, %v1501, %v1419
  %v1535 = vsel %vm1520, %v1502, %v1421
  %v1536 = vsel %vm1520, %v1503, %v1423
  %v1537 = vsel %vm1520, %v1504, %v1425
  %v1538 = vsel %vm1520, %v1505, %v1427
  %v1539 = vsel %vm1520, %v1506, %v1429
  %v1540 = vsel %vm1520, %v1507, %v1431
  %v1541 = vsel %vm1520, %v1508, %v1433
  %v1542 = vsel %vm1520, %v1509, %v1435
  %v1543 = vsel %vm1520, %v1510, %v1437
  %v1544 = vsel %vm1520, %v1511, %v1439
  %v1545 = vsel %vm1520, %v1512, %v1441
  %v1546 = vsel %vm1520, %v1513, %v1443
  %v1547 = vsel %vm1520, %v1514, %v1445
  %v1548 = vsel %vm1520, %v1515, %v1447
  %v1549 = vsel %vm1520, %v1516, %v1449
  %v1550 = vsel %vm1520, %v1517, %v1451
  %v1551 = vsel %vm1520, %v1518, %v1453
  %v1552 = vsel %vm1520, %v1519, %v1455
  %v1553 = vpack.c.bf16 %v1522, %v1521
  %v1554 = vpack.c.bf16 %v1524, %v1523
  %v1555 = vpack.c.bf16 %v1526, %v1525
  %v1556 = vpack.c.bf16 %v1528, %v1527
  %v1557 = vpack.c.bf16 %v1530, %v1529
  %v1558 = vpack.c.bf16 %v1532, %v1531
  %v1559 = vpack.c.bf16 %v1534, %v1533
  %v1560 = vpack.c.bf16 %v1536, %v1535
  %v1561 = vpack.c.bf16 %v1538, %v1537
  %v1562 = vpack.c.bf16 %v1540, %v1539
  %v1563 = vpack.c.bf16 %v1542, %v1541
  %v1564 = vpack.c.bf16 %v1544, %v1543
  %v1565 = vpack.c.bf16 %v1546, %v1545
  %v1566 = vpack.c.bf16 %v1548, %v1547
  %v1567 = vpack.c.bf16 %v1550, %v1549
  %v1568 = vpack.c.bf16 %v1552, %v1551
  %v1569 = vld [vmem:[%s3] sm:$0xff]
  %v1570 = vld [vmem:[%s3 + $0x8] sm:$0xf]
  %v1571 = vld [vmem:[%s3 + $0xc] sm:$0xff]
  %v1572 = vld [vmem:[%s3 + $0x14] sm:$0xf]
  %v1573 = vld [vmem:[%s3 + $0x18] sm:$0xff]
  %v1574 = vld [vmem:[%s3 + $0x20] sm:$0xf]
  %v1575 = vld [vmem:[%s3 + $0x24] sm:$0xff]
  %v1576 = vld [vmem:[%s3 + $0x2c] sm:$0xf]
  %v1577 = vld [vmem:[%s3 + $0x30] sm:$0xff]
  %v1578 = vld [vmem:[%s3 + $0x38] sm:$0xf]
  %v1579 = vld [vmem:[%s3 + $0x3c] sm:$0xff]
  %v1580 = vld [vmem:[%s3 + $0x44] sm:$0xf]
  %v1581 = vld [vmem:[%s3 + $0x48] sm:$0xff]
  %v1582 = vld [vmem:[%s3 + $0x50] sm:$0xf]
  %v1583 = vld [vmem:[%s3 + $0x54] sm:$0xff]
  %v1584 = vld [vmem:[%s3 + $0x5c] sm:$0xf]
  %v1585 = vld [vmem:[%s3 + $0x60] sm:$0xff]
  %v1586 = vld [vmem:[%s3 + $0x68] sm:$0xf]
  %v1587 = vld [vmem:[%s3 + $0x6c] sm:$0xff]
  %v1588 = vld [vmem:[%s3 + $0x74] sm:$0xf]
  %v1589 = vld [vmem:[%s3 + $0x78] sm:$0xff]
  %v1590 = vld [vmem:[%s3 + $0x80] sm:$0xf]
  %v1591 = vld [vmem:[%s3 + $0x84] sm:$0xff]
  %v1592 = vld [vmem:[%s3 + $0x8c] sm:$0xf]
  %v1593 = vld [vmem:[%s3 + $0x90] sm:$0xff]
  %v1594 = vld [vmem:[%s3 + $0x98] sm:$0xf]
  %v1595 = vld [vmem:[%s3 + $0x9c] sm:$0xff]
  %v1596 = vld [vmem:[%s3 + $0xa4] sm:$0xf]
  %v1597 = vld [vmem:[%s3 + $0xa8] sm:$0xff]
  %v1598 = vld [vmem:[%s3 + $0xb0] sm:$0xf]
  %v1599 = vld [vmem:[%s3 + $0xb4] sm:$0xff]
  %v1600 = vld [vmem:[%s3 + $0xbc] sm:$0xf]
  %v1633 = vunpack.c.l.b16 %v1569
  %v1634 = vunpack.c.h.b16 %v1569
  %v1635 = vunpack.c.l.b16 %v1570
  %v1636 = vunpack.c.l.b16 %v1571
  %v1637 = vunpack.c.h.b16 %v1571
  %v1638 = vunpack.c.l.b16 %v1572
  %v1639 = vunpack.c.l.b16 %v1573
  %v1640 = vunpack.c.h.b16 %v1573
  %v1641 = vunpack.c.l.b16 %v1574
  %v1642 = vunpack.c.l.b16 %v1575
  %v1643 = vunpack.c.h.b16 %v1575
  %v1644 = vunpack.c.l.b16 %v1576
  %v1645 = vunpack.c.l.b16 %v1577
  %v1646 = vunpack.c.h.b16 %v1577
  %v1647 = vunpack.c.l.b16 %v1578
  %v1648 = vunpack.c.l.b16 %v1579
  %v1649 = vunpack.c.h.b16 %v1579
  %v1650 = vunpack.c.l.b16 %v1580
  %v1651 = vunpack.c.l.b16 %v1581
  %v1652 = vunpack.c.h.b16 %v1581
  %v1653 = vunpack.c.l.b16 %v1582
  %v1654 = vunpack.c.l.b16 %v1583
  %v1655 = vunpack.c.h.b16 %v1583
  %v1656 = vunpack.c.l.b16 %v1584
  %v1657 = vunpack.c.l.b16 %v1585
  %v1658 = vunpack.c.h.b16 %v1585
  %v1659 = vunpack.c.l.b16 %v1586
  %v1660 = vunpack.c.l.b16 %v1587
  %v1661 = vunpack.c.h.b16 %v1587
  %v1662 = vunpack.c.l.b16 %v1588
  %v1663 = vunpack.c.l.b16 %v1589
  %v1664 = vunpack.c.h.b16 %v1589
  %v1665 = vunpack.c.l.b16 %v1590
  %v1666 = vunpack.c.l.b16 %v1591
  %v1667 = vunpack.c.h.b16 %v1591
  %v1668 = vunpack.c.l.b16 %v1592
  %v1669 = vunpack.c.l.b16 %v1593
  %v1670 = vunpack.c.h.b16 %v1593
  %v1671 = vunpack.c.l.b16 %v1594
  %v1672 = vunpack.c.l.b16 %v1595
  %v1673 = vunpack.c.h.b16 %v1595
  %v1674 = vunpack.c.l.b16 %v1596
  %v1675 = vunpack.c.l.b16 %v1597
  %v1676 = vunpack.c.h.b16 %v1597
  %v1677 = vunpack.c.l.b16 %v1598
  %v1678 = vunpack.c.l.b16 %v1599
  %v1679 = vunpack.c.h.b16 %v1599
  %v1680 = vunpack.c.l.b16 %v1600
  %v1681 = vpack.c.b16 %v1636, %v1633
  %v1682 = vpack.c.b16 %v1637, %v1634
  %v1683 = vpack.c.b16 %v1638, %v1635
  %v1684 = vpack.c.b16 %v1642, %v1639
  %v1685 = vpack.c.b16 %v1643, %v1640
  %v1686 = vpack.c.b16 %v1644, %v1641
  %v1687 = vpack.c.b16 %v1648, %v1645
  %v1688 = vpack.c.b16 %v1649, %v1646
  %v1689 = vpack.c.b16 %v1650, %v1647
  %v1690 = vpack.c.b16 %v1654, %v1651
  %v1691 = vpack.c.b16 %v1655, %v1652
  %v1692 = vpack.c.b16 %v1656, %v1653
  %v1693 = vpack.c.b16 %v1660, %v1657
  %v1694 = vpack.c.b16 %v1661, %v1658
  %v1695 = vpack.c.b16 %v1662, %v1659
  %v1696 = vpack.c.b16 %v1666, %v1663
  %v1697 = vpack.c.b16 %v1667, %v1664
  %v1698 = vpack.c.b16 %v1668, %v1665
  %v1699 = vpack.c.b16 %v1672, %v1669
  %v1700 = vpack.c.b16 %v1673, %v1670
  %v1701 = vpack.c.b16 %v1674, %v1671
  %v1702 = vpack.c.b16 %v1678, %v1675
  %v1703 = vpack.c.b16 %v1679, %v1676
  %v1704 = vpack.c.b16 %v1680, %v1677
  %1729 = vmatprep.subr.bf16.mxu0 %v1682
  %1730 = vmatpush1.bf16.msra.mxu0 %v1681
  %1731 = vmatprep.subr.bf16.mxu0 %v1685
  %1732 = vmatpush1.bf16.msra.mxu0 %v1684
  %1733 = vmatprep.subr.bf16.mxu0 %v1688
  %1734 = vmatpush1.bf16.msra.mxu0 %v1687
  %1735 = vmatprep.subr.bf16.mxu0 %v1691
  %1736 = vmatpush1.bf16.msra.mxu0 %v1690
  %1737 = vmatprep.subr.bf16.mxu0 %v1694
  %1738 = vmatpush1.bf16.msra.mxu0 %v1693
  %1739 = vmatprep.subr.bf16.mxu0 %v1697
  %1740 = vmatpush1.bf16.msra.mxu0 %v1696
  %1741 = vmatprep.subr.bf16.mxu0 %v1700
  %1742 = vmatpush1.bf16.msra.mxu0 %v1699
  %1743 = vmatprep.subr.bf16.mxu0 %v1703
  %1744 = vmatpush1.bf16.msra.mxu0 %v1702
  %1745 = vmatprep.subr.bf16.mxu0 0
  %1746 = vmatpush1.bf16.msra.mxu0 0
  %1747 = vmatprep.subr.bf16.mxu0 0
  %1748 = vmatpush1.bf16.msra.mxu0 0
  %1749 = vmatprep.subr.bf16.mxu0 0
  %1750 = vmatpush1.bf16.msra.mxu0 0
  %1751 = vmatprep.subr.bf16.mxu0 0
  %1752 = vmatpush1.bf16.msra.mxu0 0
  %1753 = vmatprep.subr.bf16.mxu0 0
  %1754 = vmatpush1.bf16.msra.mxu0 0
  %1755 = vmatprep.subr.bf16.mxu0 0
  %1756 = vmatpush1.bf16.msra.mxu0 0
  %1757 = vmatprep.subr.bf16.mxu0 0
  %1758 = vmatpush1.bf16.msra.mxu0 0
  %1759 = vmatprep.subr.bf16.mxu0 0
  %1760 = vmatpush1.bf16.msra.mxu0 0
  %1761 = vmatprep.mubr.bf16.mxu0 0
  %1762 = vmatmul.mubr.bf16.gmra.mrb[0].mxu0 %v1553
  %v1763 = vpop.f32.mrb[0].mxu0
  %v1764 = vadd.f32 %v191, %v1763
  %v1765 = vpop.f32.mrb[0].mxu0
  %v1766 = vadd.f32 %v193, %v1765
  %v1767 = vpop.f32.mrb[0].mxu0
  %v1768 = vadd.f32 %v195, %v1767
  %v1769 = vpop.f32.mrb[0].mxu0
  %v1770 = vadd.f32 %v197, %v1769
  %1771 = vmatprep.mubr.bf16.mxu0 0
  %1772 = vmatmul.mubr.bf16.gmra.mrb[0].mxu0 %v1554
  %v1773 = vpop.f32.mrb[0].mxu0
  %v1774 = vadd.f32 %v201, %v1773
  %v1775 = vpop.f32.mrb[0].mxu0
  %v1776 = vadd.f32 %v203, %v1775
  %v1777 = vpop.f32.mrb[0].mxu0
  %v1778 = vadd.f32 %v205, %v1777
  %v1779 = vpop.f32.mrb[0].mxu0
  %v1780 = vadd.f32 %v207, %v1779
  %1781 = vmatprep.mubr.bf16.mxu0 0
  %1782 = vmatmul.mubr.bf16.gmra.mrb[0].mxu0 %v1555
  %v1783 = vpop.f32.mrb[0].mxu0
  %v1784 = vadd.f32 %v211, %v1783
  %v1785 = vpop.f32.mrb[0].mxu0
  %v1786 = vadd.f32 %v213, %v1785
  %v1787 = vpop.f32.mrb[0].mxu0
  %v1788 = vadd.f32 %v215, %v1787
  %v1789 = vpop.f32.mrb[0].mxu0
  %v1790 = vadd.f32 %v217, %v1789
  %1791 = vmatprep.mubr.bf16.mxu0 0
  %1792 = vmatmul.mubr.bf16.gmra.mrb[0].mxu0 %v1556
  %v1793 = vpop.f32.mrb[0].mxu0
  %v1794 = vadd.f32 %v221, %v1793
  %v1795 = vpop.f32.mrb[0].mxu0
  %v1796 = vadd.f32 %v223, %v1795
  %v1797 = vpop.f32.mrb[0].mxu0
  %v1798 = vadd.f32 %v225, %v1797
  %v1799 = vpop.f32.mrb[0].mxu0
  %v1800 = vadd.f32 %v227, %v1799
  %1801 = vmatprep.mubr.bf16.mxu0 0
  %1802 = vmatmul.mubr.bf16.gmra.mrb[0].mxu0 %v1557
  %v1803 = vpop.f32.mrb[0].mxu0
  %v1804 = vadd.f32 %v231, %v1803
  %v1805 = vpop.f32.mrb[0].mxu0
  %v1806 = vadd.f32 %v233, %v1805
  %v1807 = vpop.f32.mrb[0].mxu0
  %v1808 = vadd.f32 %v235, %v1807
  %v1809 = vpop.f32.mrb[0].mxu0
  %v1810 = vadd.f32 %v237, %v1809
  %1811 = vmatprep.mubr.bf16.mxu0 0
  %1812 = vmatmul.mubr.bf16.gmra.mrb[0].mxu0 %v1558
  %v1813 = vpop.f32.mrb[0].mxu0
  %v1814 = vadd.f32 %v241, %v1813
  %v1815 = vpop.f32.mrb[0].mxu0
  %v1816 = vadd.f32 %v243, %v1815
  %v1817 = vpop.f32.mrb[0].mxu0
  %v1818 = vadd.f32 %v245, %v1817
  %v1819 = vpop.f32.mrb[0].mxu0
  %v1820 = vadd.f32 %v247, %v1819
  %1821 = vmatprep.mubr.bf16.mxu0 0
  %1822 = vmatmul.mubr.bf16.gmra.mrb[0].mxu0 %v1559
  %v1823 = vpop.f32.mrb[0].mxu0
  %v1824 = vadd.f32 %v251, %v1823
  %v1825 = vpop.f32.mrb[0].mxu0
  %v1826 = vadd.f32 %v253, %v1825
  %v1827 = vpop.f32.mrb[0].mxu0
  %v1828 = vadd.f32 %v255, %v1827
  %v1829 = vpop.f32.mrb[0].mxu0
  %v1830 = vadd.f32 %v257, %v1829
  %1831 = vmatprep.mubr.bf16.mxu0 0
  %1832 = vmatmul.mubr.bf16.gmra.mrb[0].mxu0 %v1560
  %v1833 = vpop.f32.mrb[0].mxu0
  %v1834 = vadd.f32 %v261, %v1833
  %v1835 = vpop.f32.mrb[0].mxu0
  %v1836 = vadd.f32 %v263, %v1835
  %v1837 = vpop.f32.mrb[0].mxu0
  %v1838 = vadd.f32 %v265, %v1837
  %v1839 = vpop.f32.mrb[0].mxu0
  %v1840 = vadd.f32 %v267, %v1839
  %1841 = vmatprep.mubr.bf16.mxu0 0
  %1842 = vmatmul.mubr.bf16.gmra.mrb[0].mxu0 %v1561
  %v1843 = vpop.f32.mrb[0].mxu0
  %v1844 = vadd.f32 %v271, %v1843
  %v1845 = vpop.f32.mrb[0].mxu0
  %v1846 = vadd.f32 %v273, %v1845
  %v1847 = vpop.f32.mrb[0].mxu0
  %v1848 = vadd.f32 %v275, %v1847
  %v1849 = vpop.f32.mrb[0].mxu0
  %v1850 = vadd.f32 %v277, %v1849
  %1851 = vmatprep.mubr.bf16.mxu0 0
  %1852 = vmatmul.mubr.bf16.gmra.mrb[0].mxu0 %v1562
  %v1853 = vpop.f32.mrb[0].mxu0
  %v1854 = vadd.f32 %v281, %v1853
  %v1855 = vpop.f32.mrb[0].mxu0
  %v1856 = vadd.f32 %v283, %v1855
  %v1857 = vpop.f32.mrb[0].mxu0
  %v1858 = vadd.f32 %v285, %v1857
  %v1859 = vpop.f32.mrb[0].mxu0
  %v1860 = vadd.f32 %v287, %v1859
  %1861 = vmatprep.mubr.bf16.mxu0 0
  %1862 = vmatmul.mubr.bf16.gmra.mrb[0].mxu0 %v1563
  %v1863 = vpop.f32.mrb[0].mxu0
  %v1864 = vadd.f32 %v291, %v1863
  %v1865 = vpop.f32.mrb[0].mxu0
  %v1866 = vadd.f32 %v293, %v1865
  %v1867 = vpop.f32.mrb[0].mxu0
  %v1868 = vadd.f32 %v295, %v1867
  %v1869 = vpop.f32.mrb[0].mxu0
  %v1870 = vadd.f32 %v297, %v1869
  %1871 = vmatprep.mubr.bf16.mxu0 0
  %1872 = vmatmul.mubr.bf16.gmra.mrb[0].mxu0 %v1564
  %v1873 = vpop.f32.mrb[0].mxu0
  %v1874 = vadd.f32 %v301, %v1873
  %v1875 = vpop.f32.mrb[0].mxu0
  %v1876 = vadd.f32 %v303, %v1875
  %v1877 = vpop.f32.mrb[0].mxu0
  %v1878 = vadd.f32 %v305, %v1877
  %v1879 = vpop.f32.mrb[0].mxu0
  %v1880 = vadd.f32 %v307, %v1879
  %1881 = vmatprep.mubr.bf16.mxu0 0
  %1882 = vmatmul.mubr.bf16.gmra.mrb[0].mxu0 %v1565
  %v1883 = vpop.f32.mrb[0].mxu0
  %v1884 = vadd.f32 %v311, %v1883
  %v1885 = vpop.f32.mrb[0].mxu0
  %v1886 = vadd.f32 %v313, %v1885
  %v1887 = vpop.f32.mrb[0].mxu0
  %v1888 = vadd.f32 %v315, %v1887
  %v1889 = vpop.f32.mrb[0].mxu0
  %v1890 = vadd.f32 %v317, %v1889
  %1891 = vmatprep.mubr.bf16.mxu0 0
  %1892 = vmatmul.mubr.bf16.gmra.mrb[0].mxu0 %v1566
  %v1893 = vpop.f32.mrb[0].mxu0
  %v1894 = vadd.f32 %v321, %v1893
  %v1895 = vpop.f32.mrb[0].mxu0
  %v1896 = vadd.f32 %v323, %v1895
  %v1897 = vpop.f32.mrb[0].mxu0
  %v1898 = vadd.f32 %v325, %v1897
  %v1899 = vpop.f32.mrb[0].mxu0
  %v1900 = vadd.f32 %v327, %v1899
  %1901 = vmatprep.mubr.bf16.mxu0 0
  %1902 = vmatmul.mubr.bf16.gmra.mrb[0].mxu0 %v1567
  %v1903 = vpop.f32.mrb[0].mxu0
  %v1904 = vadd.f32 %v331, %v1903
  %v1905 = vpop.f32.mrb[0].mxu0
  %v1906 = vadd.f32 %v333, %v1905
  %v1907 = vpop.f32.mrb[0].mxu0
  %v1908 = vadd.f32 %v335, %v1907
  %v1909 = vpop.f32.mrb[0].mxu0
  %v1910 = vadd.f32 %v337, %v1909
  %1911 = vmatprep.mubr.bf16.mxu0 0
  %1912 = vmatmul.mubr.bf16.gmra.mrb[0].mxu0 %v1568
  %v1913 = vpop.f32.mrb[0].mxu0
  %v1914 = vadd.f32 %v341, %v1913
  %v1915 = vpop.f32.mrb[0].mxu0
  %v1916 = vadd.f32 %v343, %v1915
  %v1917 = vpop.f32.mrb[0].mxu0
  %v1918 = vadd.f32 %v345, %v1917
  %v1919 = vpop.f32.mrb[0].mxu0
  %v1920 = vadd.f32 %v347, %v1919
  %1921 = vdwg.mxu0
  %1922 = vmatprep.subr.bf16.mxu0 0
  %1923 = vmatpush1.bf16.msra.mxu0 %v1683
  %1924 = vmatprep.subr.bf16.mxu0 0
  %1925 = vmatpush1.bf16.msra.mxu0 %v1686
  %1926 = vmatprep.subr.bf16.mxu0 0
  %1927 = vmatpush1.bf16.msra.mxu0 %v1689
  %1928 = vmatprep.subr.bf16.mxu0 0
  %1929 = vmatpush1.bf16.msra.mxu0 %v1692
  %1930 = vmatprep.subr.bf16.mxu0 0
  %1931 = vmatpush1.bf16.msra.mxu0 %v1695
  %1932 = vmatprep.subr.bf16.mxu0 0
  %1933 = vmatpush1.bf16.msra.mxu0 %v1698
  %1934 = vmatprep.subr.bf16.mxu0 0
  %1935 = vmatpush1.bf16.msra.mxu0 %v1701
  %1936 = vmatprep.subr.bf16.mxu0 0
  %1937 = vmatpush1.bf16.msra.mxu0 %v1704
  %1938 = vmatprep.subr.bf16.mxu0 0
  %1939 = vmatpush1.bf16.msra.mxu0 0
  %1940 = vmatprep.subr.bf16.mxu0 0
  %1941 = vmatpush1.bf16.msra.mxu0 0
  %1942 = vmatprep.subr.bf16.mxu0 0
  %1943 = vmatpush1.bf16.msra.mxu0 0
  %1944 = vmatprep.subr.bf16.mxu0 0
  %1945 = vmatpush1.bf16.msra.mxu0 0
  %1946 = vmatprep.subr.bf16.mxu0 0
  %1947 = vmatpush1.bf16.msra.mxu0 0
  %1948 = vmatprep.subr.bf16.mxu0 0
  %1949 = vmatpush1.bf16.msra.mxu0 0
  %1950 = vmatprep.subr.bf16.mxu0 0
  %1951 = vmatpush1.bf16.msra.mxu0 0
  %1952 = vmatprep.subr.bf16.mxu0 0
  %1953 = vmatpush1.bf16.msra.mxu0 0
  %1954 = vmatprep.mubr.bf16.mxu0 0
  %1955 = vmatmul.mubr.bf16.gmra.mrb[0].mxu0 %v1553
  %v1956 = vpop.f32.mrb[0].mxu0
  %v1957 = vadd.f32 %v384, %v1956
  %v1958 = vpop.f32.mrb[0].mxu0
  %v1959 = vpop.f32.mrb[0].mxu0
  %v1960 = vadd.f32 %v387, %v1959
  %v1961 = vpop.f32.mrb[0].mxu0
  %1962 = vmatprep.mubr.bf16.mxu0 0
  %1963 = vmatmul.mubr.bf16.gmra.mrb[0].mxu0 %v1554
  %v1964 = vpop.f32.mrb[0].mxu0
  %v1965 = vadd.f32 %v392, %v1964
  %v1966 = vpop.f32.mrb[0].mxu0
  %v1967 = vpop.f32.mrb[0].mxu0
  %v1968 = vadd.f32 %v395, %v1967
  %v1969 = vpop.f32.mrb[0].mxu0
  %1970 = vmatprep.mubr.bf16.mxu0 0
  %1971 = vmatmul.mubr.bf16.gmra.mrb[0].mxu0 %v1555
  %v1972 = vpop.f32.mrb[0].mxu0
  %v1973 = vadd.f32 %v400, %v1972
  %v1974 = vpop.f32.mrb[0].mxu0
  %v1975 = vpop.f32.mrb[0].mxu0
  %v1976 = vadd.f32 %v403, %v1975
  %v1977 = vpop.f32.mrb[0].mxu0
  %1978 = vmatprep.mubr.bf16.mxu0 0
  %1979 = vmatmul.mubr.bf16.gmra.mrb[0].mxu0 %v1556
  %v1980 = vpop.f32.mrb[0].mxu0
  %v1981 = vadd.f32 %v408, %v1980
  %v1982 = vpop.f32.mrb[0].mxu0
  %v1983 = vpop.f32.mrb[0].mxu0
  %v1984 = vadd.f32 %v411, %v1983
  %v1985 = vpop.f32.mrb[0].mxu0
  %1986 = vmatprep.mubr.bf16.mxu0 0
  %1987 = vmatmul.mubr.bf16.gmra.mrb[0].mxu0 %v1557
  %v1988 = vpop.f32.mrb[0].mxu0
  %v1989 = vadd.f32 %v416, %v1988
  %v1990 = vpop.f32.mrb[0].mxu0
  %v1991 = vpop.f32.mrb[0].mxu0
  %v1992 = vadd.f32 %v419, %v1991
  %v1993 = vpop.f32.mrb[0].mxu0
  %1994 = vmatprep.mubr.bf16.mxu0 0
  %1995 = vmatmul.mubr.bf16.gmra.mrb[0].mxu0 %v1558
  %v1996 = vpop.f32.mrb[0].mxu0
  %v1997 = vadd.f32 %v424, %v1996
  %v1998 = vpop.f32.mrb[0].mxu0
  %v1999 = vpop.f32.mrb[0].mxu0
  %v2000 = vadd.f32 %v427, %v1999
  %v2001 = vpop.f32.mrb[0].mxu0
  %2002 = vmatprep.mubr.bf16.mxu0 0
  %2003 = vmatmul.mubr.bf16.gmra.mrb[0].mxu0 %v1559
  %v2004 = vpop.f32.mrb[0].mxu0
  %v2005 = vadd.f32 %v432, %v2004
  %v2006 = vpop.f32.mrb[0].mxu0
  %v2007 = vpop.f32.mrb[0].mxu0
  %v2008 = vadd.f32 %v435, %v2007
  %v2009 = vpop.f32.mrb[0].mxu0
  %2010 = vmatprep.mubr.bf16.mxu0 0
  %2011 = vmatmul.mubr.bf16.gmra.mrb[0].mxu0 %v1560
  %v2012 = vpop.f32.mrb[0].mxu0
  %v2013 = vadd.f32 %v440, %v2012
  %v2014 = vpop.f32.mrb[0].mxu0
  %v2015 = vpop.f32.mrb[0].mxu0
  %v2016 = vadd.f32 %v443, %v2015
  %v2017 = vpop.f32.mrb[0].mxu0
  %2018 = vmatprep.mubr.bf16.mxu0 0
  %2019 = vmatmul.mubr.bf16.gmra.mrb[0].mxu0 %v1561
  %v2020 = vpop.f32.mrb[0].mxu0
  %v2021 = vadd.f32 %v448, %v2020
  %v2022 = vpop.f32.mrb[0].mxu0
  %v2023 = vpop.f32.mrb[0].mxu0
  %v2024 = vadd.f32 %v451, %v2023
  %v2025 = vpop.f32.mrb[0].mxu0
  %2026 = vmatprep.mubr.bf16.mxu0 0
  %2027 = vmatmul.mubr.bf16.gmra.mrb[0].mxu0 %v1562
  %v2028 = vpop.f32.mrb[0].mxu0
  %v2029 = vadd.f32 %v456, %v2028
  %v2030 = vpop.f32.mrb[0].mxu0
  %v2031 = vpop.f32.mrb[0].mxu0
  %v2032 = vadd.f32 %v459, %v2031
  %v2033 = vpop.f32.mrb[0].mxu0
  %2034 = vmatprep.mubr.bf16.mxu0 0
  %2035 = vmatmul.mubr.bf16.gmra.mrb[0].mxu0 %v1563
  %v2036 = vpop.f32.mrb[0].mxu0
  %v2037 = vadd.f32 %v464, %v2036
  %v2038 = vpop.f32.mrb[0].mxu0
  %v2039 = vpop.f32.mrb[0].mxu0
  %v2040 = vadd.f32 %v467, %v2039
  %v2041 = vpop.f32.mrb[0].mxu0
  %2042 = vmatprep.mubr.bf16.mxu0 0
  %2043 = vmatmul.mubr.bf16.gmra.mrb[0].mxu0 %v1564
  %v2044 = vpop.f32.mrb[0].mxu0
  %v2045 = vadd.f32 %v472, %v2044
  %v2046 = vpop.f32.mrb[0].mxu0
  %v2047 = vpop.f32.mrb[0].mxu0
  %v2048 = vadd.f32 %v475, %v2047
  %v2049 = vpop.f32.mrb[0].mxu0
  %2050 = vmatprep.mubr.bf16.mxu0 0
  %2051 = vmatmul.mubr.bf16.gmra.mrb[0].mxu0 %v1565
  %v2052 = vpop.f32.mrb[0].mxu0
  %v2053 = vadd.f32 %v480, %v2052
  %v2054 = vpop.f32.mrb[0].mxu0
  %v2055 = vpop.f32.mrb[0].mxu0
  %v2056 = vadd.f32 %v483, %v2055
  %v2057 = vpop.f32.mrb[0].mxu0
  %2058 = vmatprep.mubr.bf16.mxu0 0
  %2059 = vmatmul.mubr.bf16.gmra.mrb[0].mxu0 %v1566
  %v2060 = vpop.f32.mrb[0].mxu0
  %v2061 = vadd.f32 %v488, %v2060
  %v2062 = vpop.f32.mrb[0].mxu0
  %v2063 = vpop.f32.mrb[0].mxu0
  %v2064 = vadd.f32 %v491, %v2063
  %v2065 = vpop.f32.mrb[0].mxu0
  %2066 = vmatprep.mubr.bf16.mxu0 0
  %2067 = vmatmul.mubr.bf16.gmra.mrb[0].mxu0 %v1567
  %v2068 = vpop.f32.mrb[0].mxu0
  %v2069 = vadd.f32 %v496, %v2068
  %v2070 = vpop.f32.mrb[0].mxu0
  %v2071 = vpop.f32.mrb[0].mxu0
  %v2072 = vadd.f32 %v499, %v2071
  %v2073 = vpop.f32.mrb[0].mxu0
  %2074 = vmatprep.mubr.bf16.mxu0 0
  %2075 = vmatmul.mubr.bf16.gmra.mrb[0].mxu0 %v1568
  %v2076 = vpop.f32.mrb[0].mxu0
  %v2077 = vadd.f32 %v504, %v2076
  %v2078 = vpop.f32.mrb[0].mxu0
  %v2079 = vpop.f32.mrb[0].mxu0
  %v2080 = vadd.f32 %v507, %v2079
  %v2081 = vpop.f32.mrb[0].mxu0
  %2082 = vdwg.mxu0
  %s2083 = scalar_lea.vmem %s5, 2
  %v2084 = vld [vmem:[%s2083] ss:$8 sm:$0x7]
  %v2086 = vlaneseq
  %v2087 = vshrl.u32 %v2086, 7
  %v2088 = vsub.s32 0, %v2087
  %v2089 = vrot.slane %v2084, %v2088
  %v2090 = vlaneseq
  %v2091 = vshrl.u32 %v2090, 7
  %v2092 = vsub.s32 1, %v2091
  %v2093 = vrot.slane %v2084, %v2092
  %v2094 = vlaneseq
  %v2095 = vshrl.u32 %v2094, 7
  %v2096 = vsub.s32 2, %v2095
  %v2097 = vrot.slane %v2084, %v2096
  %v2101 = vadd.f32 %v1764, %v2089
  %v2102 = vadd.f32 %v1766, %v2093
  %v2103 = vadd.f32 %v1957, %v2097
  %v2104 = vadd.f32 %v1768, %v2089
  %v2105 = vadd.f32 %v1770, %v2093
  %v2106 = vadd.f32 %v1960, %v2097
  %v2107 = vadd.f32 %v1774, %v2089
  %v2108 = vadd.f32 %v1776, %v2093
  %v2109 = vadd.f32 %v1965, %v2097
  %v2110 = vadd.f32 %v1778, %v2089
  %v2111 = vadd.f32 %v1780, %v2093
  %v2112 = vadd.f32 %v1968, %v2097
  %v2113 = vadd.f32 %v1784, %v2089
  %v2114 = vadd.f32 %v1786, %v2093
  %v2115 = vadd.f32 %v1973, %v2097
  %v2116 = vadd.f32 %v1788, %v2089
  %v2117 = vadd.f32 %v1790, %v2093
  %v2118 = vadd.f32 %v1976, %v2097
  %v2119 = vadd.f32 %v1794, %v2089
  %v2120 = vadd.f32 %v1796, %v2093
  %v2121 = vadd.f32 %v1981, %v2097
  %v2122 = vadd.f32 %v1798, %v2089
  %v2123 = vadd.f32 %v1800, %v2093
  %v2124 = vadd.f32 %v1984, %v2097
  %v2125 = vadd.f32 %v1804, %v2089
  %v2126 = vadd.f32 %v1806, %v2093
  %v2127 = vadd.f32 %v1989, %v2097
  %v2128 = vadd.f32 %v1808, %v2089
  %v2129 = vadd.f32 %v1810, %v2093
  %v2130 = vadd.f32 %v1992, %v2097
  %v2131 = vadd.f32 %v1814, %v2089
  %v2132 = vadd.f32 %v1816, %v2093
  %v2133 = vadd.f32 %v1997, %v2097
  %v2134 = vadd.f32 %v1818, %v2089
  %v2135 = vadd.f32 %v1820, %v2093
  %v2136 = vadd.f32 %v2000, %v2097
  %v2137 = vadd.f32 %v1824, %v2089
  %v2138 = vadd.f32 %v1826, %v2093
  %v2139 = vadd.f32 %v2005, %v2097
  %v2140 = vadd.f32 %v1828, %v2089
  %v2141 = vadd.f32 %v1830, %v2093
  %v2142 = vadd.f32 %v2008, %v2097
  %v2143 = vadd.f32 %v1834, %v2089
  %v2144 = vadd.f32 %v1836, %v2093
  %v2145 = vadd.f32 %v2013, %v2097
  %v2146 = vadd.f32 %v1838, %v2089
  %v2147 = vadd.f32 %v1840, %v2093
  %v2148 = vadd.f32 %v2016, %v2097
  %v2149 = vadd.f32 %v1844, %v2089
  %v2150 = vadd.f32 %v1846, %v2093
  %v2151 = vadd.f32 %v2021, %v2097
  %v2152 = vadd.f32 %v1848, %v2089
  %v2153 = vadd.f32 %v1850, %v2093
  %v2154 = vadd.f32 %v2024, %v2097
  %v2155 = vadd.f32 %v1854, %v2089
  %v2156 = vadd.f32 %v1856, %v2093
  %v2157 = vadd.f32 %v2029, %v2097
  %v2158 = vadd.f32 %v1858, %v2089
  %v2159 = vadd.f32 %v1860, %v2093
  %v2160 = vadd.f32 %v2032, %v2097
  %v2161 = vadd.f32 %v1864, %v2089
  %v2162 = vadd.f32 %v1866, %v2093
  %v2163 = vadd.f32 %v2037, %v2097
  %v2164 = vadd.f32 %v1868, %v2089
  %v2165 = vadd.f32 %v1870, %v2093
  %v2166 = vadd.f32 %v2040, %v2097
  %v2167 = vadd.f32 %v1874, %v2089
  %v2168 = vadd.f32 %v1876, %v2093
  %v2169 = vadd.f32 %v2045, %v2097
  %v2170 = vadd.f32 %v1878, %v2089
  %v2171 = vadd.f32 %v1880, %v2093
  %v2172 = vadd.f32 %v2048, %v2097
  %v2173 = vadd.f32 %v1884, %v2089
  %v2174 = vadd.f32 %v1886, %v2093
  %v2175 = vadd.f32 %v2053, %v2097
  %v2176 = vadd.f32 %v1888, %v2089
  %v2177 = vadd.f32 %v1890, %v2093
  %v2178 = vadd.f32 %v2056, %v2097
  %v2179 = vadd.f32 %v1894, %v2089
  %v2180 = vadd.f32 %v1896, %v2093
  %v2181 = vadd.f32 %v2061, %v2097
  %v2182 = vadd.f32 %v1898, %v2089
  %v2183 = vadd.f32 %v1900, %v2093
  %v2184 = vadd.f32 %v2064, %v2097
  %v2185 = vadd.f32 %v1904, %v2089
  %v2186 = vadd.f32 %v1906, %v2093
  %v2187 = vadd.f32 %v2069, %v2097
  %v2188 = vadd.f32 %v1908, %v2089
  %v2189 = vadd.f32 %v1910, %v2093
  %v2190 = vadd.f32 %v2072, %v2097
  %v2191 = vadd.f32 %v1914, %v2089
  %v2192 = vadd.f32 %v1916, %v2093
  %v2193 = vadd.f32 %v2077, %v2097
  %v2194 = vadd.f32 %v1918, %v2089
  %v2195 = vadd.f32 %v1920, %v2093
  %v2196 = vadd.f32 %v2080, %v2097
  %v2197 = vmax.f32 %v2101, 0.0
  %v2198 = vmax.f32 %v2102, 0.0
  %v2199 = vmax.f32 %v2103, 0.0
  %v2200 = vmax.f32 %v2104, 0.0
  %v2201 = vmax.f32 %v2105, 0.0
  %v2202 = vmax.f32 %v2106, 0.0
  %v2203 = vmax.f32 %v2107, 0.0
  %v2204 = vmax.f32 %v2108, 0.0
  %v2205 = vmax.f32 %v2109, 0.0
  %v2206 = vmax.f32 %v2110, 0.0
  %v2207 = vmax.f32 %v2111, 0.0
  %v2208 = vmax.f32 %v2112, 0.0
  %v2209 = vmax.f32 %v2113, 0.0
  %v2210 = vmax.f32 %v2114, 0.0
  %v2211 = vmax.f32 %v2115, 0.0
  %v2212 = vmax.f32 %v2116, 0.0
  %v2213 = vmax.f32 %v2117, 0.0
  %v2214 = vmax.f32 %v2118, 0.0
  %v2215 = vmax.f32 %v2119, 0.0
  %v2216 = vmax.f32 %v2120, 0.0
  %v2217 = vmax.f32 %v2121, 0.0
  %v2218 = vmax.f32 %v2122, 0.0
  %v2219 = vmax.f32 %v2123, 0.0
  %v2220 = vmax.f32 %v2124, 0.0
  %v2221 = vmax.f32 %v2125, 0.0
  %v2222 = vmax.f32 %v2126, 0.0
  %v2223 = vmax.f32 %v2127, 0.0
  %v2224 = vmax.f32 %v2128, 0.0
  %v2225 = vmax.f32 %v2129, 0.0
  %v2226 = vmax.f32 %v2130, 0.0
  %v2227 = vmax.f32 %v2131, 0.0
  %v2228 = vmax.f32 %v2132, 0.0
  %v2229 = vmax.f32 %v2133, 0.0
  %v2230 = vmax.f32 %v2134, 0.0
  %v2231 = vmax.f32 %v2135, 0.0
  %v2232 = vmax.f32 %v2136, 0.0
  %v2233 = vmax.f32 %v2137, 0.0
  %v2234 = vmax.f32 %v2138, 0.0
  %v2235 = vmax.f32 %v2139, 0.0
  %v2236 = vmax.f32 %v2140, 0.0
  %v2237 = vmax.f32 %v2141, 0.0
  %v2238 = vmax.f32 %v2142, 0.0
  %v2239 = vmax.f32 %v2143, 0.0
  %v2240 = vmax.f32 %v2144, 0.0
  %v2241 = vmax.f32 %v2145, 0.0
  %v2242 = vmax.f32 %v2146, 0.0
  %v2243 = vmax.f32 %v2147, 0.0
  %v2244 = vmax.f32 %v2148, 0.0
  %v2245 = vmax.f32 %v2149, 0.0
  %v2246 = vmax.f32 %v2150, 0.0
  %v2247 = vmax.f32 %v2151, 0.0
  %v2248 = vmax.f32 %v2152, 0.0
  %v2249 = vmax.f32 %v2153, 0.0
  %v2250 = vmax.f32 %v2154, 0.0
  %v2251 = vmax.f32 %v2155, 0.0
  %v2252 = vmax.f32 %v2156, 0.0
  %v2253 = vmax.f32 %v2157, 0.0
  %v2254 = vmax.f32 %v2158, 0.0
  %v2255 = vmax.f32 %v2159, 0.0
  %v2256 = vmax.f32 %v2160, 0.0
  %v2257 = vmax.f32 %v2161, 0.0
  %v2258 = vmax.f32 %v2162, 0.0
  %v2259 = vmax.f32 %v2163, 0.0
  %v2260 = vmax.f32 %v2164, 0.0
  %v2261 = vmax.f32 %v2165, 0.0
  %v2262 = vmax.f32 %v2166, 0.0
  %v2263 = vmax.f32 %v2167, 0.0
  %v2264 = vmax.f32 %v2168, 0.0
  %v2265 = vmax.f32 %v2169, 0.0
  %v2266 = vmax.f32 %v2170, 0.0
  %v2267 = vmax.f32 %v2171, 0.0
  %v2268 = vmax.f32 %v2172, 0.0
  %v2269 = vmax.f32 %v2173, 0.0
  %v2270 = vmax.f32 %v2174, 0.0
  %v2271 = vmax.f32 %v2175, 0.0
  %v2272 = vmax.f32 %v2176, 0.0
  %v2273 = vmax.f32 %v2177, 0.0
  %v2274 = vmax.f32 %v2178, 0.0
  %v2275 = vmax.f32 %v2179, 0.0
  %v2276 = vmax.f32 %v2180, 0.0
  %v2277 = vmax.f32 %v2181, 0.0
  %v2278 = vmax.f32 %v2182, 0.0
  %v2279 = vmax.f32 %v2183, 0.0
  %v2280 = vmax.f32 %v2184, 0.0
  %v2281 = vmax.f32 %v2185, 0.0
  %v2282 = vmax.f32 %v2186, 0.0
  %v2283 = vmax.f32 %v2187, 0.0
  %v2284 = vmax.f32 %v2188, 0.0
  %v2285 = vmax.f32 %v2189, 0.0
  %v2286 = vmax.f32 %v2190, 0.0
  %v2287 = vmax.f32 %v2191, 0.0
  %v2288 = vmax.f32 %v2192, 0.0
  %v2289 = vmax.f32 %v2193, 0.0
  %v2290 = vmax.f32 %v2194, 0.0
  %v2291 = vmax.f32 %v2195, 0.0
  %v2292 = vmax.f32 %v2196, 0.0
  %v2293 = vpack.c.bf16 %v2200, %v2197
  %v2294 = vpack.c.bf16 %v2201, %v2198
  %v2295 = vpack.c.bf16 %v2202, %v2199
  %v2296 = vpack.c.bf16 %v2206, %v2203
  %v2297 = vpack.c.bf16 %v2207, %v2204
  %v2298 = vpack.c.bf16 %v2208, %v2205
  %v2299 = vpack.c.bf16 %v2212, %v2209
  %v2300 = vpack.c.bf16 %v2213, %v2210
  %v2301 = vpack.c.bf16 %v2214, %v2211
  %v2302 = vpack.c.bf16 %v2218, %v2215
  %v2303 = vpack.c.bf16 %v2219, %v2216
  %v2304 = vpack.c.bf16 %v2220, %v2217
  %v2305 = vpack.c.bf16 %v2224, %v2221
  %v2306 = vpack.c.bf16 %v2225, %v2222
  %v2307 = vpack.c.bf16 %v2226, %v2223
  %v2308 = vpack.c.bf16 %v2230, %v2227
  %v2309 = vpack.c.bf16 %v2231, %v2228
  %v2310 = vpack.c.bf16 %v2232, %v2229
  %v2311 = vpack.c.bf16 %v2236, %v2233
  %v2312 = vpack.c.bf16 %v2237, %v2234
  %v2313 = vpack.c.bf16 %v2238, %v2235
  %v2314 = vpack.c.bf16 %v2242, %v2239
  %v2315 = vpack.c.bf16 %v2243, %v2240
  %v2316 = vpack.c.bf16 %v2244, %v2241
  %v2317 = vpack.c.bf16 %v2248, %v2245
  %v2318 = vpack.c.bf16 %v2249, %v2246
  %v2319 = vpack.c.bf16 %v2250, %v2247
  %v2320 = vpack.c.bf16 %v2254, %v2251
  %v2321 = vpack.c.bf16 %v2255, %v2252
  %v2322 = vpack.c.bf16 %v2256, %v2253
  %v2323 = vpack.c.bf16 %v2260, %v2257
  %v2324 = vpack.c.bf16 %v2261, %v2258
  %v2325 = vpack.c.bf16 %v2262, %v2259
  %v2326 = vpack.c.bf16 %v2266, %v2263
  %v2327 = vpack.c.bf16 %v2267, %v2264
  %v2328 = vpack.c.bf16 %v2268, %v2265
  %v2329 = vpack.c.bf16 %v2272, %v2269
  %v2330 = vpack.c.bf16 %v2273, %v2270
  %v2331 = vpack.c.bf16 %v2274, %v2271
  %v2332 = vpack.c.bf16 %v2278, %v2275
  %v2333 = vpack.c.bf16 %v2279, %v2276
  %v2334 = vpack.c.bf16 %v2280, %v2277
  %v2335 = vpack.c.bf16 %v2284, %v2281
  %v2336 = vpack.c.bf16 %v2285, %v2282
  %v2337 = vpack.c.bf16 %v2286, %v2283
  %v2338 = vpack.c.bf16 %v2290, %v2287
  %v2339 = vpack.c.bf16 %v2291, %v2288
  %v2340 = vpack.c.bf16 %v2292, %v2289
  %v2341 = vld [vmem:[%s4] sm:$0xff]
  %v2342 = vld [vmem:[%s4 + $0x8] sm:$0xff]
  %v2343 = vld [vmem:[%s4 + $0x10] sm:$0xff]
  %v2344 = vld [vmem:[%s4 + $0x18] sm:$0xff]
  %v2345 = vld [vmem:[%s4 + $0x20] sm:$0xff]
  %v2346 = vld [vmem:[%s4 + $0x28] sm:$0xff]
  %v2347 = vld [vmem:[%s4 + $0x30] sm:$0xff]
  %v2348 = vld [vmem:[%s4 + $0x38] sm:$0xff]
  %v2349 = vld [vmem:[%s4 + $0x40] sm:$0xff]
  %v2350 = vld [vmem:[%s4 + $0x48] sm:$0xff]
  %v2351 = vld [vmem:[%s4 + $0x50] sm:$0xff]
  %v2352 = vld [vmem:[%s4 + $0x58] sm:$0xff]
  %v2353 = vld [vmem:[%s4 + $0x60] sm:$0xff]
  %v2354 = vld [vmem:[%s4 + $0x68] sm:$0xff]
  %v2355 = vld [vmem:[%s4 + $0x70] sm:$0xff]
  %v2356 = vld [vmem:[%s4 + $0x78] sm:$0xff]
  %v2357 = vld [vmem:[%s4 + $0x80] sm:$0xff]
  %v2358 = vld [vmem:[%s4 + $0x88] sm:$0xff]
  %v2359 = vld [vmem:[%s4 + $0x90] sm:$0xff]
  %v2360 = vld [vmem:[%s4 + $0x98] sm:$0xff]
  %v2361 = vld [vmem:[%s4 + $0xa0] sm:$0xff]
  %v2362 = vld [vmem:[%s4 + $0xa8] sm:$0xff]
  %v2363 = vld [vmem:[%s4 + $0xb0] sm:$0xff]
  %v2364 = vld [vmem:[%s4 + $0xb8] sm:$0xff]
  %v2365 = vld [vmem:[%s4 + $0xc0] sm:$0xff]
  %v2366 = vld [vmem:[%s4 + $0xc8] sm:$0xff]
  %v2367 = vld [vmem:[%s4 + $0xd0] sm:$0xff]
  %v2368 = vld [vmem:[%s4 + $0xd8] sm:$0xff]
  %v2369 = vld [vmem:[%s4 + $0xe0] sm:$0xff]
  %v2370 = vld [vmem:[%s4 + $0xe8] sm:$0xff]
  %v2371 = vld [vmem:[%s4 + $0xf0] sm:$0xff]
  %v2372 = vld [vmem:[%s4 + $0xf8] sm:$0xff]
  %v2373 = vld [vmem:[%s4 + $0x100] sm:$0xff]
  %v2374 = vld [vmem:[%s4 + $0x108] sm:$0xff]
  %v2375 = vld [vmem:[%s4 + $0x110] sm:$0xff]
  %v2376 = vld [vmem:[%s4 + $0x118] sm:$0xff]
  %v2377 = vld [vmem:[%s4 + $0x120] sm:$0xff]
  %v2378 = vld [vmem:[%s4 + $0x128] sm:$0xff]
  %v2379 = vld [vmem:[%s4 + $0x130] sm:$0xff]
  %v2380 = vld [vmem:[%s4 + $0x138] sm:$0xff]
  %v2381 = vld [vmem:[%s4 + $0x140] sm:$0xff]
  %v2382 = vld [vmem:[%s4 + $0x148] sm:$0xff]
  %v2383 = vld [vmem:[%s4 + $0x150] sm:$0xff]
  %v2384 = vld [vmem:[%s4 + $0x158] sm:$0xff]
  %v2385 = vld [vmem:[%s4 + $0x160] sm:$0xff]
  %v2386 = vld [vmem:[%s4 + $0x168] sm:$0xff]
  %v2387 = vld [vmem:[%s4 + $0x170] sm:$0xff]
  %v2388 = vld [vmem:[%s4 + $0x178] sm:$0xff]
  %s2389 = scalar_lea.vmem %s5, 3
  %v2390 = vld [vmem:[%s2389] ss:$8 sm:$0x3]
  %v2392 = vlaneseq
  %v2393 = vshrl.u32 %v2392, 7
  %v2394 = vsub.s32 0, %v2393
  %v2395 = vrot.slane %v2390, %v2394
  %v2396 = vlaneseq
  %v2397 = vshrl.u32 %v2396, 7
  %v2398 = vsub.s32 1, %v2397
  %v2399 = vrot.slane %v2390, %v2398
  %v2450 = vunpack.c.l.b16 %v2341
  %v2451 = vunpack.c.h.b16 %v2341
  %v2452 = vunpack.c.l.b16 %v2342
  %v2453 = vunpack.c.h.b16 %v2342
  %v2454 = vunpack.c.l.b16 %v2343
  %v2455 = vunpack.c.h.b16 %v2343
  %v2456 = vunpack.c.l.b16 %v2344
  %v2457 = vunpack.c.h.b16 %v2344
  %v2458 = vunpack.c.l.b16 %v2345
  %v2459 = vunpack.c.h.b16 %v2345
  %v2460 = vunpack.c.l.b16 %v2346
  %v2461 = vunpack.c.h.b16 %v2346
  %v2462 = vunpack.c.l.b16 %v2347
  %v2463 = vunpack.c.h.b16 %v2347
  %v2464 = vunpack.c.l.b16 %v2348
  %v2465 = vunpack.c.h.b16 %v2348
  %v2466 = vunpack.c.l.b16 %v2349
  %v2467 = vunpack.c.h.b16 %v2349
  %v2468 = vunpack.c.l.b16 %v2350
  %v2469 = vunpack.c.h.b16 %v2350
  %v2470 = vunpack.c.l.b16 %v2351
  %v2471 = vunpack.c.h.b16 %v2351
  %v2472 = vunpack.c.l.b16 %v2352
  %v2473 = vunpack.c.h.b16 %v2352
  %v2474 = vunpack.c.l.b16 %v2353
  %v2475 = vunpack.c.h.b16 %v2353
  %v2476 = vunpack.c.l.b16 %v2354
  %v2477 = vunpack.c.h.b16 %v2354
  %v2478 = vunpack.c.l.b16 %v2355
  %v2479 = vunpack.c.h.b16 %v2355
  %v2480 = vunpack.c.l.b16 %v2356
  %v2481 = vunpack.c.h.b16 %v2356
  %v2482 = vunpack.c.l.b16 %v2357
  %v2483 = vunpack.c.h.b16 %v2357
  %v2484 = vunpack.c.l.b16 %v2358
  %v2485 = vunpack.c.h.b16 %v2358
  %v2486 = vunpack.c.l.b16 %v2359
  %v2487 = vunpack.c.h.b16 %v2359
  %v2488 = vunpack.c.l.b16 %v2360
  %v2489 = vunpack.c.h.b16 %v2360
  %v2490 = vunpack.c.l.b16 %v2361
  %v2491 = vunpack.c.h.b16 %v2361
  %v2492 = vunpack.c.l.b16 %v2362
  %v2493 = vunpack.c.h.b16 %v2362
  %v2494 = vunpack.c.l.b16 %v2363
  %v2495 = vunpack.c.h.b16 %v2363
  %v2496 = vunpack.c.l.b16 %v2364
  %v2497 = vunpack.c.h.b16 %v2364
  %v2498 = vunpack.c.l.b16 %v2365
  %v2499 = vunpack.c.h.b16 %v2365
  %v2500 = vunpack.c.l.b16 %v2366
  %v2501 = vunpack.c.h.b16 %v2366
  %v2502 = vunpack.c.l.b16 %v2367
  %v2503 = vunpack.c.h.b16 %v2367
  %v2504 = vunpack.c.l.b16 %v2368
  %v2505 = vunpack.c.h.b16 %v2368
  %v2506 = vunpack.c.l.b16 %v2369
  %v2507 = vunpack.c.h.b16 %v2369
  %v2508 = vunpack.c.l.b16 %v2370
  %v2509 = vunpack.c.h.b16 %v2370
  %v2510 = vunpack.c.l.b16 %v2371
  %v2511 = vunpack.c.h.b16 %v2371
  %v2512 = vunpack.c.l.b16 %v2372
  %v2513 = vunpack.c.h.b16 %v2372
  %v2514 = vunpack.c.l.b16 %v2373
  %v2515 = vunpack.c.h.b16 %v2373
  %v2516 = vunpack.c.l.b16 %v2374
  %v2517 = vunpack.c.h.b16 %v2374
  %v2518 = vunpack.c.l.b16 %v2375
  %v2519 = vunpack.c.h.b16 %v2375
  %v2520 = vunpack.c.l.b16 %v2376
  %v2521 = vunpack.c.h.b16 %v2376
  %v2522 = vunpack.c.l.b16 %v2377
  %v2523 = vunpack.c.h.b16 %v2377
  %v2524 = vunpack.c.l.b16 %v2378
  %v2525 = vunpack.c.h.b16 %v2378
  %v2526 = vunpack.c.l.b16 %v2379
  %v2527 = vunpack.c.h.b16 %v2379
  %v2528 = vunpack.c.l.b16 %v2380
  %v2529 = vunpack.c.h.b16 %v2380
  %v2530 = vunpack.c.l.b16 %v2381
  %v2531 = vunpack.c.h.b16 %v2381
  %v2532 = vunpack.c.l.b16 %v2382
  %v2533 = vunpack.c.h.b16 %v2382
  %v2534 = vunpack.c.l.b16 %v2383
  %v2535 = vunpack.c.h.b16 %v2383
  %v2536 = vunpack.c.l.b16 %v2384
  %v2537 = vunpack.c.h.b16 %v2384
  %v2538 = vunpack.c.l.b16 %v2385
  %v2539 = vunpack.c.h.b16 %v2385
  %v2540 = vunpack.c.l.b16 %v2386
  %v2541 = vunpack.c.h.b16 %v2386
  %v2542 = vunpack.c.l.b16 %v2387
  %v2543 = vunpack.c.h.b16 %v2387
  %v2544 = vunpack.c.l.b16 %v2388
  %v2545 = vunpack.c.h.b16 %v2388
  %v2546 = vpack.c.b16 %v2452, %v2450
  %v2547 = vpack.c.b16 %v2453, %v2451
  %v2548 = vpack.c.b16 %v2456, %v2454
  %v2549 = vpack.c.b16 %v2457, %v2455
  %v2550 = vpack.c.b16 %v2460, %v2458
  %v2551 = vpack.c.b16 %v2461, %v2459
  %v2552 = vpack.c.b16 %v2464, %v2462
  %v2553 = vpack.c.b16 %v2465, %v2463
  %v2554 = vpack.c.b16 %v2468, %v2466
  %v2555 = vpack.c.b16 %v2469, %v2467
  %v2556 = vpack.c.b16 %v2472, %v2470
  %v2557 = vpack.c.b16 %v2473, %v2471
  %v2558 = vpack.c.b16 %v2476, %v2474
  %v2559 = vpack.c.b16 %v2477, %v2475
  %v2560 = vpack.c.b16 %v2480, %v2478
  %v2561 = vpack.c.b16 %v2481, %v2479
  %v2562 = vpack.c.b16 %v2484, %v2482
  %v2563 = vpack.c.b16 %v2485, %v2483
  %v2564 = vpack.c.b16 %v2488, %v2486
  %v2565 = vpack.c.b16 %v2489, %v2487
  %v2566 = vpack.c.b16 %v2492, %v2490
  %v2567 = vpack.c.b16 %v2493, %v2491
  %v2568 = vpack.c.b16 %v2496, %v2494
  %v2569 = vpack.c.b16 %v2497, %v2495
  %v2570 = vpack.c.b16 %v2500, %v2498
  %v2571 = vpack.c.b16 %v2501, %v2499
  %v2572 = vpack.c.b16 %v2504, %v2502
  %v2573 = vpack.c.b16 %v2505, %v2503
  %v2574 = vpack.c.b16 %v2508, %v2506
  %v2575 = vpack.c.b16 %v2509, %v2507
  %v2576 = vpack.c.b16 %v2512, %v2510
  %v2577 = vpack.c.b16 %v2513, %v2511
  %v2578 = vpack.c.b16 %v2516, %v2514
  %v2579 = vpack.c.b16 %v2517, %v2515
  %v2580 = vpack.c.b16 %v2520, %v2518
  %v2581 = vpack.c.b16 %v2521, %v2519
  %v2582 = vpack.c.b16 %v2524, %v2522
  %v2583 = vpack.c.b16 %v2525, %v2523
  %v2584 = vpack.c.b16 %v2528, %v2526
  %v2585 = vpack.c.b16 %v2529, %v2527
  %v2586 = vpack.c.b16 %v2532, %v2530
  %v2587 = vpack.c.b16 %v2533, %v2531
  %v2588 = vpack.c.b16 %v2536, %v2534
  %v2589 = vpack.c.b16 %v2537, %v2535
  %v2590 = vpack.c.b16 %v2540, %v2538
  %v2591 = vpack.c.b16 %v2541, %v2539
  %v2592 = vpack.c.b16 %v2544, %v2542
  %v2593 = vpack.c.b16 %v2545, %v2543
  %2642 = vmatprep.subr.bf16.mxu0 %v2547
  %2643 = vmatpush1.bf16.msra.mxu0 %v2546
  %2644 = vmatprep.subr.bf16.mxu0 %v2549
  %2645 = vmatpush1.bf16.msra.mxu0 %v2548
  %2646 = vmatprep.subr.bf16.mxu0 %v2551
  %2647 = vmatpush1.bf16.msra.mxu0 %v2550
  %2648 = vmatprep.subr.bf16.mxu0 %v2553
  %2649 = vmatpush1.bf16.msra.mxu0 %v2552
  %2650 = vmatprep.subr.bf16.mxu0 %v2555
  %2651 = vmatpush1.bf16.msra.mxu0 %v2554
  %2652 = vmatprep.subr.bf16.mxu0 %v2557
  %2653 = vmatpush1.bf16.msra.mxu0 %v2556
  %2654 = vmatprep.subr.bf16.mxu0 %v2559
  %2655 = vmatpush1.bf16.msra.mxu0 %v2558
  %2656 = vmatprep.subr.bf16.mxu0 %v2561
  %2657 = vmatpush1.bf16.msra.mxu0 %v2560
  %2658 = vmatprep.subr.bf16.mxu0 %v2563
  %2659 = vmatpush1.bf16.msra.mxu0 %v2562
  %2660 = vmatprep.subr.bf16.mxu0 %v2565
  %2661 = vmatpush1.bf16.msra.mxu0 %v2564
  %2662 = vmatprep.subr.bf16.mxu0 %v2567
  %2663 = vmatpush1.bf16.msra.mxu0 %v2566
  %2664 = vmatprep.subr.bf16.mxu0 %v2569
  %2665 = vmatpush1.bf16.msra.mxu0 %v2568
  %2666 = vmatprep.subr.bf16.mxu0 %v2571
  %2667 = vmatpush1.bf16.msra.mxu0 %v2570
  %2668 = vmatprep.subr.bf16.mxu0 %v2573
  %2669 = vmatpush1.bf16.msra.mxu0 %v2572
  %2670 = vmatprep.subr.bf16.mxu0 %v2575
  %2671 = vmatpush1.bf16.msra.mxu0 %v2574
  %2672 = vmatprep.subr.bf16.mxu0 %v2577
  %2673 = vmatpush1.bf16.msra.mxu0 %v2576
  %2674 = vmatprep.mubr.bf16.mxu0 %v2294
  %2675 = vmatmul.mubr.bf16.gmra.mrb[0].mxu0 %v2293
  %v2676 = vpop.f32.mrb[0].mxu0
  %v2677 = vadd.f32 %v2395, %v2676
  %v2678 = vpop.f32.mrb[0].mxu0
  %v2679 = vadd.f32 %v2399, %v2678
  %v2680 = vpop.f32.mrb[0].mxu0
  %v2681 = vadd.f32 %v2395, %v2680
  %v2682 = vpop.f32.mrb[0].mxu0
  %v2683 = vadd.f32 %v2399, %v2682
  %2684 = vmatprep.mubr.bf16.mxu0 %v2297
  %2685 = vmatmul.mubr.bf16.gmra.mrb[0].mxu0 %v2296
  %v2686 = vpop.f32.mrb[0].mxu0
  %v2687 = vadd.f32 %v2395, %v2686
  %v2688 = vpop.f32.mrb[0].mxu0
  %v2689 = vadd.f32 %v2399, %v2688
  %v2690 = vpop.f32.mrb[0].mxu0
  %v2691 = vadd.f32 %v2395, %v2690
  %v2692 = vpop.f32.mrb[0].mxu0
  %v2693 = vadd.f32 %v2399, %v2692
  %2694 = vmatprep.mubr.bf16.mxu0 %v2300
  %2695 = vmatmul.mubr.bf16.gmra.mrb[0].mxu0 %v2299
  %v2696 = vpop.f32.mrb[0].mxu0
  %v2697 = vadd.f32 %v2395, %v2696
  %v2698 = vpop.f32.mrb[0].mxu0
  %v2699 = vadd.f32 %v2399, %v2698
  %v2700 = vpop.f32.mrb[0].mxu0
  %v2701 = vadd.f32 %v2395, %v2700
  %v2702 = vpop.f32.mrb[0].mxu0
  %v2703 = vadd.f32 %v2399, %v2702
  %2704 = vmatprep.mubr.bf16.mxu0 %v2303
  %2705 = vmatmul.mubr.bf16.gmra.mrb[0].mxu0 %v2302
  %v2706 = vpop.f32.mrb[0].mxu0
  %v2707 = vadd.f32 %v2395, %v2706
  %v2708 = vpop.f32.mrb[0].mxu0
  %v2709 = vadd.f32 %v2399, %v2708
  %v2710 = vpop.f32.mrb[0].mxu0
  %v2711 = vadd.f32 %v2395, %v2710
  %v2712 = vpop.f32.mrb[0].mxu0
  %v2713 = vadd.f32 %v2399, %v2712
  %2714 = vmatprep.mubr.bf16.mxu0 %v2306
  %2715 = vmatmul.mubr.bf16.gmra.mrb[0].mxu0 %v2305
  %v2716 = vpop.f32.mrb[0].mxu0
  %v2717 = vadd.f32 %v2395, %v2716
  %v2718 = vpop.f32.mrb[0].mxu0
  %v2719 = vadd.f32 %v2399, %v2718
  %v2720 = vpop.f32.mrb[0].mxu0
  %v2721 = vadd.f32 %v2395, %v2720
  %v2722 = vpop.f32.mrb[0].mxu0
  %v2723 = vadd.f32 %v2399, %v2722
  %2724 = vmatprep.mubr.bf16.mxu0 %v2309
  %2725 = vmatmul.mubr.bf16.gmra.mrb[0].mxu0 %v2308
  %v2726 = vpop.f32.mrb[0].mxu0
  %v2727 = vadd.f32 %v2395, %v2726
  %v2728 = vpop.f32.mrb[0].mxu0
  %v2729 = vadd.f32 %v2399, %v2728
  %v2730 = vpop.f32.mrb[0].mxu0
  %v2731 = vadd.f32 %v2395, %v2730
  %v2732 = vpop.f32.mrb[0].mxu0
  %v2733 = vadd.f32 %v2399, %v2732
  %2734 = vmatprep.mubr.bf16.mxu0 %v2312
  %2735 = vmatmul.mubr.bf16.gmra.mrb[0].mxu0 %v2311
  %v2736 = vpop.f32.mrb[0].mxu0
  %v2737 = vadd.f32 %v2395, %v2736
  %v2738 = vpop.f32.mrb[0].mxu0
  %v2739 = vadd.f32 %v2399, %v2738
  %v2740 = vpop.f32.mrb[0].mxu0
  %v2741 = vadd.f32 %v2395, %v2740
  %v2742 = vpop.f32.mrb[0].mxu0
  %v2743 = vadd.f32 %v2399, %v2742
  %2744 = vmatprep.mubr.bf16.mxu0 %v2315
  %2745 = vmatmul.mubr.bf16.gmra.mrb[0].mxu0 %v2314
  %v2746 = vpop.f32.mrb[0].mxu0
  %v2747 = vadd.f32 %v2395, %v2746
  %v2748 = vpop.f32.mrb[0].mxu0
  %v2749 = vadd.f32 %v2399, %v2748
  %v2750 = vpop.f32.mrb[0].mxu0
  %v2751 = vadd.f32 %v2395, %v2750
  %v2752 = vpop.f32.mrb[0].mxu0
  %v2753 = vadd.f32 %v2399, %v2752
  %2754 = vmatprep.mubr.bf16.mxu0 %v2318
  %2755 = vmatmul.mubr.bf16.gmra.mrb[0].mxu0 %v2317
  %v2756 = vpop.f32.mrb[0].mxu0
  %v2757 = vadd.f32 %v2395, %v2756
  %v2758 = vpop.f32.mrb[0].mxu0
  %v2759 = vadd.f32 %v2399, %v2758
  %v2760 = vpop.f32.mrb[0].mxu0
  %v2761 = vadd.f32 %v2395, %v2760
  %v2762 = vpop.f32.mrb[0].mxu0
  %v2763 = vadd.f32 %v2399, %v2762
  %2764 = vmatprep.mubr.bf16.mxu0 %v2321
  %2765 = vmatmul.mubr.bf16.gmra.mrb[0].mxu0 %v2320
  %v2766 = vpop.f32.mrb[0].mxu0
  %v2767 = vadd.f32 %v2395, %v2766
  %v2768 = vpop.f32.mrb[0].mxu0
  %v2769 = vadd.f32 %v2399, %v2768
  %v2770 = vpop.f32.mrb[0].mxu0
  %v2771 = vadd.f32 %v2395, %v2770
  %v2772 = vpop.f32.mrb[0].mxu0
  %v2773 = vadd.f32 %v2399, %v2772
  %2774 = vmatprep.mubr.bf16.mxu0 %v2324
  %2775 = vmatmul.mubr.bf16.gmra.mrb[0].mxu0 %v2323
  %v2776 = vpop.f32.mrb[0].mxu0
  %v2777 = vadd.f32 %v2395, %v2776
  %v2778 = vpop.f32.mrb[0].mxu0
  %v2779 = vadd.f32 %v2399, %v2778
  %v2780 = vpop.f32.mrb[0].mxu0
  %v2781 = vadd.f32 %v2395, %v2780
  %v2782 = vpop.f32.mrb[0].mxu0
  %v2783 = vadd.f32 %v2399, %v2782
  %2784 = vmatprep.mubr.bf16.mxu0 %v2327
  %2785 = vmatmul.mubr.bf16.gmra.mrb[0].mxu0 %v2326
  %v2786 = vpop.f32.mrb[0].mxu0
  %v2787 = vadd.f32 %v2395, %v2786
  %v2788 = vpop.f32.mrb[0].mxu0
  %v2789 = vadd.f32 %v2399, %v2788
  %v2790 = vpop.f32.mrb[0].mxu0
  %v2791 = vadd.f32 %v2395, %v2790
  %v2792 = vpop.f32.mrb[0].mxu0
  %v2793 = vadd.f32 %v2399, %v2792
  %2794 = vmatprep.mubr.bf16.mxu0 %v2330
  %2795 = vmatmul.mubr.bf16.gmra.mrb[0].mxu0 %v2329
  %v2796 = vpop.f32.mrb[0].mxu0
  %v2797 = vadd.f32 %v2395, %v2796
  %v2798 = vpop.f32.mrb[0].mxu0
  %v2799 = vadd.f32 %v2399, %v2798
  %v2800 = vpop.f32.mrb[0].mxu0
  %v2801 = vadd.f32 %v2395, %v2800
  %v2802 = vpop.f32.mrb[0].mxu0
  %v2803 = vadd.f32 %v2399, %v2802
  %2804 = vmatprep.mubr.bf16.mxu0 %v2333
  %2805 = vmatmul.mubr.bf16.gmra.mrb[0].mxu0 %v2332
  %v2806 = vpop.f32.mrb[0].mxu0
  %v2807 = vadd.f32 %v2395, %v2806
  %v2808 = vpop.f32.mrb[0].mxu0
  %v2809 = vadd.f32 %v2399, %v2808
  %v2810 = vpop.f32.mrb[0].mxu0
  %v2811 = vadd.f32 %v2395, %v2810
  %v2812 = vpop.f32.mrb[0].mxu0
  %v2813 = vadd.f32 %v2399, %v2812
  %2814 = vmatprep.mubr.bf16.mxu0 %v2336
  %2815 = vmatmul.mubr.bf16.gmra.mrb[0].mxu0 %v2335
  %v2816 = vpop.f32.mrb[0].mxu0
  %v2817 = vadd.f32 %v2395, %v2816
  %v2818 = vpop.f32.mrb[0].mxu0
  %v2819 = vadd.f32 %v2399, %v2818
  %v2820 = vpop.f32.mrb[0].mxu0
  %v2821 = vadd.f32 %v2395, %v2820
  %v2822 = vpop.f32.mrb[0].mxu0
  %v2823 = vadd.f32 %v2399, %v2822
  %2824 = vmatprep.mubr.bf16.mxu0 %v2339
  %2825 = vmatmul.mubr.bf16.gmra.mrb[0].mxu0 %v2338
  %v2826 = vpop.f32.mrb[0].mxu0
  %v2827 = vadd.f32 %v2395, %v2826
  %v2828 = vpop.f32.mrb[0].mxu0
  %v2829 = vadd.f32 %v2399, %v2828
  %v2830 = vpop.f32.mrb[0].mxu0
  %v2831 = vadd.f32 %v2395, %v2830
  %v2832 = vpop.f32.mrb[0].mxu0
  %v2833 = vadd.f32 %v2399, %v2832
  %2834 = vdwg.mxu0
  %2835 = vmatprep.subr.bf16.mxu0 %v2579
  %2836 = vmatpush1.bf16.msra.mxu0 %v2578
  %2837 = vmatprep.subr.bf16.mxu0 %v2581
  %2838 = vmatpush1.bf16.msra.mxu0 %v2580
  %2839 = vmatprep.subr.bf16.mxu0 %v2583
  %2840 = vmatpush1.bf16.msra.mxu0 %v2582
  %2841 = vmatprep.subr.bf16.mxu0 %v2585
  %2842 = vmatpush1.bf16.msra.mxu0 %v2584
  %2843 = vmatprep.subr.bf16.mxu0 %v2587
  %2844 = vmatpush1.bf16.msra.mxu0 %v2586
  %2845 = vmatprep.subr.bf16.mxu0 %v2589
  %2846 = vmatpush1.bf16.msra.mxu0 %v2588
  %2847 = vmatprep.subr.bf16.mxu0 %v2591
  %2848 = vmatpush1.bf16.msra.mxu0 %v2590
  %2849 = vmatprep.subr.bf16.mxu0 %v2593
  %2850 = vmatpush1.bf16.msra.mxu0 %v2592
  %2851 = vmatprep.subr.bf16.mxu0 0
  %2852 = vmatpush1.bf16.msra.mxu0 0
  %2853 = vmatprep.subr.bf16.mxu0 0
  %2854 = vmatpush1.bf16.msra.mxu0 0
  %2855 = vmatprep.subr.bf16.mxu0 0
  %2856 = vmatpush1.bf16.msra.mxu0 0
  %2857 = vmatprep.subr.bf16.mxu0 0
  %2858 = vmatpush1.bf16.msra.mxu0 0
  %2859 = vmatprep.subr.bf16.mxu0 0
  %2860 = vmatpush1.bf16.msra.mxu0 0
  %2861 = vmatprep.subr.bf16.mxu0 0
  %2862 = vmatpush1.bf16.msra.mxu0 0
  %2863 = vmatprep.subr.bf16.mxu0 0
  %2864 = vmatpush1.bf16.msra.mxu0 0
  %2865 = vmatprep.subr.bf16.mxu0 0
  %2866 = vmatpush1.bf16.msra.mxu0 0
  %2867 = vmatprep.mubr.bf16.mxu0 0
  %2868 = vmatmul.mubr.bf16.gmra.mrb[0].mxu0 %v2295
  %v2869 = vpop.f32.mrb[0].mxu0
  %v2870 = vadd.f32 %v2677, %v2869
  %v2871 = vpop.f32.mrb[0].mxu0
  %v2872 = vadd.f32 %v2679, %v2871
  %v2873 = vpop.f32.mrb[0].mxu0
  %v2874 = vadd.f32 %v2681, %v2873
  %v2875 = vpop.f32.mrb[0].mxu0
  %v2876 = vadd.f32 %v2683, %v2875
  %2877 = vmatprep.mubr.bf16.mxu0 0
  %2878 = vmatmul.mubr.bf16.gmra.mrb[0].mxu0 %v2298
  %v2879 = vpop.f32.mrb[0].mxu0
  %v2880 = vadd.f32 %v2687, %v2879
  %v2881 = vpop.f32.mrb[0].mxu0
  %v2882 = vadd.f32 %v2689, %v2881
  %v2883 = vpop.f32.mrb[0].mxu0
  %v2884 = vadd.f32 %v2691, %v2883
  %v2885 = vpop.f32.mrb[0].mxu0
  %v2886 = vadd.f32 %v2693, %v2885
  %2887 = vmatprep.mubr.bf16.mxu0 0
  %2888 = vmatmul.mubr.bf16.gmra.mrb[0].mxu0 %v2301
  %v2889 = vpop.f32.mrb[0].mxu0
  %v2890 = vadd.f32 %v2697, %v2889
  %v2891 = vpop.f32.mrb[0].mxu0
  %v2892 = vadd.f32 %v2699, %v2891
  %v2893 = vpop.f32.mrb[0].mxu0
  %v2894 = vadd.f32 %v2701, %v2893
  %v2895 = vpop.f32.mrb[0].mxu0
  %v2896 = vadd.f32 %v2703, %v2895
  %2897 = vmatprep.mubr.bf16.mxu0 0
  %2898 = vmatmul.mubr.bf16.gmra.mrb[0].mxu0 %v2304
  %v2899 = vpop.f32.mrb[0].mxu0
  %v2900 = vadd.f32 %v2707, %v2899
  %v2901 = vpop.f32.mrb[0].mxu0
  %v2902 = vadd.f32 %v2709, %v2901
  %v2903 = vpop.f32.mrb[0].mxu0
  %v2904 = vadd.f32 %v2711, %v2903
  %v2905 = vpop.f32.mrb[0].mxu0
  %v2906 = vadd.f32 %v2713, %v2905
  %2907 = vmatprep.mubr.bf16.mxu0 0
  %2908 = vmatmul.mubr.bf16.gmra.mrb[0].mxu0 %v2307
  %v2909 = vpop.f32.mrb[0].mxu0
  %v2910 = vadd.f32 %v2717, %v2909
  %v2911 = vpop.f32.mrb[0].mxu0
  %v2912 = vadd.f32 %v2719, %v2911
  %v2913 = vpop.f32.mrb[0].mxu0
  %v2914 = vadd.f32 %v2721, %v2913
  %v2915 = vpop.f32.mrb[0].mxu0
  %v2916 = vadd.f32 %v2723, %v2915
  %2917 = vmatprep.mubr.bf16.mxu0 0
  %2918 = vmatmul.mubr.bf16.gmra.mrb[0].mxu0 %v2310
  %v2919 = vpop.f32.mrb[0].mxu0
  %v2920 = vadd.f32 %v2727, %v2919
  %v2921 = vpop.f32.mrb[0].mxu0
  %v2922 = vadd.f32 %v2729, %v2921
  %v2923 = vpop.f32.mrb[0].mxu0
  %v2924 = vadd.f32 %v2731, %v2923
  %v2925 = vpop.f32.mrb[0].mxu0
  %v2926 = vadd.f32 %v2733, %v2925
  %2927 = vmatprep.mubr.bf16.mxu0 0
  %2928 = vmatmul.mubr.bf16.gmra.mrb[0].mxu0 %v2313
  %v2929 = vpop.f32.mrb[0].mxu0
  %v2930 = vadd.f32 %v2737, %v2929
  %v2931 = vpop.f32.mrb[0].mxu0
  %v2932 = vadd.f32 %v2739, %v2931
  %v2933 = vpop.f32.mrb[0].mxu0
  %v2934 = vadd.f32 %v2741, %v2933
  %v2935 = vpop.f32.mrb[0].mxu0
  %v2936 = vadd.f32 %v2743, %v2935
  %2937 = vmatprep.mubr.bf16.mxu0 0
  %2938 = vmatmul.mubr.bf16.gmra.mrb[0].mxu0 %v2316
  %v2939 = vpop.f32.mrb[0].mxu0
  %v2940 = vadd.f32 %v2747, %v2939
  %v2941 = vpop.f32.mrb[0].mxu0
  %v2942 = vadd.f32 %v2749, %v2941
  %v2943 = vpop.f32.mrb[0].mxu0
  %v2944 = vadd.f32 %v2751, %v2943
  %v2945 = vpop.f32.mrb[0].mxu0
  %v2946 = vadd.f32 %v2753, %v2945
  %2947 = vmatprep.mubr.bf16.mxu0 0
  %2948 = vmatmul.mubr.bf16.gmra.mrb[0].mxu0 %v2319
  %v2949 = vpop.f32.mrb[0].mxu0
  %v2950 = vadd.f32 %v2757, %v2949
  %v2951 = vpop.f32.mrb[0].mxu0
  %v2952 = vadd.f32 %v2759, %v2951
  %v2953 = vpop.f32.mrb[0].mxu0
  %v2954 = vadd.f32 %v2761, %v2953
  %v2955 = vpop.f32.mrb[0].mxu0
  %v2956 = vadd.f32 %v2763, %v2955
  %2957 = vmatprep.mubr.bf16.mxu0 0
  %2958 = vmatmul.mubr.bf16.gmra.mrb[0].mxu0 %v2322
  %v2959 = vpop.f32.mrb[0].mxu0
  %v2960 = vadd.f32 %v2767, %v2959
  %v2961 = vpop.f32.mrb[0].mxu0
  %v2962 = vadd.f32 %v2769, %v2961
  %v2963 = vpop.f32.mrb[0].mxu0
  %v2964 = vadd.f32 %v2771, %v2963
  %v2965 = vpop.f32.mrb[0].mxu0
  %v2966 = vadd.f32 %v2773, %v2965
  %2967 = vmatprep.mubr.bf16.mxu0 0
  %2968 = vmatmul.mubr.bf16.gmra.mrb[0].mxu0 %v2325
  %v2969 = vpop.f32.mrb[0].mxu0
  %v2970 = vadd.f32 %v2777, %v2969
  %v2971 = vpop.f32.mrb[0].mxu0
  %v2972 = vadd.f32 %v2779, %v2971
  %v2973 = vpop.f32.mrb[0].mxu0
  %v2974 = vadd.f32 %v2781, %v2973
  %v2975 = vpop.f32.mrb[0].mxu0
  %v2976 = vadd.f32 %v2783, %v2975
  %2977 = vmatprep.mubr.bf16.mxu0 0
  %2978 = vmatmul.mubr.bf16.gmra.mrb[0].mxu0 %v2328
  %v2979 = vpop.f32.mrb[0].mxu0
  %v2980 = vadd.f32 %v2787, %v2979
  %v2981 = vpop.f32.mrb[0].mxu0
  %v2982 = vadd.f32 %v2789, %v2981
  %v2983 = vpop.f32.mrb[0].mxu0
  %v2984 = vadd.f32 %v2791, %v2983
  %v2985 = vpop.f32.mrb[0].mxu0
  %v2986 = vadd.f32 %v2793, %v2985
  %2987 = vmatprep.mubr.bf16.mxu0 0
  %2988 = vmatmul.mubr.bf16.gmra.mrb[0].mxu0 %v2331
  %v2989 = vpop.f32.mrb[0].mxu0
  %v2990 = vadd.f32 %v2797, %v2989
  %v2991 = vpop.f32.mrb[0].mxu0
  %v2992 = vadd.f32 %v2799, %v2991
  %v2993 = vpop.f32.mrb[0].mxu0
  %v2994 = vadd.f32 %v2801, %v2993
  %v2995 = vpop.f32.mrb[0].mxu0
  %v2996 = vadd.f32 %v2803, %v2995
  %2997 = vmatprep.mubr.bf16.mxu0 0
  %2998 = vmatmul.mubr.bf16.gmra.mrb[0].mxu0 %v2334
  %v2999 = vpop.f32.mrb[0].mxu0
  %v3000 = vadd.f32 %v2807, %v2999
  %v3001 = vpop.f32.mrb[0].mxu0
  %v3002 = vadd.f32 %v2809, %v3001
  %v3003 = vpop.f32.mrb[0].mxu0
  %v3004 = vadd.f32 %v2811, %v3003
  %v3005 = vpop.f32.mrb[0].mxu0
  %v3006 = vadd.f32 %v2813, %v3005
  %3007 = vmatprep.mubr.bf16.mxu0 0
  %3008 = vmatmul.mubr.bf16.gmra.mrb[0].mxu0 %v2337
  %v3009 = vpop.f32.mrb[0].mxu0
  %v3010 = vadd.f32 %v2817, %v3009
  %v3011 = vpop.f32.mrb[0].mxu0
  %v3012 = vadd.f32 %v2819, %v3011
  %v3013 = vpop.f32.mrb[0].mxu0
  %v3014 = vadd.f32 %v2821, %v3013
  %v3015 = vpop.f32.mrb[0].mxu0
  %v3016 = vadd.f32 %v2823, %v3015
  %3017 = vmatprep.mubr.bf16.mxu0 0
  %3018 = vmatmul.mubr.bf16.gmra.mrb[0].mxu0 %v2340
  %v3019 = vpop.f32.mrb[0].mxu0
  %v3020 = vadd.f32 %v2827, %v3019
  %v3021 = vpop.f32.mrb[0].mxu0
  %v3022 = vadd.f32 %v2829, %v3021
  %v3023 = vpop.f32.mrb[0].mxu0
  %v3024 = vadd.f32 %v2831, %v3023
  %v3025 = vpop.f32.mrb[0].mxu0
  %v3026 = vadd.f32 %v2833, %v3025
  %3027 = vdwg.mxu0
  %v3028 = vmax.f32 %v2870, 0.0
  %v3029 = vmax.f32 %v2872, 0.0
  %v3030 = vmax.f32 %v2874, 0.0
  %v3031 = vmax.f32 %v2876, 0.0
  %v3032 = vmax.f32 %v2880, 0.0
  %v3033 = vmax.f32 %v2882, 0.0
  %v3034 = vmax.f32 %v2884, 0.0
  %v3035 = vmax.f32 %v2886, 0.0
  %v3036 = vmax.f32 %v2890, 0.0
  %v3037 = vmax.f32 %v2892, 0.0
  %v3038 = vmax.f32 %v2894, 0.0
  %v3039 = vmax.f32 %v2896, 0.0
  %v3040 = vmax.f32 %v2900, 0.0
  %v3041 = vmax.f32 %v2902, 0.0
  %v3042 = vmax.f32 %v2904, 0.0
  %v3043 = vmax.f32 %v2906, 0.0
  %v3044 = vmax.f32 %v2910, 0.0
  %v3045 = vmax.f32 %v2912, 0.0
  %v3046 = vmax.f32 %v2914, 0.0
  %v3047 = vmax.f32 %v2916, 0.0
  %v3048 = vmax.f32 %v2920, 0.0
  %v3049 = vmax.f32 %v2922, 0.0
  %v3050 = vmax.f32 %v2924, 0.0
  %v3051 = vmax.f32 %v2926, 0.0
  %v3052 = vmax.f32 %v2930, 0.0
  %v3053 = vmax.f32 %v2932, 0.0
  %v3054 = vmax.f32 %v2934, 0.0
  %v3055 = vmax.f32 %v2936, 0.0
  %v3056 = vmax.f32 %v2940, 0.0
  %v3057 = vmax.f32 %v2942, 0.0
  %v3058 = vmax.f32 %v2944, 0.0
  %v3059 = vmax.f32 %v2946, 0.0
  %v3060 = vmax.f32 %v2950, 0.0
  %v3061 = vmax.f32 %v2952, 0.0
  %v3062 = vmax.f32 %v2954, 0.0
  %v3063 = vmax.f32 %v2956, 0.0
  %v3064 = vmax.f32 %v2960, 0.0
  %v3065 = vmax.f32 %v2962, 0.0
  %v3066 = vmax.f32 %v2964, 0.0
  %v3067 = vmax.f32 %v2966, 0.0
  %v3068 = vmax.f32 %v2970, 0.0
  %v3069 = vmax.f32 %v2972, 0.0
  %v3070 = vmax.f32 %v2974, 0.0
  %v3071 = vmax.f32 %v2976, 0.0
  %v3072 = vmax.f32 %v2980, 0.0
  %v3073 = vmax.f32 %v2982, 0.0
  %v3074 = vmax.f32 %v2984, 0.0
  %v3075 = vmax.f32 %v2986, 0.0
  %v3076 = vmax.f32 %v2990, 0.0
  %v3077 = vmax.f32 %v2992, 0.0
  %v3078 = vmax.f32 %v2994, 0.0
  %v3079 = vmax.f32 %v2996, 0.0
  %v3080 = vmax.f32 %v3000, 0.0
  %v3081 = vmax.f32 %v3002, 0.0
  %v3082 = vmax.f32 %v3004, 0.0
  %v3083 = vmax.f32 %v3006, 0.0
  %v3084 = vmax.f32 %v3010, 0.0
  %v3085 = vmax.f32 %v3012, 0.0
  %v3086 = vmax.f32 %v3014, 0.0
  %v3087 = vmax.f32 %v3016, 0.0
  %v3088 = vmax.f32 %v3020, 0.0
  %v3089 = vmax.f32 %v3022, 0.0
  %v3090 = vmax.f32 %v3024, 0.0
  %v3091 = vmax.f32 %v3026, 0.0
  %v3092 = vmax.f32 %v3028, %v3032
  %v3093 = vmax.f32 %v3030, %v3034
  %v3094 = vmax.f32 %v3092, %v3036
  %v3095 = vmax.f32 %v3093, %v3038
  %v3096 = vmax.f32 %v3094, %v3040
  %v3097 = vmax.f32 %v3095, %v3042
  %v3098 = vmax.f32 %v3096, %v3044
  %v3099 = vmax.f32 %v3097, %v3046
  %v3100 = vmax.f32 %v3098, %v3048
  %v3101 = vmax.f32 %v3099, %v3050
  %v3102 = vmax.f32 %v3100, %v3052
  %v3103 = vmax.f32 %v3101, %v3054
  %v3104 = vmax.f32 %v3102, %v3056
  %v3105 = vmax.f32 %v3103, %v3058
  %v3106 = vmax.f32 %v3104, %v3105
  %v3107 = vrot.slane %v3106, 4
  %v3108 = vmax.f32 %v3106, %v3107
  %v3109 = vrot.slane %v3108, 2
  %v3110 = vmax.f32 %v3108, %v3109
  %v3111 = vrot.slane %v3110, 1
  %v3112 = vmax.f32 %v3110, %v3111
  %v3113 = vsel %vm758, %v3029, -inf
  %v3114 = vsel %vm758, %v3031, -inf
  %v3115 = vsel %vm758, %v3033, -inf
  %v3116 = vmax.f32 %v3113, %v3115
  %v3117 = vsel %vm758, %v3035, -inf
  %v3118 = vmax.f32 %v3114, %v3117
  %v3119 = vsel %vm758, %v3037, -inf
  %v3120 = vmax.f32 %v3116, %v3119
  %v3121 = vsel %vm758, %v3039, -inf
  %v3122 = vmax.f32 %v3118, %v3121
  %v3123 = vsel %vm758, %v3041, -inf
  %v3124 = vmax.f32 %v3120, %v3123
  %v3125 = vsel %vm758, %v3043, -inf
  %v3126 = vmax.f32 %v3122, %v3125
  %v3127 = vsel %vm758, %v3045, -inf
  %v3128 = vmax.f32 %v3124, %v3127
  %v3129 = vsel %vm758, %v3047, -inf
  %v3130 = vmax.f32 %v3126, %v3129
  %v3131 = vsel %vm758, %v3049, -inf
  %v3132 = vmax.f32 %v3128, %v3131
  %v3133 = vsel %vm758, %v3051, -inf
  %v3134 = vmax.f32 %v3130, %v3133
  %v3135 = vsel %vm758, %v3053, -inf
  %v3136 = vmax.f32 %v3132, %v3135
  %v3137 = vsel %vm758, %v3055, -inf
  %v3138 = vmax.f32 %v3134, %v3137
  %v3139 = vsel %vm758, %v3057, -inf
  %v3140 = vmax.f32 %v3136, %v3139
  %v3141 = vsel %vm758, %v3059, -inf
  %v3142 = vmax.f32 %v3138, %v3141
  %v3143 = vmax.f32 %v3140, %v3142
  %v3144 = vrot.slane %v3143, 4
  %v3145 = vmax.f32 %v3143, %v3144
  %v3146 = vrot.slane %v3145, 2
  %v3147 = vmax.f32 %v3145, %v3146
  %v3148 = vrot.slane %v3147, 1
  %v3149 = vmax.f32 %v3147, %v3148
  %v3150 = vmax.f32 %v3060, %v3064
  %v3151 = vmax.f32 %v3062, %v3066
  %v3152 = vmax.f32 %v3150, %v3068
  %v3153 = vmax.f32 %v3151, %v3070
  %v3154 = vmax.f32 %v3152, %v3072
  %v3155 = vmax.f32 %v3153, %v3074
  %v3156 = vmax.f32 %v3154, %v3076
  %v3157 = vmax.f32 %v3155, %v3078
  %v3158 = vmax.f32 %v3156, %v3080
  %v3159 = vmax.f32 %v3157, %v3082
  %v3160 = vmax.f32 %v3158, %v3084
  %v3161 = vmax.f32 %v3159, %v3086
  %v3162 = vmax.f32 %v3160, %v3088
  %v3163 = vmax.f32 %v3161, %v3090
  %v3164 = vmax.f32 %v3162, %v3163
  %v3165 = vrot.slane %v3164, 4
  %v3166 = vmax.f32 %v3164, %v3165
  %v3167 = vrot.slane %v3166, 2
  %v3168 = vmax.f32 %v3166, %v3167
  %v3169 = vrot.slane %v3168, 1
  %v3170 = vmax.f32 %v3168, %v3169
  %v3171 = vsel %vm758, %v3061, -inf
  %v3172 = vsel %vm758, %v3063, -inf
  %v3173 = vsel %vm758, %v3065, -inf
  %v3174 = vmax.f32 %v3171, %v3173
  %v3175 = vsel %vm758, %v3067, -inf
  %v3176 = vmax.f32 %v3172, %v3175
  %v3177 = vsel %vm758, %v3069, -inf
  %v3178 = vmax.f32 %v3174, %v3177
  %v3179 = vsel %vm758, %v3071, -inf
  %v3180 = vmax.f32 %v3176, %v3179
  %v3181 = vsel %vm758, %v3073, -inf
  %v3182 = vmax.f32 %v3178, %v3181
  %v3183 = vsel %vm758, %v3075, -inf
  %v3184 = vmax.f32 %v3180, %v3183
  %v3185 = vsel %vm758, %v3077, -inf
  %v3186 = vmax.f32 %v3182, %v3185
  %v3187 = vsel %vm758, %v3079, -inf
  %v3188 = vmax.f32 %v3184, %v3187
  %v3189 = vsel %vm758, %v3081, -inf
  %v3190 = vmax.f32 %v3186, %v3189
  %v3191 = vsel %vm758, %v3083, -inf
  %v3192 = vmax.f32 %v3188, %v3191
  %v3193 = vsel %vm758, %v3085, -inf
  %v3194 = vmax.f32 %v3190, %v3193
  %v3195 = vsel %vm758, %v3087, -inf
  %v3196 = vmax.f32 %v3192, %v3195
  %v3197 = vsel %vm758, %v3089, -inf
  %v3198 = vmax.f32 %v3194, %v3197
  %v3199 = vsel %vm758, %v3091, -inf
  %v3200 = vmax.f32 %v3196, %v3199
  %v3201 = vmax.f32 %v3198, %v3200
  %v3202 = vrot.slane %v3201, 4
  %v3203 = vmax.f32 %v3201, %v3202
  %v3204 = vrot.slane %v3203, 2
  %v3205 = vmax.f32 %v3203, %v3204
  %v3206 = vrot.slane %v3205, 1
  %v3207 = vmax.f32 %v3205, %v3206
  %vm3208 = vcmask 1040384
  %v3209 = vsel %vm3208, %v3112, %v3170
  %v3210 = vsel %vm3208, %v3149, %v3207
  %v3211 = vpack.c.bf16 %v3209, %v3209
  %v3212 = vpack.c.bf16 %v3210, %v3210
  %v3213 = vsel %vm758, %v968, -inf
  %v3214 = vsel %vm758, %v969, -inf
  %v3215 = vsel %vm758, %v970, -inf
  %v3216 = vsel %vm758, %v971, -inf
  %v3217 = vsel %vm758, %v972, -inf
  %v3218 = vmax.f32 %v3213, %v3217
  %v3219 = vsel %vm758, %v973, -inf
  %v3220 = vmax.f32 %v3214, %v3219
  %v3221 = vsel %vm758, %v974, -inf
  %v3222 = vmax.f32 %v3215, %v3221
  %v3223 = vsel %vm758, %v975, -inf
  %v3224 = vmax.f32 %v3216, %v3223
  %v3225 = vsel %vm758, %v976, -inf
  %v3226 = vmax.f32 %v3218, %v3225
  %v3227 = vsel %vm758, %v977, -inf
  %v3228 = vmax.f32 %v3220, %v3227
  %v3229 = vsel %vm758, %v978, -inf
  %v3230 = vmax.f32 %v3222, %v3229
  %v3231 = vsel %vm758, %v979, -inf
  %v3232 = vmax.f32 %v3224, %v3231
  %v3233 = vsel %vm758, %v980, -inf
  %v3234 = vmax.f32 %v3226, %v3233
  %v3235 = vsel %vm758, %v981, -inf
  %v3236 = vmax.f32 %v3228, %v3235
  %v3237 = vsel %vm758, %v982, -inf
  %v3238 = vmax.f32 %v3230, %v3237
  %v3239 = vsel %vm758, %v983, -inf
  %v3240 = vmax.f32 %v3232, %v3239
  %v3241 = vmax.f32 %v3234, %v3236
  %v3242 = vmax.f32 %v3238, %v3240
  %v3243 = vmax.f32 %v3241, %v3242
  %v3244 = vrot.slane %v3243, 4
  %v3245 = vmax.f32 %v3243, %v3244
  %v3246 = vrot.slane %v3245, 2
  %v3247 = vmax.f32 %v3245, %v3246
  %v3248 = vrot.slane %v3247, 1
  %v3249 = vmax.f32 %v3247, %v3248
  %v3250 = vsel %vm758, %v984, -inf
  %v3251 = vsel %vm758, %v985, -inf
  %v3252 = vsel %vm758, %v986, -inf
  %v3253 = vsel %vm758, %v987, -inf
  %v3254 = vsel %vm758, %v988, -inf
  %v3255 = vmax.f32 %v3250, %v3254
  %v3256 = vsel %vm758, %v989, -inf
  %v3257 = vmax.f32 %v3251, %v3256
  %v3258 = vsel %vm758, %v990, -inf
  %v3259 = vmax.f32 %v3252, %v3258
  %v3260 = vsel %vm758, %v991, -inf
  %v3261 = vmax.f32 %v3253, %v3260
  %v3262 = vsel %vm758, %v992, -inf
  %v3263 = vmax.f32 %v3255, %v3262
  %v3264 = vsel %vm758, %v993, -inf
  %v3265 = vmax.f32 %v3257, %v3264
  %v3266 = vsel %vm758, %v994, -inf
  %v3267 = vmax.f32 %v3259, %v3266
  %v3268 = vsel %vm758, %v995, -inf
  %v3269 = vmax.f32 %v3261, %v3268
  %v3270 = vsel %vm758, %v996, -inf
  %v3271 = vmax.f32 %v3263, %v3270
  %v3272 = vsel %vm758, %v997, -inf
  %v3273 = vmax.f32 %v3265, %v3272
  %v3274 = vsel %vm758, %v998, -inf
  %v3275 = vmax.f32 %v3267, %v3274
  %v3276 = vsel %vm758, %v999, -inf
  %v3277 = vmax.f32 %v3269, %v3276
  %v3278 = vmax.f32 %v3271, %v3273
  %v3279 = vmax.f32 %v3275, %v3277
  %v3280 = vmax.f32 %v3278, %v3279
  %v3281 = vrot.slane %v3280, 4
  %v3282 = vmax.f32 %v3280, %v3281
  %v3283 = vrot.slane %v3282, 2
  %v3284 = vmax.f32 %v3282, %v3283
  %v3285 = vrot.slane %v3284, 1
  %v3286 = vmax.f32 %v3284, %v3285
  %v3287 = vsel %vm3208, %v3249, %v3286
  %v3288 = vld [vmem:[%s4 + $0x180] sm:$0xff]
  %v3289 = vld [vmem:[%s4 + $0x188] sm:$0xff]
  %v3290 = vld [vmem:[%s4 + $0x190] sm:$0xff]
  %v3291 = vld [vmem:[%s4 + $0x198] sm:$0xff]
  %v3292 = vld [vmem:[%s4 + $0x1a0] sm:$0xff]
  %v3293 = vld [vmem:[%s4 + $0x1a8] sm:$0xff]
  %v3294 = vld [vmem:[%s4 + $0x1b0] sm:$0xff]
  %v3295 = vld [vmem:[%s4 + $0x1b8] sm:$0xff]
  %v3296 = vld [vmem:[%s4 + $0x1c0] sm:$0xff]
  %v3297 = vld [vmem:[%s4 + $0x1c8] sm:$0xff]
  %v3298 = vld [vmem:[%s4 + $0x1d0] sm:$0xff]
  %v3299 = vld [vmem:[%s4 + $0x1d8] sm:$0xff]
  %v3300 = vld [vmem:[%s4 + $0x1e0] sm:$0xff]
  %v3301 = vld [vmem:[%s4 + $0x1e8] sm:$0xff]
  %v3302 = vld [vmem:[%s4 + $0x1f0] sm:$0xff]
  %v3303 = vld [vmem:[%s4 + $0x1f8] sm:$0xff]
  %v3304 = vld [vmem:[%s4 + $0x200] sm:$0xff]
  %v3305 = vld [vmem:[%s4 + $0x208] sm:$0xff]
  %v3306 = vld [vmem:[%s4 + $0x210] sm:$0xff]
  %v3307 = vld [vmem:[%s4 + $0x218] sm:$0xff]
  %v3308 = vld [vmem:[%s4 + $0x220] sm:$0xff]
  %v3309 = vld [vmem:[%s4 + $0x228] sm:$0xff]
  %v3310 = vld [vmem:[%s4 + $0x230] sm:$0xff]
  %v3311 = vld [vmem:[%s4 + $0x238] sm:$0xff]
  %s3312 = scalar_lea.vmem %s5, 4
  %v3313 = vld [vmem:[%s3312] ss:$8 sm:$0x3]
  %v3315 = vlaneseq
  %v3316 = vshrl.u32 %v3315, 7
  %v3317 = vsub.s32 0, %v3316
  %v3318 = vrot.slane %v3313, %v3317
  %v3319 = vlaneseq
  %v3320 = vshrl.u32 %v3319, 7
  %v3321 = vsub.s32 1, %v3320
  %v3322 = vrot.slane %v3313, %v3321
  %v3349 = vunpack.c.l.b16 %v3288
  %v3350 = vunpack.c.h.b16 %v3288
  %v3351 = vunpack.c.l.b16 %v3289
  %v3352 = vunpack.c.h.b16 %v3289
  %v3353 = vunpack.c.l.b16 %v3290
  %v3354 = vunpack.c.h.b16 %v3290
  %v3355 = vunpack.c.l.b16 %v3291
  %v3356 = vunpack.c.h.b16 %v3291
  %v3357 = vunpack.c.l.b16 %v3292
  %v3358 = vunpack.c.h.b16 %v3292
  %v3359 = vunpack.c.l.b16 %v3293
  %v3360 = vunpack.c.h.b16 %v3293
  %v3361 = vunpack.c.l.b16 %v3294
  %v3362 = vunpack.c.h.b16 %v3294
  %v3363 = vunpack.c.l.b16 %v3295
  %v3364 = vunpack.c.h.b16 %v3295
  %v3365 = vunpack.c.l.b16 %v3296
  %v3366 = vunpack.c.h.b16 %v3296
  %v3367 = vunpack.c.l.b16 %v3297
  %v3368 = vunpack.c.h.b16 %v3297
  %v3369 = vunpack.c.l.b16 %v3298
  %v3370 = vunpack.c.h.b16 %v3298
  %v3371 = vunpack.c.l.b16 %v3299
  %v3372 = vunpack.c.h.b16 %v3299
  %v3373 = vunpack.c.l.b16 %v3300
  %v3374 = vunpack.c.h.b16 %v3300
  %v3375 = vunpack.c.l.b16 %v3301
  %v3376 = vunpack.c.h.b16 %v3301
  %v3377 = vunpack.c.l.b16 %v3302
  %v3378 = vunpack.c.h.b16 %v3302
  %v3379 = vunpack.c.l.b16 %v3303
  %v3380 = vunpack.c.h.b16 %v3303
  %v3381 = vunpack.c.l.b16 %v3304
  %v3382 = vunpack.c.h.b16 %v3304
  %v3383 = vunpack.c.l.b16 %v3305
  %v3384 = vunpack.c.h.b16 %v3305
  %v3385 = vunpack.c.l.b16 %v3306
  %v3386 = vunpack.c.h.b16 %v3306
  %v3387 = vunpack.c.l.b16 %v3307
  %v3388 = vunpack.c.h.b16 %v3307
  %v3389 = vunpack.c.l.b16 %v3308
  %v3390 = vunpack.c.h.b16 %v3308
  %v3391 = vunpack.c.l.b16 %v3309
  %v3392 = vunpack.c.h.b16 %v3309
  %v3393 = vunpack.c.l.b16 %v3310
  %v3394 = vunpack.c.h.b16 %v3310
  %v3395 = vunpack.c.l.b16 %v3311
  %v3396 = vunpack.c.h.b16 %v3311
  %v3397 = vpack.c.b16 %v3351, %v3349
  %v3398 = vpack.c.b16 %v3352, %v3350
  %v3399 = vpack.c.b16 %v3355, %v3353
  %v3400 = vpack.c.b16 %v3356, %v3354
  %v3401 = vpack.c.b16 %v3359, %v3357
  %v3402 = vpack.c.b16 %v3360, %v3358
  %v3403 = vpack.c.b16 %v3363, %v3361
  %v3404 = vpack.c.b16 %v3364, %v3362
  %v3405 = vpack.c.b16 %v3367, %v3365
  %v3406 = vpack.c.b16 %v3368, %v3366
  %v3407 = vpack.c.b16 %v3371, %v3369
  %v3408 = vpack.c.b16 %v3372, %v3370
  %v3409 = vpack.c.b16 %v3375, %v3373
  %v3410 = vpack.c.b16 %v3376, %v3374
  %v3411 = vpack.c.b16 %v3379, %v3377
  %v3412 = vpack.c.b16 %v3380, %v3378
  %v3413 = vpack.c.b16 %v3383, %v3381
  %v3414 = vpack.c.b16 %v3384, %v3382
  %v3415 = vpack.c.b16 %v3387, %v3385
  %v3416 = vpack.c.b16 %v3388, %v3386
  %v3417 = vpack.c.b16 %v3391, %v3389
  %v3418 = vpack.c.b16 %v3392, %v3390
  %v3419 = vpack.c.b16 %v3395, %v3393
  %v3420 = vpack.c.b16 %v3396, %v3394
  %v3446 = vsel %vm758, %v3212, 0
  %3448 = vmatprep.subr.bf16.mxu0 %v3398
  %3449 = vmatpush1.bf16.msra.mxu0 %v3397
  %3450 = vmatprep.subr.bf16.mxu0 %v3400
  %3451 = vmatpush1.bf16.msra.mxu0 %v3399
  %3452 = vmatprep.subr.bf16.mxu0 %v3402
  %3453 = vmatpush1.bf16.msra.mxu0 %v3401
  %3454 = vmatprep.subr.bf16.mxu0 %v3404
  %3455 = vmatpush1.bf16.msra.mxu0 %v3403
  %3456 = vmatprep.subr.bf16.mxu0 %v3406
  %3457 = vmatpush1.bf16.msra.mxu0 %v3405
  %3458 = vmatprep.subr.bf16.mxu0 %v3408
  %3459 = vmatpush1.bf16.msra.mxu0 %v3407
  %3460 = vmatprep.subr.bf16.mxu0 %v3410
  %3461 = vmatpush1.bf16.msra.mxu0 %v3409
  %3462 = vmatprep.subr.bf16.mxu0 %v3412
  %3463 = vmatpush1.bf16.msra.mxu0 %v3411
  %3464 = vmatprep.subr.bf16.mxu0 %v3414
  %3465 = vmatpush1.bf16.msra.mxu0 %v3413
  %3466 = vmatprep.subr.bf16.mxu0 %v3416
  %3467 = vmatpush1.bf16.msra.mxu0 %v3415
  %3468 = vmatprep.subr.bf16.mxu0 %v3418
  %3469 = vmatpush1.bf16.msra.mxu0 %v3417
  %3470 = vmatprep.subr.bf16.mxu0 %v3420
  %3471 = vmatpush1.bf16.msra.mxu0 %v3419
  %3472 = vmatprep.subr.bf16.mxu0 0
  %3473 = vmatpush1.bf16.msra.mxu0 0
  %3474 = vmatprep.subr.bf16.mxu0 0
  %3475 = vmatpush1.bf16.msra.mxu0 0
  %3476 = vmatprep.subr.bf16.mxu0 0
  %3477 = vmatpush1.bf16.msra.mxu0 0
  %3478 = vmatprep.subr.bf16.mxu0 0
  %3479 = vmatpush1.bf16.msra.mxu0 0
  %3480 = vmatprep.mubr.bf16.mxu0 %v3446
  %3481 = vmatmul.mubr.bf16.gmra.mrb[0].mxu0 %v3211
  %v3482 = vpop.f32.mrb[0].mxu0
  %v3483 = vadd.f32 %v3318, %v3482
  %v3484 = vpop.f32.mrb[0].mxu0
  %v3485 = vadd.f32 %v3322, %v3484
  %v3486 = vpop.f32.mrb[0].mxu0
  %v3487 = vpop.f32.mrb[0].mxu0
  %3488 = vdwg.mxu0
  %v3489 = vmax.f32 %v3483, 0.0
  %v3490 = vmax.f32 %v3485, 0.0
  %v3491 = vpack.c.bf16 %v3489, %v3489
  %v3492 = vpack.c.bf16 %v3490, %v3490
  %v3493 = vld [vmem:[%s4 + $0x240] sm:$0xf]
  %v3494 = vld [vmem:[%s4 + $0x248] sm:$0xf]
  %v3495 = vld [vmem:[%s4 + $0x250] sm:$0xf]
  %v3496 = vld [vmem:[%s4 + $0x258] sm:$0xf]
  %v3497 = vld [vmem:[%s4 + $0x260] sm:$0xf]
  %v3498 = vld [vmem:[%s4 + $0x268] sm:$0xf]
  %v3499 = vld [vmem:[%s4 + $0x270] sm:$0xf]
  %v3500 = vld [vmem:[%s4 + $0x278] sm:$0xf]
  %v3501 = vld [vmem:[%s4 + $0x280] sm:$0xf]
  %v3502 = vld [vmem:[%s4 + $0x288] sm:$0xf]
  %v3503 = vld [vmem:[%s4 + $0x290] sm:$0xf]
  %v3504 = vld [vmem:[%s4 + $0x298] sm:$0xf]
  %v3505 = vld [vmem:[%s4 + $0x2a0] sm:$0xf]
  %v3506 = vld [vmem:[%s4 + $0x2a8] sm:$0xf]
  %v3507 = vld [vmem:[%s4 + $0x2b0] sm:$0xf]
  %v3508 = vld [vmem:[%s4 + $0x2b8] sm:$0xf]
  %v3509 = vld [vmem:[%s4 + $0x2c0] sm:$0xf]
  %v3510 = vld [vmem:[%s4 + $0x2c8] sm:$0xf]
  %v3511 = vld [vmem:[%s4 + $0x2d0] sm:$0xf]
  %v3512 = vld [vmem:[%s4 + $0x2d8] sm:$0xf]
  %v3513 = vld [vmem:[%s4 + $0x2e0] sm:$0xf]
  %v3514 = vld [vmem:[%s4 + $0x2e8] sm:$0xf]
  %v3515 = vld [vmem:[%s4 + $0x2f0] sm:$0xf]
  %v3516 = vld [vmem:[%s4 + $0x2f8] sm:$0xf]
  %v3517 = vld [vmem:[%s5 + $0x5] ss:$0 sm:$0xff]
  %v3542 = vunpack.c.l.b16 %v3493
  %v3543 = vunpack.c.l.b16 %v3494
  %v3544 = vunpack.c.l.b16 %v3495
  %v3545 = vunpack.c.l.b16 %v3496
  %v3546 = vunpack.c.l.b16 %v3497
  %v3547 = vunpack.c.l.b16 %v3498
  %v3548 = vunpack.c.l.b16 %v3499
  %v3549 = vunpack.c.l.b16 %v3500
  %v3550 = vunpack.c.l.b16 %v3501
  %v3551 = vunpack.c.l.b16 %v3502
  %v3552 = vunpack.c.l.b16 %v3503
  %v3553 = vunpack.c.l.b16 %v3504
  %v3554 = vunpack.c.l.b16 %v3505
  %v3555 = vunpack.c.l.b16 %v3506
  %v3556 = vunpack.c.l.b16 %v3507
  %v3557 = vunpack.c.l.b16 %v3508
  %v3558 = vunpack.c.l.b16 %v3509
  %v3559 = vunpack.c.l.b16 %v3510
  %v3560 = vunpack.c.l.b16 %v3511
  %v3561 = vunpack.c.l.b16 %v3512
  %v3562 = vunpack.c.l.b16 %v3513
  %v3563 = vunpack.c.l.b16 %v3514
  %v3564 = vunpack.c.l.b16 %v3515
  %v3565 = vunpack.c.l.b16 %v3516
  %v3566 = vpack.c.b16 %v3543, %v3542
  %v3567 = vpack.c.b16 %v3545, %v3544
  %v3568 = vpack.c.b16 %v3547, %v3546
  %v3569 = vpack.c.b16 %v3549, %v3548
  %v3570 = vpack.c.b16 %v3551, %v3550
  %v3571 = vpack.c.b16 %v3553, %v3552
  %v3572 = vpack.c.b16 %v3555, %v3554
  %v3573 = vpack.c.b16 %v3557, %v3556
  %v3574 = vpack.c.b16 %v3559, %v3558
  %v3575 = vpack.c.b16 %v3561, %v3560
  %v3576 = vpack.c.b16 %v3563, %v3562
  %v3577 = vpack.c.b16 %v3565, %v3564
  %v3591 = vsel %vm758, %v3492, 0
  %3593 = vmatprep.subr.bf16.mxu0 0
  %3594 = vmatpush1.bf16.msra.mxu0 %v3566
  %3595 = vmatprep.subr.bf16.mxu0 0
  %3596 = vmatpush1.bf16.msra.mxu0 %v3567
  %3597 = vmatprep.subr.bf16.mxu0 0
  %3598 = vmatpush1.bf16.msra.mxu0 %v3568
  %3599 = vmatprep.subr.bf16.mxu0 0
  %3600 = vmatpush1.bf16.msra.mxu0 %v3569
  %3601 = vmatprep.subr.bf16.mxu0 0
  %3602 = vmatpush1.bf16.msra.mxu0 %v3570
  %3603 = vmatprep.subr.bf16.mxu0 0
  %3604 = vmatpush1.bf16.msra.mxu0 %v3571
  %3605 = vmatprep.subr.bf16.mxu0 0
  %3606 = vmatpush1.bf16.msra.mxu0 %v3572
  %3607 = vmatprep.subr.bf16.mxu0 0
  %3608 = vmatpush1.bf16.msra.mxu0 %v3573
  %3609 = vmatprep.subr.bf16.mxu0 0
  %3610 = vmatpush1.bf16.msra.mxu0 %v3574
  %3611 = vmatprep.subr.bf16.mxu0 0
  %3612 = vmatpush1.bf16.msra.mxu0 %v3575
  %3613 = vmatprep.subr.bf16.mxu0 0
  %3614 = vmatpush1.bf16.msra.mxu0 %v3576
  %3615 = vmatprep.subr.bf16.mxu0 0
  %3616 = vmatpush1.bf16.msra.mxu0 %v3577
  %3617 = vmatprep.subr.bf16.mxu0 0
  %3618 = vmatpush1.bf16.msra.mxu0 0
  %3619 = vmatprep.subr.bf16.mxu0 0
  %3620 = vmatpush1.bf16.msra.mxu0 0
  %3621 = vmatprep.subr.bf16.mxu0 0
  %3622 = vmatpush1.bf16.msra.mxu0 0
  %3623 = vmatprep.subr.bf16.mxu0 0
  %3624 = vmatpush1.bf16.msra.mxu0 0
  %3625 = vmatprep.mubr.bf16.mxu0 %v3591
  %3626 = vmatmul.mubr.bf16.gmra.mrb[0].mxu0 %v3491
  %v3627 = vpop.f32.mrb[0].mxu0
  %v3628 = vadd.f32 %v3517, %v3627
  %v3629 = vpop.f32.mrb[0].mxu0
  %v3630 = vpop.f32.mrb[0].mxu0
  %v3631 = vpop.f32.mrb[0].mxu0
  %3632 = vdwg.mxu0
  %3634 = vrot.lane.b32.xlu0 %v3628, 64
  %v3635 = vpop.permute.xlu0 %3634
  %v3637 = vsel %vm758, %v3287, %v3635
  %3638 = vst [vmem:[%s7] sm:$0x3] %v3637
  // Predicated region
  $region26: #{posenet9d_forward.1} parent=0 // pred_check
    _
  $region27: #{posenet9d_forward.1} parent=0 // pred_check_branch
    %3640 = sbr.rel (0) target = $region29
  $region28: #{posenet9d_forward.1} parent=0 // pred_region
    _
  $region29: #{posenet9d_forward.1} parent=0 // pred_fallthru
    _
  // Predicated region
  $region30: #{posenet9d_forward.1} parent=0 // pred_check
    _
  $region31: #{posenet9d_forward.1} parent=0 // pred_check_branch
    %3642 = sbr.rel (0) target = $region33
  $region32: #{posenet9d_forward.1} parent=0 // pred_region
    _
  $region33: #{posenet9d_forward.1} parent=0 // pred_fallthru
    _
  // Predicated region
  $region34: #{posenet9d_forward.1} parent=0 // pred_check
    _
  $region35: #{posenet9d_forward.1} parent=0 // pred_check_branch
    %3644 = sbr.rel (0) target = $region37
  $region36: #{posenet9d_forward.1} parent=0 // pred_region
    _
  $region37: #{posenet9d_forward.1} parent=0 // pred_fallthru
    _
  // Predicated region
  $region38: #{posenet9d_forward.1} parent=0 // pred_check
    _
  $region39: #{posenet9d_forward.1} parent=0 // pred_check_branch
    %3646 = sbr.rel (0) target = $region41
  $region40: #{posenet9d_forward.1} parent=0 // pred_region
    _
  $region41: #{posenet9d_forward.1} parent=0 // pred_fallthru
    _

</llo_original>
